<compile_context>
chip_gen: v7x
topology: tpu7x:2x2x1
jax: 0.10.0
libtpu: 0.0.40
codegen_flags: <defaults>
</compile_context>

<pallas_src>
import functools

import jax
import jax.numpy as jnp
from jax import lax
from jax.experimental import pallas as pl
from jax.experimental.pallas import tpu as pltpu

COMPUTE_DTYPE = jnp.bfloat16      # MXU operand dtype (set to jnp.float32 for exact f32)
EPS = 1e-5
LANE = 128
VMEM_LIMIT = 64 * 1024 * 1024     # explicit scoped-VMEM cap (fits v7x's 64 MiB physical VMEM)


def _round_up(n, m):
    return (n + m - 1) // m * m


# ---------------------------------------------------------------------------
# In-kernel helpers
# ---------------------------------------------------------------------------
def _accumulate_taps(prep_ref, w_ref, th, wp, cop):
    """3x3 conv as 9 shifted matmuls over a row-flattened padded tile.

    prep_ref : VMEM scratch, ((th+2)*wp + 2, Ci) -- spatially padded input tile,
               rows flattened as r = row*wp + col (wp = Wo + 2).
    w_ref    : (9, Ci, cop) taps in (dy, dx)-major order, bf16, resident.
    Returns (th*wp, cop) f32.  Output rows r = h*wp + w; columns w >= wp-2 are
    wrap-around garbage (masked out of BN stats, sliced away in glue).
    """
    acc = jnp.zeros((th * wp, cop), jnp.float32)
    for dy in range(3):
        for dx in range(3):
            lhs = prep_ref[pl.ds(dy * wp + dx, th * wp), :]
            acc = acc + jnp.dot(lhs, w_ref[3 * dy + dx],
                                preferred_element_type=jnp.float32)
    return acc


def _emit_stats(acc, omask, s_ref, ss_ref):
    """Accumulate per-channel sum / sum-of-squares over valid output rows."""
    @pl.when(jnp.logical_and(pl.program_id(0) == 0, pl.program_id(1) == 0))
    def _():
        s_ref[...] = jnp.zeros_like(s_ref)
        ss_ref[...] = jnp.zeros_like(ss_ref)

    yv = acc * omask                                   # zero the garbage rows
    s_ref[...] += jnp.sum(yv, axis=0, keepdims=True)
    ss_ref[...] += jnp.sum(yv * acc, axis=0, keepdims=True)


def _pool_conv_stats_kernel(x_ref, w_ref, omask_ref, y_ref, s_ref, ss_ref,
                            prep_ref, *, th, wp, cop):
    # x_ref: (4, LP, Cin) -- four 2x2 maxpool partners of the (already spatially padded)
    #        pooled-resolution tile.  Fused maxpool = elementwise max of the 4 planes.
    pooled = jnp.maximum(jnp.maximum(x_ref[0], x_ref[1]),
                         jnp.maximum(x_ref[2], x_ref[3]))
    prep_ref[...] = pooled
    acc = _accumulate_taps(prep_ref, w_ref, th, wp, cop)
    y_ref[...] = acc
    _emit_stats(acc, omask_ref[...], s_ref, ss_ref)


def _bn_relu_conv_stats_kernel(t_ref, w_ref, scale_ref, shift_ref, pmask_ref,
                               omask_ref, y_ref, s_ref, ss_ref, prep_ref,
                               *, th, wp, cop):
    # Fused: BatchNorm(previous conv's batch stats) + ReLU on the incoming pre-BN tile,
    # then the 3x3 conv of this layer.  pmask restores exact zeros at spatial padding.
    h = jnp.maximum(t_ref[...] * scale_ref[...] + shift_ref[...], 0.0)
    h = h * pmask_ref[...]
    prep_ref[...] = h.astype(prep_ref.dtype)
    acc = _accumulate_taps(prep_ref, w_ref, th, wp, cop)
    y_ref[...] = acc
    _emit_stats(acc, omask_ref[...], s_ref, ss_ref)


def _bn_relu_kernel(y_ref, scale_ref, shift_ref, o_ref):
    o_ref[...] = jnp.maximum(y_ref[...] * scale_ref[...] + shift_ref[...], 0.0)


# ---------------------------------------------------------------------------
# Glue: layout builders, parameter prep, BN finalization (cheap XLA ops)
# ---------------------------------------------------------------------------
def _build_pool_tiles(x_nhwc, th, n_t):
    """(N,H,W,Cin) -> (N, n_t, 4, LP, Cin): 2x2-pool partners of padded, halo'd row tiles."""
    n, h, w, cin = x_nhwc.shape
    hp, wp = h // 2 + 2, w // 2 + 2
    xpad = jnp.pad(x_nhwc, ((0, 0), (2, 2), (2, 2), (0, 0)))          # 1 pooled pad row/col
    xv = xpad.reshape(n, hp, 2, wp, 2, cin).transpose(0, 2, 4, 1, 3, 5)
    xv = xv.reshape(n, 4, hp, wp, cin)
    tiles = jnp.stack([xv[:, :, i * th:i * th + th + 2] for i in range(n_t)], axis=1)
    tiles = tiles.reshape(n, n_t, 4, (th + 2) * wp, cin)
    return jnp.pad(tiles, ((0, 0), (0, 0), (0, 0), (0, 2), (0, 0)))    # 2 spare rows for taps


def _build_conv_tiles(h_nhwc, th, n_t):
    """(N,Ho,Wo,C) -> (N, n_t, LP, C): spatially padded, halo'd, row-flattened tiles."""
    n, ho, wo, c = h_nhwc.shape
    wp = wo + 2
    hpad = jnp.pad(h_nhwc, ((0, 0), (1, 1), (1, 1), (0, 0)))
    tiles = jnp.stack([hpad[:, i * th:i * th + th + 2] for i in range(n_t)], axis=1)
    tiles = tiles.reshape(n, n_t, (th + 2) * wp, c)
    return jnp.pad(tiles, ((0, 0), (0, 0), (0, 2), (0, 0)))


def _output_row_mask(th, wo):
    wp = wo + 2
    r = jnp.arange(th * wp)
    return ((r % wp) < wo).astype(jnp.float32)[:, None]                # (th*wp, 1)


def _input_pad_mask(th, n_t, ho, wo):
    wp, hp = wo + 2, ho + 2
    lp = (th + 2) * wp + 2
    r = jnp.arange(lp)
    trow, tcol = r // wp, r % wp
    base = (r < (th + 2) * wp) & (tcol >= 1) & (tcol <= wp - 2)
    rows = []
    for i in range(n_t):
        g = i * th + trow
        rows.append(base & (g >= 1) & (g <= hp - 2))
    return jnp.stack(rows).astype(jnp.float32)[..., None]              # (n_t, lp, 1)


def _prep_weight(w_oihw, cin_pad, cout_pad):
    cout, cin, kh, kw = w_oihw.shape
    w = jnp.transpose(w_oihw, (2, 3, 1, 0)).reshape(kh * kw, cin, cout)
    w = jnp.pad(w, ((0, 0), (0, cin_pad - cin), (0, cout_pad - cout)))
    return w.astype(COMPUTE_DTYPE)


def _prep_affine(v, c_pad):
    return jnp.pad(v, (0, c_pad - v.shape[0])).reshape(1, c_pad).astype(jnp.float32)


def _bn_scale_shift(s, ss, count, gamma_p, beta_p):
    mean = s / count
    var = jnp.maximum(ss / count - mean * mean, 0.0)                   # biased variance
    scale = gamma_p * lax.rsqrt(var + EPS)
    shift = beta_p - mean * scale
    return scale, shift


def _default_tile_h(ho, wp, cmax):
    """Largest divisor of Ho whose double-buffered tiles sit well inside v7x's 64 MiB VMEM."""
    budget = 8 * 1024 * 1024
    best = 1
    for cand in range(1, ho + 1):
        if ho % cand:
            continue
        rows_in = (cand + 2) * wp + 2
        tile_bytes = rows_in * cmax * 4 + cand * wp * cmax * 4
        if 4 * tile_bytes <= budget:                                   # 2x buffers, 2x headroom
            best = cand
    return best


# ---------------------------------------------------------------------------
# pallas_call wrappers
# ---------------------------------------------------------------------------
def _pool_conv_stats(x_nhwc, w_taps, omask, th, n_t, wo, cop):
    n, _, _, cin = x_nhwc.shape
    wp = wo + 2
    lp = (th + 2) * wp + 2
    tiles = _build_pool_tiles(x_nhwc, th, n_t).astype(COMPUTE_DTYPE)
    kernel = functools.partial(_pool_conv_stats_kernel, th=th, wp=wp, cop=cop)
    return pl.pallas_call(
        kernel,
        grid=(n, n_t),
        in_specs=[
            pl.BlockSpec((None, None, 4, lp, cin), lambda b, i: (b, i, 0, 0, 0)),
            pl.BlockSpec((9, cin, cop), lambda b, i: (0, 0, 0)),       # resident weights
            pl.BlockSpec((th * wp, 1), lambda b, i: (0, 0)),           # resident row mask
        ],
        out_specs=(
            pl.BlockSpec((None, None, th * wp, cop), lambda b, i: (b, i, 0, 0)),
            pl.BlockSpec((1, cop), lambda b, i: (0, 0)),               # sum accumulator
            pl.BlockSpec((1, cop), lambda b, i: (0, 0)),               # sumsq accumulator
        ),
        out_shape=(
            jax.ShapeDtypeStruct((n, n_t, th * wp, cop), jnp.float32),
            jax.ShapeDtypeStruct((1, cop), jnp.float32),
            jax.ShapeDtypeStruct((1, cop), jnp.float32),
        ),
        scratch_shapes=[pltpu.VMEM((lp, cin), COMPUTE_DTYPE)],
        compiler_params=pltpu.CompilerParams(
            dimension_semantics=("arbitrary", "arbitrary"),            # cross-step accumulation
            vmem_limit_bytes=VMEM_LIMIT),
    )(tiles, w_taps, omask)


def _bn_relu_conv_stats(t_tiles, w_taps, scale, shift, pmask, omask, th, wp, cop):
    n, n_t, lp, cip = t_tiles.shape
    kernel = functools.partial(_bn_relu_conv_stats_kernel, th=th, wp=wp, cop=cop)
    return pl.pallas_call(
        kernel,
        grid=(n, n_t),
        in_specs=[
            pl.BlockSpec((None, None, lp, cip), lambda b, i: (b, i, 0, 0)),
            pl.BlockSpec((9, cip, cop), lambda b, i: (0, 0, 0)),
            pl.BlockSpec((1, cip), lambda b, i: (0, 0)),
            pl.BlockSpec((1, cip), lambda b, i: (0, 0)),
            pl.BlockSpec((None, lp, 1), lambda b, i: (i, 0, 0)),
            pl.BlockSpec((th * wp, 1), lambda b, i: (0, 0)),
        ],
        out_specs=(
            pl.BlockSpec((None, None, th * wp, cop), lambda b, i: (b, i, 0, 0)),
            pl.BlockSpec((1, cop), lambda b, i: (0, 0)),
            pl.BlockSpec((1, cop), lambda b, i: (0, 0)),
        ),
        out_shape=(
            jax.ShapeDtypeStruct((n, n_t, th * wp, cop), jnp.float32),
            jax.ShapeDtypeStruct((1, cop), jnp.float32),
            jax.ShapeDtypeStruct((1, cop), jnp.float32),
        ),
        scratch_shapes=[pltpu.VMEM((lp, cip), COMPUTE_DTYPE)],
        compiler_params=pltpu.CompilerParams(
            dimension_semantics=("arbitrary", "arbitrary"),
            vmem_limit_bytes=VMEM_LIMIT),
    )(t_tiles, w_taps, scale, shift, pmask, omask)


def _bn_relu_apply(y, scale, shift):
    n, n_t, rows, cop = y.shape
    return pl.pallas_call(
        _bn_relu_kernel,
        grid=(n, n_t),
        in_specs=[
            pl.BlockSpec((None, None, rows, cop), lambda b, i: (b, i, 0, 0)),
            pl.BlockSpec((1, cop), lambda b, i: (0, 0)),
            pl.BlockSpec((1, cop), lambda b, i: (0, 0)),
        ],
        out_specs=pl.BlockSpec((None, None, rows, cop), lambda b, i: (b, i, 0, 0)),
        out_shape=jax.ShapeDtypeStruct((n, n_t, rows, cop), jnp.float32),
        compiler_params=pltpu.CompilerParams(
            dimension_semantics=("parallel", "parallel"),              # both v7x TensorCores
            vmem_limit_bytes=VMEM_LIMIT),
    )(y, scale, shift)


# ---------------------------------------------------------------------------
# Forward pass
# ---------------------------------------------------------------------------
def downsample_forward(x_nchw, params, tile_h=None):
    """DownSample.forward: MaxPool2d(2) -> (Conv3x3 -> BN(train) -> ReLU) * 2."""
    n, cin, h, w = x_nchw.shape
    ho, wo = h // 2, w // 2
    wp = wo + 2
    cmid, cout = params["w1"].shape[0], params["w2"].shape[0]
    cmidp, coutp = _round_up(cmid, LANE), _round_up(cout, LANE)

    th = tile_h if tile_h is not None else _default_tile_h(ho, wp, max(cmidp, coutp))
    assert ho % th == 0, (ho, th)
    n_t = ho // th

    x_nhwc = jnp.transpose(x_nchw, (0, 2, 3, 1))
    omask = _output_row_mask(th, wo)
    pmask = _input_pad_mask(th, n_t, ho, wo)
    count = jnp.float32(n * ho * wo)

    # conv1: fused maxpool + conv + batch-stat accumulation (conv bias cancels under BN)
    w1 = _prep_weight(params["w1"], cin, cmidp)
    y1, s1, ss1 = _pool_conv_stats(x_nhwc, w1, omask, th, n_t, wo, cmidp)
    scale1, shift1 = _bn_scale_shift(s1, ss1, count,
                                     _prep_affine(params["g1"], cmidp),
                                     _prep_affine(params["beta1"], cmidp))

    # conv2: BN1+ReLU fused into its input path; new batch stats accumulated
    y1_nhwc = y1.reshape(n, n_t, th, wp, cmidp)[:, :, :, :wo, :].reshape(n, ho, wo, cmidp)
    t2 = _build_conv_tiles(y1_nhwc, th, n_t)                           # pre-BN values, f32
    w2 = _prep_weight(params["w2"], cmidp, coutp)
    y2, s2, ss2 = _bn_relu_conv_stats(t2, w2, scale1, shift1, pmask, omask, th, wp, coutp)
    scale2, shift2 = _bn_scale_shift(s2, ss2, count,
                                     _prep_affine(params["g2"], coutp),
                                     _prep_affine(params["beta2"], coutp))

    # final BN2 + ReLU, then strip channel/width padding and return NCHW
    out = _bn_relu_apply(y2, scale2, shift2)
    out = out.reshape(n, n_t, th, wp, coutp)[:, :, :, :wo, :cout].reshape(n, ho, wo, cout)
    return jnp.transpose(out, (0, 3, 1, 2))


# ---------------------------------------------------------------------------
# Pure-JAX reference (matches the kernel's bf16 matmul-operand rounding)
# ---------------------------------------------------------------------------
def _ref_conv_bn_relu(x_nchw, w, b, gamma, beta):
    xc = x_nchw.astype(COMPUTE_DTYPE).astype(jnp.float32)
    wc = w.astype(COMPUTE_DTYPE).astype(jnp.float32)
    y = lax.conv_general_dilated(
        xc, wc, window_strides=(1, 1), padding=((1, 1), (1, 1)),
        dimension_numbers=("NCHW", "OIHW", "NCHW"),
        precision=lax.Precision.HIGHEST,
    ) + b[None, :, None, None]
    mean = jnp.mean(y, axis=(0, 2, 3), keepdims=True)
    var = jnp.mean((y - mean) ** 2, axis=(0, 2, 3), keepdims=True)
    y_hat = (y - mean) * lax.rsqrt(var + EPS)
    return jnp.maximum(y_hat * gamma[None, :, None, None] + beta[None, :, None, None], 0.0)


def _ref_forward(x_nchw, p):
    n, c, h, w = x_nchw.shape
    pooled = x_nchw.reshape(n, c, h // 2, 2, w // 2, 2).max(axis=(3, 5))
    h1 = _ref_conv_bn_relu(pooled, p["w1"], p["b1"], p["g1"], p["beta1"])
    return _ref_conv_bn_relu(h1, p["w2"], p["b2"], p["g2"], p["beta2"])


# ---------------------------------------------------------------------------
# Main
# ---------------------------------------------------------------------------
if __name__ == "__main__":
    in_channels, out_channels = 4, 8
    mid_channels = out_channels                    # DoubleConv default
    N, H, W = 2, 16, 16

    key = jax.random.PRNGKey(0)
    keys = jax.random.split(key, 7)
    x = jax.random.normal(keys[0], (N, in_channels, H, W), dtype=jnp.float32)

    params = {
        "w1": 0.1 * jax.random.normal(keys[1], (mid_channels, in_channels, 3, 3), jnp.float32),
        "b1": 0.1 * jax.random.normal(keys[2], (mid_channels,), jnp.float32),
        "g1": jnp.ones((mid_channels,), jnp.float32) + 0.1 * jax.random.normal(keys[3], (mid_channels,)),
        "beta1": jnp.zeros((mid_channels,), jnp.float32),
        "w2": 0.1 * jax.random.normal(keys[4], (out_channels, mid_channels, 3, 3), jnp.float32),
        "b2": 0.1 * jax.random.normal(keys[5], (out_channels,), jnp.float32),
        "g2": jnp.ones((out_channels,), jnp.float32) + 0.1 * jax.random.normal(keys[6], (out_channels,)),
        "beta2": jnp.zeros((out_channels,), jnp.float32),
    }

    fwd = jax.jit(functools.partial(downsample_forward, tile_h=4))   # 2 row tiles -> exercises accumulation
    out = jax.block_until_ready(fwd(x, params))
    assert out.shape == (N, out_channels, H // 2, W // 2), out.shape

    ref = _ref_forward(x, params)
    err = float(jnp.max(jnp.abs(out - ref)))
    assert jnp.allclose(out, ref, rtol=1e-2, atol=1e-2), err

    print("KERNEL_OK")
</pallas_src>

<mosaic_0001>
module attributes {stable_mosaic.version = 11 : i64} {
  func.func @_pool_conv_stats_kernel(%arg0: i32, %arg1: i32, %arg2: memref<1x1x4x62x4xbf16, #tpu.memory_space<vmem>>, %arg3: memref<9x4x128xbf16, #tpu.memory_space<vmem>>, %arg4: memref<40x1xf32, #tpu.memory_space<vmem>>, %arg5: memref<1x1x40x128xf32, #tpu.memory_space<vmem>>, %arg6: memref<1x128xf32, #tpu.memory_space<vmem>>, %arg7: memref<1x128xf32, #tpu.memory_space<vmem>>, %arg8: memref<62x4xbf16, #tpu.memory_space<vmem>>) attributes {dimension_semantics = [#tpu.dimension_semantics<arbitrary>, #tpu.dimension_semantics<arbitrary>], iteration_bounds = array<i64: 2, 2>, scalar_prefetch = 0 : i64, scratch_operands = 1 : i64, tpu.core_type = #tpu.core_type<tc>, window_params = [{transform_indices = @transform_0, window_bounds = array<i64: 1, 1, 4, 62, 4>}, {pipeline_mode = #tpu.pipeline_mode<synchronous>, transform_indices = @transform_1, window_bounds = array<i64: 9, 4, 128>}, {pipeline_mode = #tpu.pipeline_mode<synchronous>, transform_indices = @transform_2, window_bounds = array<i64: 40, 1>}, {transform_indices = @transform_3, window_bounds = array<i64: 1, 1, 40, 128>}, {pipeline_mode = #tpu.pipeline_mode<synchronous>, transform_indices = @transform_4, window_bounds = array<i64: 1, 128>}, {pipeline_mode = #tpu.pipeline_mode<synchronous>, transform_indices = @transform_5, window_bounds = array<i64: 1, 128>}]} {
    %c0 = arith.constant 0 : index
    %c0_0 = arith.constant 0 : index
    %c0_1 = arith.constant 0 : index
    %c0_2 = arith.constant 0 : index
    %c0_3 = arith.constant 0 : index
    %0 = vector.load %arg2[%c0, %c0_0, %c0_1, %c0_2, %c0_3] : memref<1x1x4x62x4xbf16, #tpu.memory_space<vmem>>, vector<1x1x1x62x4xbf16>
    %1 = vector.shape_cast %0 : vector<1x1x1x62x4xbf16> to vector<62x4xbf16>
    %c0_4 = arith.constant 0 : index
    %c0_5 = arith.constant 0 : index
    %c1 = arith.constant 1 : index
    %c0_6 = arith.constant 0 : index
    %c0_7 = arith.constant 0 : index
    %2 = vector.load %arg2[%c0_4, %c0_5, %c1, %c0_6, %c0_7] : memref<1x1x4x62x4xbf16, #tpu.memory_space<vmem>>, vector<1x1x1x62x4xbf16>
    %3 = vector.shape_cast %2 : vector<1x1x1x62x4xbf16> to vector<62x4xbf16>
    %4 = arith.maximumf %1, %3 : vector<62x4xbf16>
    %c0_8 = arith.constant 0 : index
    %c0_9 = arith.constant 0 : index
    %c2 = arith.constant 2 : index
    %c0_10 = arith.constant 0 : index
    %c0_11 = arith.constant 0 : index
    %5 = vector.load %arg2[%c0_8, %c0_9, %c2, %c0_10, %c0_11] : memref<1x1x4x62x4xbf16, #tpu.memory_space<vmem>>, vector<1x1x1x62x4xbf16>
    %6 = vector.shape_cast %5 : vector<1x1x1x62x4xbf16> to vector<62x4xbf16>
    %c0_12 = arith.constant 0 : index
    %c0_13 = arith.constant 0 : index
    %c3 = arith.constant 3 : index
    %c0_14 = arith.constant 0 : index
    %c0_15 = arith.constant 0 : index
    %7 = vector.load %arg2[%c0_12, %c0_13, %c3, %c0_14, %c0_15] : memref<1x1x4x62x4xbf16, #tpu.memory_space<vmem>>, vector<1x1x1x62x4xbf16>
    %8 = vector.shape_cast %7 : vector<1x1x1x62x4xbf16> to vector<62x4xbf16>
    %9 = arith.maximumf %6, %8 : vector<62x4xbf16>
    %10 = arith.maximumf %4, %9 : vector<62x4xbf16>
    %c0_16 = arith.constant 0 : index
    %c0_17 = arith.constant 0 : index
    %11 = vector.load %arg8[%c0_16, %c0_17] : memref<62x4xbf16, #tpu.memory_space<vmem>>, vector<62x4xbf16>
    tpu.vector_store %arg8[%c0_16, %c0_17], %10 {strides = array<i32>} : memref<62x4xbf16, #tpu.memory_space<vmem>>, vector<62x4xbf16>,
    %cst = arith.constant 0.000000e+00 : f32
    %12 = vector.broadcast %cst : f32 to vector<40x128xf32>
    %c0_18 = arith.constant 0 : index
    %c0_19 = arith.constant 0 : index
    %13 = vector.load %arg8[%c0_18, %c0_19] : memref<62x4xbf16, #tpu.memory_space<vmem>>, vector<40x4xbf16>
    %c0_20 = arith.constant 0 : index
    %c0_21 = arith.constant 0 : index
    %c0_22 = arith.constant 0 : index
    %14 = vector.load %arg3[%c0_20, %c0_21, %c0_22] : memref<9x4x128xbf16, #tpu.memory_space<vmem>>, vector<1x4x128xbf16>
    %15 = vector.shape_cast %14 : vector<1x4x128xbf16> to vector<4x128xbf16>
    %cst_23 = arith.constant dense<0.000000e+00> : vector<40x128xf32>
    %16 = tpu.matmul %13, %15, %cst_23 {dimension_numbers = #tpu.dot_dimension_numbers<[1], [0], [0], [1], [0, 0, 1, 1], [], []>} : vector<40x4xbf16>, vector<4x128xbf16>, vector<40x128xf32> -> vector<40x128xf32>
    %17 = arith.addf %12, %16 : vector<40x128xf32>
    %c1_24 = arith.constant 1 : index
    %c0_25 = arith.constant 0 : index
    %18 = vector.load %arg8[%c1_24, %c0_25] : memref<62x4xbf16, #tpu.memory_space<vmem>>, vector<40x4xbf16>
    %c1_26 = arith.constant 1 : index
    %c0_27 = arith.constant 0 : index
    %c0_28 = arith.constant 0 : index
    %19 = vector.load %arg3[%c1_26, %c0_27, %c0_28] : memref<9x4x128xbf16, #tpu.memory_space<vmem>>, vector<1x4x128xbf16>
    %20 = vector.shape_cast %19 : vector<1x4x128xbf16> to vector<4x128xbf16>
    %cst_29 = arith.constant dense<0.000000e+00> : vector<40x128xf32>
    %21 = tpu.matmul %18, %20, %cst_29 {dimension_numbers = #tpu.dot_dimension_numbers<[1], [0], [0], [1], [0, 0, 1, 1], [], []>} : vector<40x4xbf16>, vector<4x128xbf16>, vector<40x128xf32> -> vector<40x128xf32>
    %22 = arith.addf %17, %21 : vector<40x128xf32>
    %c2_30 = arith.constant 2 : index
    %c0_31 = arith.constant 0 : index
    %23 = vector.load %arg8[%c2_30, %c0_31] : memref<62x4xbf16, #tpu.memory_space<vmem>>, vector<40x4xbf16>
    %c2_32 = arith.constant 2 : index
    %c0_33 = arith.constant 0 : index
    %c0_34 = arith.constant 0 : index
    %24 = vector.load %arg3[%c2_32, %c0_33, %c0_34] : memref<9x4x128xbf16, #tpu.memory_space<vmem>>, vector<1x4x128xbf16>
    %25 = vector.shape_cast %24 : vector<1x4x128xbf16> to vector<4x128xbf16>
    %cst_35 = arith.constant dense<0.000000e+00> : vector<40x128xf32>
    %26 = tpu.matmul %23, %25, %cst_35 {dimension_numbers = #tpu.dot_dimension_numbers<[1], [0], [0], [1], [0, 0, 1, 1], [], []>} : vector<40x4xbf16>, vector<4x128xbf16>, vector<40x128xf32> -> vector<40x128xf32>
    %27 = arith.addf %22, %26 : vector<40x128xf32>
    %c10 = arith.constant 10 : index
    %c0_36 = arith.constant 0 : index
    %28 = vector.load %arg8[%c10, %c0_36] : memref<62x4xbf16, #tpu.memory_space<vmem>>, vector<40x4xbf16>
    %c3_37 = arith.constant 3 : index
    %c0_38 = arith.constant 0 : index
    %c0_39 = arith.constant 0 : index
    %29 = vector.load %arg3[%c3_37, %c0_38, %c0_39] : memref<9x4x128xbf16, #tpu.memory_space<vmem>>, vector<1x4x128xbf16>
    %30 = vector.shape_cast %29 : vector<1x4x128xbf16> to vector<4x128xbf16>
    %cst_40 = arith.constant dense<0.000000e+00> : vector<40x128xf32>
    %31 = tpu.matmul %28, %30, %cst_40 {dimension_numbers = #tpu.dot_dimension_numbers<[1], [0], [0], [1], [0, 0, 1, 1], [], []>} : vector<40x4xbf16>, vector<4x128xbf16>, vector<40x128xf32> -> vector<40x128xf32>
    %32 = arith.addf %27, %31 : vector<40x128xf32>
    %c11 = arith.constant 11 : index
    %c0_41 = arith.constant 0 : index
    %33 = vector.load %arg8[%c11, %c0_41] : memref<62x4xbf16, #tpu.memory_space<vmem>>, vector<40x4xbf16>
    %c4 = arith.constant 4 : index
    %c0_42 = arith.constant 0 : index
    %c0_43 = arith.constant 0 : index
    %34 = vector.load %arg3[%c4, %c0_42, %c0_43] : memref<9x4x128xbf16, #tpu.memory_space<vmem>>, vector<1x4x128xbf16>
    %35 = vector.shape_cast %34 : vector<1x4x128xbf16> to vector<4x128xbf16>
    %cst_44 = arith.constant dense<0.000000e+00> : vector<40x128xf32>
    %36 = tpu.matmul %33, %35, %cst_44 {dimension_numbers = #tpu.dot_dimension_numbers<[1], [0], [0], [1], [0, 0, 1, 1], [], []>} : vector<40x4xbf16>, vector<4x128xbf16>, vector<40x128xf32> -> vector<40x128xf32>
    %37 = arith.addf %32, %36 : vector<40x128xf32>
    %c12 = arith.constant 12 : index
    %c0_45 = arith.constant 0 : index
    %38 = vector.load %arg8[%c12, %c0_45] : memref<62x4xbf16, #tpu.memory_space<vmem>>, vector<40x4xbf16>
    %c5 = arith.constant 5 : index
    %c0_46 = arith.constant 0 : index
    %c0_47 = arith.constant 0 : index
    %39 = vector.load %arg3[%c5, %c0_46, %c0_47] : memref<9x4x128xbf16, #tpu.memory_space<vmem>>, vector<1x4x128xbf16>
    %40 = vector.shape_cast %39 : vector<1x4x128xbf16> to vector<4x128xbf16>
    %cst_48 = arith.constant dense<0.000000e+00> : vector<40x128xf32>
    %41 = tpu.matmul %38, %40, %cst_48 {dimension_numbers = #tpu.dot_dimension_numbers<[1], [0], [0], [1], [0, 0, 1, 1], [], []>} : vector<40x4xbf16>, vector<4x128xbf16>, vector<40x128xf32> -> vector<40x128xf32>
    %42 = arith.addf %37, %41 : vector<40x128xf32>
    %c20 = arith.constant 20 : index
    %c0_49 = arith.constant 0 : index
    %43 = vector.load %arg8[%c20, %c0_49] : memref<62x4xbf16, #tpu.memory_space<vmem>>, vector<40x4xbf16>
    %c6 = arith.constant 6 : index
    %c0_50 = arith.constant 0 : index
    %c0_51 = arith.constant 0 : index
    %44 = vector.load %arg3[%c6, %c0_50, %c0_51] : memref<9x4x128xbf16, #tpu.memory_space<vmem>>, vector<1x4x128xbf16>
    %45 = vector.shape_cast %44 : vector<1x4x128xbf16> to vector<4x128xbf16>
    %cst_52 = arith.constant dense<0.000000e+00> : vector<40x128xf32>
    %46 = tpu.matmul %43, %45, %cst_52 {dimension_numbers = #tpu.dot_dimension_numbers<[1], [0], [0], [1], [0, 0, 1, 1], [], []>} : vector<40x4xbf16>, vector<4x128xbf16>, vector<40x128xf32> -> vector<40x128xf32>
    %47 = arith.addf %42, %46 : vector<40x128xf32>
    %c21 = arith.constant 21 : index
    %c0_53 = arith.constant 0 : index
    %48 = vector.load %arg8[%c21, %c0_53] : memref<62x4xbf16, #tpu.memory_space<vmem>>, vector<40x4xbf16>
    %c7 = arith.constant 7 : index
    %c0_54 = arith.constant 0 : index
    %c0_55 = arith.constant 0 : index
    %49 = vector.load %arg3[%c7, %c0_54, %c0_55] : memref<9x4x128xbf16, #tpu.memory_space<vmem>>, vector<1x4x128xbf16>
    %50 = vector.shape_cast %49 : vector<1x4x128xbf16> to vector<4x128xbf16>
    %cst_56 = arith.constant dense<0.000000e+00> : vector<40x128xf32>
    %51 = tpu.matmul %48, %50, %cst_56 {dimension_numbers = #tpu.dot_dimension_numbers<[1], [0], [0], [1], [0, 0, 1, 1], [], []>} : vector<40x4xbf16>, vector<4x128xbf16>, vector<40x128xf32> -> vector<40x128xf32>
    %52 = arith.addf %47, %51 : vector<40x128xf32>
    %c22 = arith.constant 22 : index
    %c0_57 = arith.constant 0 : index
    %53 = vector.load %arg8[%c22, %c0_57] : memref<62x4xbf16, #tpu.memory_space<vmem>>, vector<40x4xbf16>
    %c8 = arith.constant 8 : index
    %c0_58 = arith.constant 0 : index
    %c0_59 = arith.constant 0 : index
    %54 = vector.load %arg3[%c8, %c0_58, %c0_59] : memref<9x4x128xbf16, #tpu.memory_space<vmem>>, vector<1x4x128xbf16>
    %55 = vector.shape_cast %54 : vector<1x4x128xbf16> to vector<4x128xbf16>
    %cst_60 = arith.constant dense<0.000000e+00> : vector<40x128xf32>
    %56 = tpu.matmul %53, %55, %cst_60 {dimension_numbers = #tpu.dot_dimension_numbers<[1], [0], [0], [1], [0, 0, 1, 1], [], []>} : vector<40x4xbf16>, vector<4x128xbf16>, vector<40x128xf32> -> vector<40x128xf32>
    %57 = arith.addf %52, %56 : vector<40x128xf32>
    %c0_61 = arith.constant 0 : index
    %c0_62 = arith.constant 0 : index
    %c0_63 = arith.constant 0 : index
    %c0_64 = arith.constant 0 : index
    %58 = vector.load %arg5[%c0_61, %c0_62, %c0_63, %c0_64] : memref<1x1x40x128xf32, #tpu.memory_space<vmem>>, vector<1x1x40x128xf32>
    %59 = vector.shape_cast %58 : vector<1x1x40x128xf32> to vector<40x128xf32>
    %60 = vector.shape_cast %57 : vector<40x128xf32> to vector<1x1x40x128xf32>
    tpu.vector_store %arg5[%c0_61, %c0_62, %c0_63, %c0_64], %60 {strides = array<i32>} : memref<1x1x40x128xf32, #tpu.memory_space<vmem>>, vector<1x1x40x128xf32>,
    %c0_65 = arith.constant 0 : index
    %c0_66 = arith.constant 0 : index
    %61 = vector.load %arg4[%c0_65, %c0_66] : memref<40x1xf32, #tpu.memory_space<vmem>>, vector<40x1xf32>
    %c0_i32 = arith.constant 0 : i32
    %62 = arith.cmpi eq, %arg0, %c0_i32 : i32
    %c0_i32_67 = arith.constant 0 : i32
    %63 = arith.cmpi eq, %arg1, %c0_i32_67 : i32
    %64 = arith.andi %62, %63 : i1
    %65 = arith.extui %64 : i1 to i32
    %c0_i32_68 = arith.constant 0 : i32
    %66 = arith.cmpi ne, %65, %c0_i32_68 : i32
    scf.if %66 {
      %cst_79 = arith.constant 0.000000e+00 : f32
      %80 = vector.broadcast %cst_79 : f32 to vector<1x128xf32>
      %c0_80 = arith.constant 0 : index
      %c0_81 = arith.constant 0 : index
      %81 = vector.load %arg6[%c0_80, %c0_81] : memref<1x128xf32, #tpu.memory_space<vmem>>, vector<1x128xf32>
      tpu.vector_store %arg6[%c0_80, %c0_81], %80 {strides = array<i32>} : memref<1x128xf32, #tpu.memory_space<vmem>>, vector<1x128xf32>,
      %cst_82 = arith.constant 0.000000e+00 : f32
      %82 = vector.broadcast %cst_82 : f32 to vector<1x128xf32>
      %c0_83 = arith.constant 0 : index
      %c0_84 = arith.constant 0 : index
      %83 = vector.load %arg7[%c0_83, %c0_84] : memref<1x128xf32, #tpu.memory_space<vmem>>, vector<1x128xf32>
      tpu.vector_store %arg7[%c0_83, %c0_84], %82 {strides = array<i32>} : memref<1x128xf32, #tpu.memory_space<vmem>>, vector<1x128xf32>,
    } else {
    }
    %67 = vector.broadcast %61 : vector<40x1xf32> to vector<40x128xf32>
    %68 = arith.mulf %57, %67 : vector<40x128xf32>
    %c0_69 = arith.constant 0 : index
    %c0_70 = arith.constant 0 : index
    %69 = vector.load %arg6[%c0_69, %c0_70] : memref<1x128xf32, #tpu.memory_space<vmem>>, vector<1x128xf32>
    %cst_71 = arith.constant dense<0.000000e+00> : vector<128xf32>
    %70 = vector.multi_reduction <add>, %68, %cst_71 [0] : vector<40x128xf32> to vector<128xf32>
    %71 = vector.shape_cast %70 : vector<128xf32> to vector<1x128xf32>
    %72 = arith.addf %69, %71 : vector<1x128xf32>
    %c0_72 = arith.constant 0 : index
    %c0_73 = arith.constant 0 : index
    %73 = vector.load %arg6[%c0_72, %c0_73] : memref<1x128xf32, #tpu.memory_space<vmem>>, vector<1x128xf32>
    tpu.vector_store %arg6[%c0_72, %c0_73], %72 {strides = array<i32>} : memref<1x128xf32, #tpu.memory_space<vmem>>, vector<1x128xf32>,
    %c0_74 = arith.constant 0 : index
    %c0_75 = arith.constant 0 : index
    %74 = vector.load %arg7[%c0_74, %c0_75] : memref<1x128xf32, #tpu.memory_space<vmem>>, vector<1x128xf32>
    %75 = arith.mulf %68, %57 : vector<40x128xf32>
    %cst_76 = arith.constant dense<0.000000e+00> : vector<128xf32>
    %76 = vector.multi_reduction <add>, %75, %cst_76 [0] : vector<40x128xf32> to vector<128xf32>
    %77 = vector.shape_cast %76 : vector<128xf32> to vector<1x128xf32>
    %78 = arith.addf %74, %77 : vector<1x128xf32>
    %c0_77 = arith.constant 0 : index
    %c0_78 = arith.constant 0 : index
    %79 = vector.load %arg7[%c0_77, %c0_78] : memref<1x128xf32, #tpu.memory_space<vmem>>, vector<1x128xf32>
    tpu.vector_store %arg7[%c0_77, %c0_78], %78 {strides = array<i32>} : memref<1x128xf32, #tpu.memory_space<vmem>>, vector<1x128xf32>,
    return
  }
  func.func @transform_0(%arg0: i32, %arg1: i32) -> (i32, i32, i32, i32, i32) {
    %c0_i32 = arith.constant 0 : i32
    %c0_i32_0 = arith.constant 0 : i32
    %c0_i32_1 = arith.constant 0 : i32
    %c0_i32_2 = arith.constant 0 : i32
    return %arg0, %arg1, %c0_i32, %c0_i32_0, %c0_i32_1 : i32, i32, i32, i32, i32
  }
  func.func @transform_1(%arg0: i32, %arg1: i32) -> (i32, i32, i32) {
    %c0_i32 = arith.constant 0 : i32
    %c0_i32_0 = arith.constant 0 : i32
    %c0_i32_1 = arith.constant 0 : i32
    %c0_i32_2 = arith.constant 0 : i32
    return %c0_i32, %c0_i32_0, %c0_i32_1 : i32, i32, i32
  }
  func.func @transform_2(%arg0: i32, %arg1: i32) -> (i32, i32) {
    %c0_i32 = arith.constant 0 : i32
    %c0_i32_0 = arith.constant 0 : i32
    %c0_i32_1 = arith.constant 0 : i32
    return %c0_i32, %c0_i32_0 : i32, i32
  }
  func.func @transform_3(%arg0: i32, %arg1: i32) -> (i32, i32, i32, i32) {
    %c0_i32 = arith.constant 0 : i32
    %c0_i32_0 = arith.constant 0 : i32
    %c0_i32_1 = arith.constant 0 : i32
    return %arg0, %arg1, %c0_i32, %c0_i32_0 : i32, i32, i32, i32
  }
  func.func @transform_4(%arg0: i32, %arg1: i32) -> (i32, i32) {
    %c0_i32 = arith.constant 0 : i32
    %c0_i32_0 = arith.constant 0 : i32
    %c0_i32_1 = arith.constant 0 : i32
    return %c0_i32, %c0_i32_0 : i32, i32
  }
  func.func @transform_5(%arg0: i32, %arg1: i32) -> (i32, i32) {
    %c0_i32 = arith.constant 0 : i32
    %c0_i32_0 = arith.constant 0 : i32
    %c0_i32_1 = arith.constant 0 : i32
    return %c0_i32, %c0_i32_0 : i32, i32
  }
}

module attributes {stable_mosaic.version = 11 : i64} {
  func.func @_bn_relu_kernel(%arg0: i32, %arg1: i32, %arg2: memref<1x1x40x128xf32, #tpu.memory_space<vmem>>, %arg3: memref<1x128xf32, #tpu.memory_space<vmem>>, %arg4: memref<1x128xf32, #tpu.memory_space<vmem>>, %arg5: memref<1x1x40x128xf32, #tpu.memory_space<vmem>>) attributes {dimension_semantics = [#tpu.dimension_semantics<parallel>, #tpu.dimension_semantics<parallel>], iteration_bounds = array<i64: 2, 2>, scalar_prefetch = 0 : i64, scratch_operands = 0 : i64, tpu.core_type = #tpu.core_type<tc>, window_params = [{transform_indices = @transform_0, window_bounds = array<i64: 1, 1, 40, 128>}, {pipeline_mode = #tpu.pipeline_mode<synchronous>, transform_indices = @transform_1, window_bounds = array<i64: 1, 128>}, {pipeline_mode = #tpu.pipeline_mode<synchronous>, transform_indices = @transform_2, window_bounds = array<i64: 1, 128>}, {transform_indices = @transform_3, window_bounds = array<i64: 1, 1, 40, 128>}]} {
    %c0 = arith.constant 0 : index
    %c0_0 = arith.constant 0 : index
    %c0_1 = arith.constant 0 : index
    %c0_2 = arith.constant 0 : index
    %0 = vector.load %arg2[%c0, %c0_0, %c0_1, %c0_2] : memref<1x1x40x128xf32, #tpu.memory_space<vmem>>, vector<1x1x40x128xf32>
    %1 = vector.shape_cast %0 : vector<1x1x40x128xf32> to vector<40x128xf32>
    %c0_3 = arith.constant 0 : index
    %c0_4 = arith.constant 0 : index
    %2 = vector.load %arg3[%c0_3, %c0_4] : memref<1x128xf32, #tpu.memory_space<vmem>>, vector<1x128xf32>
    %3 = vector.broadcast %2 : vector<1x128xf32> to vector<40x128xf32>
    %4 = arith.mulf %1, %3 : vector<40x128xf32>
    %c0_5 = arith.constant 0 : index
    %c0_6 = arith.constant 0 : index
    %5 = vector.load %arg4[%c0_5, %c0_6] : memref<1x128xf32, #tpu.memory_space<vmem>>, vector<1x128xf32>
    %6 = vector.broadcast %5 : vector<1x128xf32> to vector<40x128xf32>
    %7 = arith.addf %4, %6 : vector<40x128xf32>
    %cst = arith.constant 0.000000e+00 : f32
    %8 = vector.broadcast %cst : f32 to vector<40x128xf32>
    %9 = arith.maximumf %7, %8 : vector<40x128xf32>
    %c0_7 = arith.constant 0 : index
    %c0_8 = arith.constant 0 : index
    %c0_9 = arith.constant 0 : index
    %c0_10 = arith.constant 0 : index
    %10 = vector.load %arg5[%c0_7, %c0_8, %c0_9, %c0_10] : memref<1x1x40x128xf32, #tpu.memory_space<vmem>>, vector<1x1x40x128xf32>
    %11 = vector.shape_cast %10 : vector<1x1x40x128xf32> to vector<40x128xf32>
    %12 = vector.shape_cast %9 : vector<40x128xf32> to vector<1x1x40x128xf32>
    tpu.vector_store %arg5[%c0_7, %c0_8, %c0_9, %c0_10], %12 {strides = array<i32>} : memref<1x1x40x128xf32, #tpu.memory_space<vmem>>, vector<1x1x40x128xf32>,
    return
  }
  func.func @transform_0(%arg0: i32, %arg1: i32) -> (i32, i32, i32, i32) {
    %c0_i32 = arith.constant 0 : i32
    %c0_i32_0 = arith.constant 0 : i32
    %c0_i32_1 = arith.constant 0 : i32
    return %arg0, %arg1, %c0_i32, %c0_i32_0 : i32, i32, i32, i32
  }
  func.func @transform_1(%arg0: i32, %arg1: i32) -> (i32, i32) {
    %c0_i32 = arith.constant 0 : i32
    %c0_i32_0 = arith.constant 0 : i32
    %c0_i32_1 = arith.constant 0 : i32
    return %c0_i32, %c0_i32_0 : i32, i32
  }
  func.func @transform_2(%arg0: i32, %arg1: i32) -> (i32, i32) {
    %c0_i32 = arith.constant 0 : i32
    %c0_i32_0 = arith.constant 0 : i32
    %c0_i32_1 = arith.constant 0 : i32
    return %c0_i32, %c0_i32_0 : i32, i32
  }
  func.func @transform_3(%arg0: i32, %arg1: i32) -> (i32, i32, i32, i32) {
    %c0_i32 = arith.constant 0 : i32
    %c0_i32_0 = arith.constant 0 : i32
    %c0_i32_1 = arith.constant 0 : i32
    return %arg0, %arg1, %c0_i32, %c0_i32_0 : i32, i32, i32, i32
  }
}

module attributes {stable_mosaic.version = 11 : i64} {
  func.func @_bn_relu_conv_stats_kernel(%arg0: i32, %arg1: i32, %arg2: memref<1x1x62x128xf32, #tpu.memory_space<vmem>>, %arg3: memref<9x128x128xbf16, #tpu.memory_space<vmem>>, %arg4: memref<1x128xf32, #tpu.memory_space<vmem>>, %arg5: memref<1x128xf32, #tpu.memory_space<vmem>>, %arg6: memref<1x62x1xf32, #tpu.memory_space<vmem>>, %arg7: memref<40x1xf32, #tpu.memory_space<vmem>>, %arg8: memref<1x1x40x128xf32, #tpu.memory_space<vmem>>, %arg9: memref<1x128xf32, #tpu.memory_space<vmem>>, %arg10: memref<1x128xf32, #tpu.memory_space<vmem>>, %arg11: memref<62x128xbf16, #tpu.memory_space<vmem>>) attributes {dimension_semantics = [#tpu.dimension_semantics<arbitrary>, #tpu.dimension_semantics<arbitrary>], iteration_bounds = array<i64: 2, 2>, scalar_prefetch = 0 : i64, scratch_operands = 1 : i64, tpu.core_type = #tpu.core_type<tc>, window_params = [{transform_indices = @transform_0, window_bounds = array<i64: 1, 1, 62, 128>}, {pipeline_mode = #tpu.pipeline_mode<synchronous>, transform_indices = @transform_1, window_bounds = array<i64: 9, 128, 128>}, {pipeline_mode = #tpu.pipeline_mode<synchronous>, transform_indices = @transform_2, window_bounds = array<i64: 1, 128>}, {pipeline_mode = #tpu.pipeline_mode<synchronous>, transform_indices = @transform_3, window_bounds = array<i64: 1, 128>}, {transform_indices = @transform_4, window_bounds = array<i64: 1, 62, 1>}, {pipeline_mode = #tpu.pipeline_mode<synchronous>, transform_indices = @transform_5, window_bounds = array<i64: 40, 1>}, {transform_indices = @transform_6, window_bounds = array<i64: 1, 1, 40, 128>}, {pipeline_mode = #tpu.pipeline_mode<synchronous>, transform_indices = @transform_7, window_bounds = array<i64: 1, 128>}, {pipeline_mode = #tpu.pipeline_mode<synchronous>, transform_indices = @transform_8, window_bounds = array<i64: 1, 128>}]} {
    %c0 = arith.constant 0 : index
    %c0_0 = arith.constant 0 : index
    %c0_1 = arith.constant 0 : index
    %c0_2 = arith.constant 0 : index
    %0 = vector.load %arg2[%c0, %c0_0, %c0_1, %c0_2] : memref<1x1x62x128xf32, #tpu.memory_space<vmem>>, vector<1x1x62x128xf32>
    %1 = vector.shape_cast %0 : vector<1x1x62x128xf32> to vector<62x128xf32>
    %c0_3 = arith.constant 0 : index
    %c0_4 = arith.constant 0 : index
    %2 = vector.load %arg4[%c0_3, %c0_4] : memref<1x128xf32, #tpu.memory_space<vmem>>, vector<1x128xf32>
    %3 = vector.broadcast %2 : vector<1x128xf32> to vector<62x128xf32>
    %4 = arith.mulf %1, %3 : vector<62x128xf32>
    %c0_5 = arith.constant 0 : index
    %c0_6 = arith.constant 0 : index
    %5 = vector.load %arg5[%c0_5, %c0_6] : memref<1x128xf32, #tpu.memory_space<vmem>>, vector<1x128xf32>
    %6 = vector.broadcast %5 : vector<1x128xf32> to vector<62x128xf32>
    %7 = arith.addf %4, %6 : vector<62x128xf32>
    %cst = arith.constant 0.000000e+00 : f32
    %8 = vector.broadcast %cst : f32 to vector<62x128xf32>
    %9 = arith.maximumf %7, %8 : vector<62x128xf32>
    %c0_7 = arith.constant 0 : index
    %c0_8 = arith.constant 0 : index
    %c0_9 = arith.constant 0 : index
    %10 = vector.load %arg6[%c0_7, %c0_8, %c0_9] : memref<1x62x1xf32, #tpu.memory_space<vmem>>, vector<1x62x1xf32>
    %11 = vector.shape_cast %10 : vector<1x62x1xf32> to vector<62x1xf32>
    %12 = vector.broadcast %11 : vector<62x1xf32> to vector<62x128xf32>
    %13 = arith.mulf %9, %12 : vector<62x128xf32>
    %14 = arith.truncf %13 : vector<62x128xf32> to vector<62x128xbf16>
    %c0_10 = arith.constant 0 : index
    %c0_11 = arith.constant 0 : index
    %15 = vector.load %arg11[%c0_10, %c0_11] : memref<62x128xbf16, #tpu.memory_space<vmem>>, vector<62x128xbf16>
    tpu.vector_store %arg11[%c0_10, %c0_11], %14 {strides = array<i32>} : memref<62x128xbf16, #tpu.memory_space<vmem>>, vector<62x128xbf16>,
    %cst_12 = arith.constant 0.000000e+00 : f32
    %16 = vector.broadcast %cst_12 : f32 to vector<40x128xf32>
    %c0_13 = arith.constant 0 : index
    %c0_14 = arith.constant 0 : index
    %17 = vector.load %arg11[%c0_13, %c0_14] : memref<62x128xbf16, #tpu.memory_space<vmem>>, vector<40x128xbf16>
    %c0_15 = arith.constant 0 : index
    %c0_16 = arith.constant 0 : index
    %c0_17 = arith.constant 0 : index
    %18 = vector.load %arg3[%c0_15, %c0_16, %c0_17] : memref<9x128x128xbf16, #tpu.memory_space<vmem>>, vector<1x128x128xbf16>
    %19 = vector.shape_cast %18 : vector<1x128x128xbf16> to vector<128x128xbf16>
    %cst_18 = arith.constant dense<0.000000e+00> : vector<40x128xf32>
    %20 = tpu.matmul %17, %19, %cst_18 {dimension_numbers = #tpu.dot_dimension_numbers<[1], [0], [0], [1], [0, 0, 1, 1], [], []>} : vector<40x128xbf16>, vector<128x128xbf16>, vector<40x128xf32> -> vector<40x128xf32>
    %21 = arith.addf %16, %20 : vector<40x128xf32>
    %c1 = arith.constant 1 : index
    %c0_19 = arith.constant 0 : index
    %22 = vector.load %arg11[%c1, %c0_19] : memref<62x128xbf16, #tpu.memory_space<vmem>>, vector<40x128xbf16>
    %c1_20 = arith.constant 1 : index
    %c0_21 = arith.constant 0 : index
    %c0_22 = arith.constant 0 : index
    %23 = vector.load %arg3[%c1_20, %c0_21, %c0_22] : memref<9x128x128xbf16, #tpu.memory_space<vmem>>, vector<1x128x128xbf16>
    %24 = vector.shape_cast %23 : vector<1x128x128xbf16> to vector<128x128xbf16>
    %cst_23 = arith.constant dense<0.000000e+00> : vector<40x128xf32>
    %25 = tpu.matmul %22, %24, %cst_23 {dimension_numbers = #tpu.dot_dimension_numbers<[1], [0], [0], [1], [0, 0, 1, 1], [], []>} : vector<40x128xbf16>, vector<128x128xbf16>, vector<40x128xf32> -> vector<40x128xf32>
    %26 = arith.addf %21, %25 : vector<40x128xf32>
    %c2 = arith.constant 2 : index
    %c0_24 = arith.constant 0 : index
    %27 = vector.load %arg11[%c2, %c0_24] : memref<62x128xbf16, #tpu.memory_space<vmem>>, vector<40x128xbf16>
    %c2_25 = arith.constant 2 : index
    %c0_26 = arith.constant 0 : index
    %c0_27 = arith.constant 0 : index
    %28 = vector.load %arg3[%c2_25, %c0_26, %c0_27] : memref<9x128x128xbf16, #tpu.memory_space<vmem>>, vector<1x128x128xbf16>
    %29 = vector.shape_cast %28 : vector<1x128x128xbf16> to vector<128x128xbf16>
    %cst_28 = arith.constant dense<0.000000e+00> : vector<40x128xf32>
    %30 = tpu.matmul %27, %29, %cst_28 {dimension_numbers = #tpu.dot_dimension_numbers<[1], [0], [0], [1], [0, 0, 1, 1], [], []>} : vector<40x128xbf16>, vector<128x128xbf16>, vector<40x128xf32> -> vector<40x128xf32>
    %31 = arith.addf %26, %30 : vector<40x128xf32>
    %c10 = arith.constant 10 : index
    %c0_29 = arith.constant 0 : index
    %32 = vector.load %arg11[%c10, %c0_29] : memref<62x128xbf16, #tpu.memory_space<vmem>>, vector<40x128xbf16>
    %c3 = arith.constant 3 : index
    %c0_30 = arith.constant 0 : index
    %c0_31 = arith.constant 0 : index
    %33 = vector.load %arg3[%c3, %c0_30, %c0_31] : memref<9x128x128xbf16, #tpu.memory_space<vmem>>, vector<1x128x128xbf16>
    %34 = vector.shape_cast %33 : vector<1x128x128xbf16> to vector<128x128xbf16>
    %cst_32 = arith.constant dense<0.000000e+00> : vector<40x128xf32>
    %35 = tpu.matmul %32, %34, %cst_32 {dimension_numbers = #tpu.dot_dimension_numbers<[1], [0], [0], [1], [0, 0, 1, 1], [], []>} : vector<40x128xbf16>, vector<128x128xbf16>, vector<40x128xf32> -> vector<40x128xf32>
    %36 = arith.addf %31, %35 : vector<40x128xf32>
    %c11 = arith.constant 11 : index
    %c0_33 = arith.constant 0 : index
    %37 = vector.load %arg11[%c11, %c0_33] : memref<62x128xbf16, #tpu.memory_space<vmem>>, vector<40x128xbf16>
    %c4 = arith.constant 4 : index
    %c0_34 = arith.constant 0 : index
    %c0_35 = arith.constant 0 : index
    %38 = vector.load %arg3[%c4, %c0_34, %c0_35] : memref<9x128x128xbf16, #tpu.memory_space<vmem>>, vector<1x128x128xbf16>
    %39 = vector.shape_cast %38 : vector<1x128x128xbf16> to vector<128x128xbf16>
    %cst_36 = arith.constant dense<0.000000e+00> : vector<40x128xf32>
    %40 = tpu.matmul %37, %39, %cst_36 {dimension_numbers = #tpu.dot_dimension_numbers<[1], [0], [0], [1], [0, 0, 1, 1], [], []>} : vector<40x128xbf16>, vector<128x128xbf16>, vector<40x128xf32> -> vector<40x128xf32>
    %41 = arith.addf %36, %40 : vector<40x128xf32>
    %c12 = arith.constant 12 : index
    %c0_37 = arith.constant 0 : index
    %42 = vector.load %arg11[%c12, %c0_37] : memref<62x128xbf16, #tpu.memory_space<vmem>>, vector<40x128xbf16>
    %c5 = arith.constant 5 : index
    %c0_38 = arith.constant 0 : index
    %c0_39 = arith.constant 0 : index
    %43 = vector.load %arg3[%c5, %c0_38, %c0_39] : memref<9x128x128xbf16, #tpu.memory_space<vmem>>, vector<1x128x128xbf16>
    %44 = vector.shape_cast %43 : vector<1x128x128xbf16> to vector<128x128xbf16>
    %cst_40 = arith.constant dense<0.000000e+00> : vector<40x128xf32>
    %45 = tpu.matmul %42, %44, %cst_40 {dimension_numbers = #tpu.dot_dimension_numbers<[1], [0], [0], [1], [0, 0, 1, 1], [], []>} : vector<40x128xbf16>, vector<128x128xbf16>, vector<40x128xf32> -> vector<40x128xf32>
    %46 = arith.addf %41, %45 : vector<40x128xf32>
    %c20 = arith.constant 20 : index
    %c0_41 = arith.constant 0 : index
    %47 = vector.load %arg11[%c20, %c0_41] : memref<62x128xbf16, #tpu.memory_space<vmem>>, vector<40x128xbf16>
    %c6 = arith.constant 6 : index
    %c0_42 = arith.constant 0 : index
    %c0_43 = arith.constant 0 : index
    %48 = vector.load %arg3[%c6, %c0_42, %c0_43] : memref<9x128x128xbf16, #tpu.memory_space<vmem>>, vector<1x128x128xbf16>
    %49 = vector.shape_cast %48 : vector<1x128x128xbf16> to vector<128x128xbf16>
    %cst_44 = arith.constant dense<0.000000e+00> : vector<40x128xf32>
    %50 = tpu.matmul %47, %49, %cst_44 {dimension_numbers = #tpu.dot_dimension_numbers<[1], [0], [0], [1], [0, 0, 1, 1], [], []>} : vector<40x128xbf16>, vector<128x128xbf16>, vector<40x128xf32> -> vector<40x128xf32>
    %51 = arith.addf %46, %50 : vector<40x128xf32>
    %c21 = arith.constant 21 : index
    %c0_45 = arith.constant 0 : index
    %52 = vector.load %arg11[%c21, %c0_45] : memref<62x128xbf16, #tpu.memory_space<vmem>>, vector<40x128xbf16>
    %c7 = arith.constant 7 : index
    %c0_46 = arith.constant 0 : index
    %c0_47 = arith.constant 0 : index
    %53 = vector.load %arg3[%c7, %c0_46, %c0_47] : memref<9x128x128xbf16, #tpu.memory_space<vmem>>, vector<1x128x128xbf16>
    %54 = vector.shape_cast %53 : vector<1x128x128xbf16> to vector<128x128xbf16>
    %cst_48 = arith.constant dense<0.000000e+00> : vector<40x128xf32>
    %55 = tpu.matmul %52, %54, %cst_48 {dimension_numbers = #tpu.dot_dimension_numbers<[1], [0], [0], [1], [0, 0, 1, 1], [], []>} : vector<40x128xbf16>, vector<128x128xbf16>, vector<40x128xf32> -> vector<40x128xf32>
    %56 = arith.addf %51, %55 : vector<40x128xf32>
    %c22 = arith.constant 22 : index
    %c0_49 = arith.constant 0 : index
    %57 = vector.load %arg11[%c22, %c0_49] : memref<62x128xbf16, #tpu.memory_space<vmem>>, vector<40x128xbf16>
    %c8 = arith.constant 8 : index
    %c0_50 = arith.constant 0 : index
    %c0_51 = arith.constant 0 : index
    %58 = vector.load %arg3[%c8, %c0_50, %c0_51] : memref<9x128x128xbf16, #tpu.memory_space<vmem>>, vector<1x128x128xbf16>
    %59 = vector.shape_cast %58 : vector<1x128x128xbf16> to vector<128x128xbf16>
    %cst_52 = arith.constant dense<0.000000e+00> : vector<40x128xf32>
    %60 = tpu.matmul %57, %59, %cst_52 {dimension_numbers = #tpu.dot_dimension_numbers<[1], [0], [0], [1], [0, 0, 1, 1], [], []>} : vector<40x128xbf16>, vector<128x128xbf16>, vector<40x128xf32> -> vector<40x128xf32>
    %61 = arith.addf %56, %60 : vector<40x128xf32>
    %c0_53 = arith.constant 0 : index
    %c0_54 = arith.constant 0 : index
    %c0_55 = arith.constant 0 : index
    %c0_56 = arith.constant 0 : index
    %62 = vector.load %arg8[%c0_53, %c0_54, %c0_55, %c0_56] : memref<1x1x40x128xf32, #tpu.memory_space<vmem>>, vector<1x1x40x128xf32>
    %63 = vector.shape_cast %62 : vector<1x1x40x128xf32> to vector<40x128xf32>
    %64 = vector.shape_cast %61 : vector<40x128xf32> to vector<1x1x40x128xf32>
    tpu.vector_store %arg8[%c0_53, %c0_54, %c0_55, %c0_56], %64 {strides = array<i32>} : memref<1x1x40x128xf32, #tpu.memory_space<vmem>>, vector<1x1x40x128xf32>,
    %c0_57 = arith.constant 0 : index
    %c0_58 = arith.constant 0 : index
    %65 = vector.load %arg7[%c0_57, %c0_58] : memref<40x1xf32, #tpu.memory_space<vmem>>, vector<40x1xf32>
    %c0_i32 = arith.constant 0 : i32
    %66 = arith.cmpi eq, %arg0, %c0_i32 : i32
    %c0_i32_59 = arith.constant 0 : i32
    %67 = arith.cmpi eq, %arg1, %c0_i32_59 : i32
    %68 = arith.andi %66, %67 : i1
    %69 = arith.extui %68 : i1 to i32
    %c0_i32_60 = arith.constant 0 : i32
    %70 = arith.cmpi ne, %69, %c0_i32_60 : i32
    scf.if %70 {
      %cst_71 = arith.constant 0.000000e+00 : f32
      %84 = vector.broadcast %cst_71 : f32 to vector<1x128xf32>
      %c0_72 = arith.constant 0 : index
      %c0_73 = arith.constant 0 : index
      %85 = vector.load %arg9[%c0_72, %c0_73] : memref<1x128xf32, #tpu.memory_space<vmem>>, vector<1x128xf32>
      tpu.vector_store %arg9[%c0_72, %c0_73], %84 {strides = array<i32>} : memref<1x128xf32, #tpu.memory_space<vmem>>, vector<1x128xf32>,
      %cst_74 = arith.constant 0.000000e+00 : f32
      %86 = vector.broadcast %cst_74 : f32 to vector<1x128xf32>
      %c0_75 = arith.constant 0 : index
      %c0_76 = arith.constant 0 : index
      %87 = vector.load %arg10[%c0_75, %c0_76] : memref<1x128xf32, #tpu.memory_space<vmem>>, vector<1x128xf32>
      tpu.vector_store %arg10[%c0_75, %c0_76], %86 {strides = array<i32>} : memref<1x128xf32, #tpu.memory_space<vmem>>, vector<1x128xf32>,
    } else {
    }
    %71 = vector.broadcast %65 : vector<40x1xf32> to vector<40x128xf32>
    %72 = arith.mulf %61, %71 : vector<40x128xf32>
    %c0_61 = arith.constant 0 : index
    %c0_62 = arith.constant 0 : index
    %73 = vector.load %arg9[%c0_61, %c0_62] : memref<1x128xf32, #tpu.memory_space<vmem>>, vector<1x128xf32>
    %cst_63 = arith.constant dense<0.000000e+00> : vector<128xf32>
    %74 = vector.multi_reduction <add>, %72, %cst_63 [0] : vector<40x128xf32> to vector<128xf32>
    %75 = vector.shape_cast %74 : vector<128xf32> to vector<1x128xf32>
    %76 = arith.addf %73, %75 : vector<1x128xf32>
    %c0_64 = arith.constant 0 : index
    %c0_65 = arith.constant 0 : index
    %77 = vector.load %arg9[%c0_64, %c0_65] : memref<1x128xf32, #tpu.memory_space<vmem>>, vector<1x128xf32>
    tpu.vector_store %arg9[%c0_64, %c0_65], %76 {strides = array<i32>} : memref<1x128xf32, #tpu.memory_space<vmem>>, vector<1x128xf32>,
    %c0_66 = arith.constant 0 : index
    %c0_67 = arith.constant 0 : index
    %78 = vector.load %arg10[%c0_66, %c0_67] : memref<1x128xf32, #tpu.memory_space<vmem>>, vector<1x128xf32>
    %79 = arith.mulf %72, %61 : vector<40x128xf32>
    %cst_68 = arith.constant dense<0.000000e+00> : vector<128xf32>
    %80 = vector.multi_reduction <add>, %79, %cst_68 [0] : vector<40x128xf32> to vector<128xf32>
    %81 = vector.shape_cast %80 : vector<128xf32> to vector<1x128xf32>
    %82 = arith.addf %78, %81 : vector<1x128xf32>
    %c0_69 = arith.constant 0 : index
    %c0_70 = arith.constant 0 : index
    %83 = vector.load %arg10[%c0_69, %c0_70] : memref<1x128xf32, #tpu.memory_space<vmem>>, vector<1x128xf32>
    tpu.vector_store %arg10[%c0_69, %c0_70], %82 {strides = array<i32>} : memref<1x128xf32, #tpu.memory_space<vmem>>, vector<1x128xf32>,
    return
  }
  func.func @transform_0(%arg0: i32, %arg1: i32) -> (i32, i32, i32, i32) {
    %c0_i32 = arith.constant 0 : i32
    %c0_i32_0 = arith.constant 0 : i32
    %c0_i32_1 = arith.constant 0 : i32
    return %arg0, %arg1, %c0_i32, %c0_i32_0 : i32, i32, i32, i32
  }
  func.func @transform_1(%arg0: i32, %arg1: i32) -> (i32, i32, i32) {
    %c0_i32 = arith.constant 0 : i32
    %c0_i32_0 = arith.constant 0 : i32
    %c0_i32_1 = arith.constant 0 : i32
    %c0_i32_2 = arith.constant 0 : i32
    return %c0_i32, %c0_i32_0, %c0_i32_1 : i32, i32, i32
  }
  func.func @transform_2(%arg0: i32, %arg1: i32) -> (i32, i32) {
    %c0_i32 = arith.constant 0 : i32
    %c0_i32_0 = arith.constant 0 : i32
    %c0_i32_1 = arith.constant 0 : i32
    return %c0_i32, %c0_i32_0 : i32, i32
  }
  func.func @transform_3(%arg0: i32, %arg1: i32) -> (i32, i32) {
    %c0_i32 = arith.constant 0 : i32
    %c0_i32_0 = arith.constant 0 : i32
    %c0_i32_1 = arith.constant 0 : i32
    return %c0_i32, %c0_i32_0 : i32, i32
  }
  func.func @transform_4(%arg0: i32, %arg1: i32) -> (i32, i32, i32) {
    %c0_i32 = arith.constant 0 : i32
    %c0_i32_0 = arith.constant 0 : i32
    %c0_i32_1 = arith.constant 0 : i32
    return %arg1, %c0_i32, %c0_i32_0 : i32, i32, i32
  }
  func.func @transform_5(%arg0: i32, %arg1: i32) -> (i32, i32) {
    %c0_i32 = arith.constant 0 : i32
    %c0_i32_0 = arith.constant 0 : i32
    %c0_i32_1 = arith.constant 0 : i32
    return %c0_i32, %c0_i32_0 : i32, i32
  }
  func.func @transform_6(%arg0: i32, %arg1: i32) -> (i32, i32, i32, i32) {
    %c0_i32 = arith.constant 0 : i32
    %c0_i32_0 = arith.constant 0 : i32
    %c0_i32_1 = arith.constant 0 : i32
    return %arg0, %arg1, %c0_i32, %c0_i32_0 : i32, i32, i32, i32
  }
  func.func @transform_7(%arg0: i32, %arg1: i32) -> (i32, i32) {
    %c0_i32 = arith.constant 0 : i32
    %c0_i32_0 = arith.constant 0 : i32
    %c0_i32_1 = arith.constant 0 : i32
    return %c0_i32, %c0_i32_0 : i32, i32
  }
  func.func @transform_8(%arg0: i32, %arg1: i32) -> (i32, i32) {
    %c0_i32 = arith.constant 0 : i32
    %c0_i32_0 = arith.constant 0 : i32
    %c0_i32_1 = arith.constant 0 : i32
    return %c0_i32, %c0_i32_0 : i32, i32
  }
}

</mosaic_0001>

<llo_original>
// kernel: downsample_forward.5
$region0: #{downsample_forward.5}
  #allocation0 [shape = 'u32[]', space=smem, size = 0x4, offset = 0x4, fixed_abs, tag = 'smem constant byte address 0x4 - core index']
  #allocation1 [shape = 'u32[144,128]{1,0:T(1,128)}', space=vmem, size = 0x12000, scoped, tag = 'internal scratch']
  %s0 = inlined_call_operand.hbm [shape: f32[2,2,40,128], index: 0, kind: input, shape index: {}]
  %s1 = inlined_call_operand.hbm [shape: f32[1,128], index: 1, kind: input, shape index: {}]
  %s2 = inlined_call_operand.hbm [shape: f32[1,128], index: 2, kind: input, shape index: {}]
  %s3 = inlined_call_operand.hbm [shape: f32[2,2,40,128], index: 3, kind: output, shape index: {}]
  %s4 = sld [smem:[#allocation0]]
  $region57: #{downsample_forward.5} parent=0
    _
  %s6 = ssub.s32 1, %s4
  %s7 = scalar_select 0, %s6, %s4
  $region1: #{downsample_forward.5} parent=0
    #allocation2 [shape = 'u8[40960]{0}', space=vmem, size = 0xa000, scoped, tag = 'input window, operand 0']
    #allocation3 [shape = 's32[2]{0}', space=sflag, size = 0x8, scoped, tag = 'scoped memory for downsample_forward.5']
    #allocation4 [shape = 's32[2]{0}', space=sflag, size = 0x8, scoped, tag = 'scoped memory for downsample_forward.5']
    #allocation5 [shape = 'u8[512]{0}', space=vmem, size = 0x400, scoped, tag = 'input window, operand 1, single buffered']
    #allocation6 [shape = 's32[1]{0}', space=sflag, size = 0x4, scoped, tag = 'scoped memory for downsample_forward.5']
    #allocation7 [shape = 'u8[512]{0}', space=vmem, size = 0x400, scoped, tag = 'input window, operand 2, single buffered']
    #allocation8 [shape = 'u8[40960]{0}', space=vmem, size = 0xa000, scoped, tag = 'output window, operand 0']
    %8 = vsyncpa [#allocation3], 0
    %s9 = scalar_lea.sflag [#allocation3], 1
    %10 = vsyncpa %s9, 0
    %11 = vsyncpa [#allocation6], 0
    %12 = vsyncpa [#allocation4], 0
    %s13 = scalar_lea.sflag [#allocation4], 1
    %14 = vsyncpa %s13, 0
    loop: start=0, step=1, limit=6
    $region2: #{downsample_forward.5} parent=1 // loop_pre_header
      _
    $region3: #{downsample_forward.5} parent=1 // loop_header
      %s16 = sphi 0, %s20
      %p17 = scmp.ge.s32.totalorder %s16, 6
      %s23 = sphi 0, %s35
      %s24 = sphi 0, %s31
      %s25 = sphi 0, %s23
      %s26 = sphi 0, %s24
      %s27 = sphi 0, %s25
      %s28 = sphi 0, %s26
      %s40 = sphi 0, %s42
      %s43 = sphi 0, %s40
      %s44 = sphi 0, %s43
      %s60 = sphi 0, %s44
      %s64 = sphi 0, %s64
      %s66 = sphi 0, %s64
      %s67 = sphi 0, %s66
      %s81 = sphi 0, %s67
      %s85 = sphi 0, %s85
      %s87 = sphi 0, %s85
      %s88 = sphi 0, %s87
      %s102 = sphi 0, %s88
      %s110 = sphi 0, %s112
      %s113 = sphi 0, %s110
      %s114 = sphi 0, %s113
      %s130 = sphi 0, %s114
    $region4: #{downsample_forward.5} parent=1 // loop_header_branch
      %19 = sbr.rel (%p17) target = $region8
    $region5: #{downsample_forward.5} parent=1 // loop_body
      %s21 = ssub.s32 %s16, 1
      %s22 = ssub.s32 %s16, 2
      %s29 = sadd.s32 1, %s24
      %p30 = scmp.ge.s32.totalorder %s29, 2
      %s31 = scalar_select %p30, 0, %s29
      %s32 = sadd.s32 1, %s23
      %s33 = scalar_select %p30, %s32, %s23
      %p34 = scmp.ge.s32.totalorder %s33, 2
      %s35 = scalar_select %p34, 0, %s33
      %s36 = ssub.s32 %s23, %s35
      %s37 = ssub.s32 %s24, %s31
      %s38 = sor.u32 %s36, %s37
      %p39 = scmp.eq.s32.totalorder %s38, 0
      %s41 = sadd.s32 %s40, 1
      %s42 = scalar_select %p39, %s40, %s41
      %p45 = pneg %p39
      %p46 = scmp.eq.s32.totalorder %s16, 3
      %p47 = por %p45, %p46
      %p48 = scmp.ne.s32.totalorder %s40, %s43
      %p49 = scmp.eq.s32.totalorder %s16, 0
      %p50 = por %p48, %p49
      %p51 = scmp.ne.s32.totalorder %s40, %s43
      %p52 = scmp.eq.s32.totalorder %s21, 3
      %p53 = por %p51, %p52
      %p54 = scmp.ne.s32.totalorder %s43, %s44
      %p55 = scmp.eq.s32.totalorder %s21, 0
      %p56 = por %p54, %p55
      %p57 = scmp.ne.s32.totalorder %s43, %s44
      %p58 = scmp.eq.s32.totalorder %s22, 3
      %p59 = por %p57, %p58
      %p61 = scmp.ne.s32.totalorder %s44, %s60
      %p62 = scmp.eq.s32.totalorder %s22, 0
      %p63 = por %p61, %p62
      %s65 = sadd.s32 %s64, 1
      %p68 = scmp.eq.s32.totalorder %s16, 3
      %p69 = scmp.ne.s32.totalorder %s64, %s66
      %p70 = scmp.eq.s32.totalorder %s16, 0
      %p71 = por %p69, %p70
      %p72 = scmp.ne.s32.totalorder %s64, %s66
      %p73 = scmp.eq.s32.totalorder %s21, 3
      %p74 = por %p72, %p73
      %p75 = scmp.ne.s32.totalorder %s66, %s67
      %p76 = scmp.eq.s32.totalorder %s21, 0
      %p77 = por %p75, %p76
      %p78 = scmp.ne.s32.totalorder %s66, %s67
      %p79 = scmp.eq.s32.totalorder %s22, 3
      %p80 = por %p78, %p79
      %p82 = scmp.ne.s32.totalorder %s67, %s81
      %p83 = scmp.eq.s32.totalorder %s22, 0
      %p84 = por %p82, %p83
      %s86 = sadd.s32 %s85, 1
      %p89 = scmp.eq.s32.totalorder %s16, 3
      %p90 = scmp.ne.s32.totalorder %s85, %s87
      %p91 = scmp.eq.s32.totalorder %s16, 0
      %p92 = por %p90, %p91
      %p93 = scmp.ne.s32.totalorder %s85, %s87
      %p94 = scmp.eq.s32.totalorder %s21, 3
      %p95 = por %p93, %p94
      %p96 = scmp.ne.s32.totalorder %s87, %s88
      %p97 = scmp.eq.s32.totalorder %s21, 0
      %p98 = por %p96, %p97
      %p99 = scmp.ne.s32.totalorder %s87, %s88
      %p100 = scmp.eq.s32.totalorder %s22, 3
      %p101 = por %p99, %p100
      %p103 = scmp.ne.s32.totalorder %s88, %s102
      %p104 = scmp.eq.s32.totalorder %s22, 0
      %p105 = por %p103, %p104
      %s106 = ssub.s32 %s23, %s35
      %s107 = ssub.s32 %s24, %s31
      %s108 = sor.u32 %s106, %s107
      %p109 = scmp.eq.s32.totalorder %s108, 0
      %s111 = sadd.s32 %s110, 1
      %s112 = scalar_select %p109, %s110, %s111
      %p115 = pneg %p109
      %p116 = scmp.eq.s32.totalorder %s16, 3
      %p117 = por %p115, %p116
      %p118 = scmp.ne.s32.totalorder %s110, %s113
      %p119 = scmp.eq.s32.totalorder %s16, 0
      %p120 = por %p118, %p119
      %p121 = scmp.ne.s32.totalorder %s110, %s113
      %p122 = scmp.eq.s32.totalorder %s21, 3
      %p123 = por %p121, %p122
      %p124 = scmp.ne.s32.totalorder %s113, %s114
      %p125 = scmp.eq.s32.totalorder %s21, 0
      %p126 = por %p124, %p125
      %p127 = scmp.ne.s32.totalorder %s113, %s114
      %p128 = scmp.eq.s32.totalorder %s22, 3
      %p129 = por %p127, %p128
      %p131 = scmp.ne.s32.totalorder %s114, %s130
      %p132 = scmp.eq.s32.totalorder %s22, 0
      %p133 = por %p131, %p132
      %p134 = scmp.le.s32.totalorder 1, %s16
      %p135 = scmp.lt.s32.totalorder %s16, 5
      %p136 = pnand %p134, %p135
      %p137 = pneg %p136
      // Predicated region
      $region9: #{downsample_forward.5} parent=5 // pred_check
        _
      $region10: #{downsample_forward.5} parent=5 // pred_check_branch
        %139 = sbr.rel (%p136) target = $region12
      $region11: #{downsample_forward.5} parent=5 // pred_region
        %s140 = ssub.s32 %s16, 1
        // Predicated region
        $region13: #{downsample_forward.5} parent=11 // pred_check
          %p141 = pneg %p77
        $region14: #{downsample_forward.5} parent=11 // pred_check_branch
          %143 = sbr.rel (%p141) target = $region16
        $region15: #{downsample_forward.5} parent=11 // pred_region
          %s145 = ssub.s32 16, 16
          %146 = vsyncadd [#allocation6], %s145
          %s148 = sshll.u32 [#allocation5], 4
          %s149 = int_to_ptr.vmem [resolvable:$true] %s148
          %151 = dma.hbm_to_vmem [thread:$0]  %s1, 16, %s149, [#allocation6]
        $region16: #{downsample_forward.5} parent=11 // pred_fallthru
          _
        // Predicated region
        $region17: #{downsample_forward.5} parent=11 // pred_check
          %p152 = pneg %p98
        $region18: #{downsample_forward.5} parent=11 // pred_check_branch
          %154 = sbr.rel (%p152) target = $region20
        $region19: #{downsample_forward.5} parent=11 // pred_region
          %s156 = ssub.s32 16, 16
          %157 = vsyncadd [#allocation6], %s156
          %s159 = sshll.u32 [#allocation7], 4
          %s160 = int_to_ptr.vmem [resolvable:$true] %s159
          %162 = dma.hbm_to_vmem [thread:$0]  %s2, 16, %s160, [#allocation6]
        $region20: #{downsample_forward.5} parent=11 // pred_fallthru
          _
      $region12: #{downsample_forward.5} parent=5 // pred_fallthru
        _
      %p163 = scmp.lt.s32.totalorder %s16, 4
      // Predicated region
      $region21: #{downsample_forward.5} parent=5 // pred_check
        %p164 = pneg %p163
      $region22: #{downsample_forward.5} parent=5 // pred_check_branch
        %166 = sbr.rel (%p164) target = $region24
      $region23: #{downsample_forward.5} parent=5 // pred_region
        // Predicated region
        $region25: #{downsample_forward.5} parent=23 // pred_check
          %p167 = pneg %p50
        $region26: #{downsample_forward.5} parent=23 // pred_check_branch
          %169 = sbr.rel (%p167) target = $region28
        $region27: #{downsample_forward.5} parent=23 // pred_region
          %s170 = sand.u32 %s40, 1
          %s171 = scalar_lea.sflag [#allocation3], %s170
          %s172 = sand.u32 %s40, 1
          %s173 = smul.addr %s172, 40
          %s174 = scalar_lea.vmem [#allocation2], %s173
          %s176 = ssub.s32 640, 640
          %177 = vsyncadd %s171, %s176
          %s178 = smul.addr %s24, 5
          %s179 = smul.addr %s23, 10
          %s180 = sadd.s32 %s178, %s179
          %s181 = smul.addr %s180, 128
          %s182 = scalar_lea.hbm %s0, %s181
          %s183 = sshll.u32 %s174, 4
          %s184 = int_to_ptr.vmem [resolvable:$true] %s183
          %189 = dma.hbm_to_vmem [thread:$0]  %s182, 640, %s184, %s171, 128, 128, 8
        $region28: #{downsample_forward.5} parent=23 // pred_fallthru
          _
      $region24: #{downsample_forward.5} parent=5 // pred_fallthru
        _
      %p190 = scmp.le.s32.totalorder 1, %s16
      %p191 = scmp.lt.s32.totalorder %s16, 5
      %p192 = pnand %p190, %p191
      %p193 = pneg %p192
      // Predicated region
      $region29: #{downsample_forward.5} parent=5 // pred_check
        _
      $region30: #{downsample_forward.5} parent=5 // pred_check_branch
        %195 = sbr.rel (%p192) target = $region32
      $region31: #{downsample_forward.5} parent=5 // pred_region
        %s196 = ssub.s32 %s16, 1
        %s197 = sand.u32 %s43, 1
        %s198 = scalar_lea.sflag [#allocation3], %s197
        %s199 = sand.u32 %s43, 1
        %s200 = smul.addr %s199, 40
        %s201 = scalar_lea.vmem [#allocation2], %s200
        // Predicated region
        $region33: #{downsample_forward.5} parent=31 // pred_check
          %p202 = pneg %p56
        $region34: #{downsample_forward.5} parent=31 // pred_check_branch
          %204 = sbr.rel (%p202) target = $region36
        $region35: #{downsample_forward.5} parent=31 // pred_region
          %205 = dma.done %s198, 640
        $region36: #{downsample_forward.5} parent=31 // pred_fallthru
          _
        // Predicated region
        $region37: #{downsample_forward.5} parent=31 // pred_check
          %p206 = pneg %p77
        $region38: #{downsample_forward.5} parent=31 // pred_check_branch
          %208 = sbr.rel (%p206) target = $region40
        $region39: #{downsample_forward.5} parent=31 // pred_region
          %209 = dma.done [#allocation6], 16
        $region40: #{downsample_forward.5} parent=31 // pred_fallthru
          _
        // Predicated region
        $region41: #{downsample_forward.5} parent=31 // pred_check
          %p210 = pneg %p98
        $region42: #{downsample_forward.5} parent=31 // pred_check_branch
          %212 = sbr.rel (%p210) target = $region44
        $region43: #{downsample_forward.5} parent=31 // pred_region
          %213 = dma.done [#allocation6], 16
        $region44: #{downsample_forward.5} parent=31 // pred_fallthru
          _
        %s214 = sand.u32 %s43, 1
        %s215 = scalar_lea.sflag [#allocation3], %s214
        %s216 = sand.u32 %s43, 1
        %s217 = smul.addr %s216, 40
        %s218 = scalar_lea.vmem [#allocation2], %s217
        %p219 = pneg %p56
        %p220 = pneg %p53
        %p221 = pneg %p77
        %p222 = pneg %p74
        %p223 = pneg %p98
        %p224 = pneg %p95
        %p225 = pneg %p126
        %p226 = pneg %p123
        %s227 = sand.u32 %s113, 1
        %s228 = scalar_lea.sflag [#allocation4], %s227
        %s229 = sand.u32 %s113, 1
        %s230 = smul.addr %s229, 40
        %s231 = scalar_lea.vmem [#allocation8], %s230
        %v232 = vld [vmem:[%s201] sm:$0xff]
        %v233 = vld [vmem:[%s201 + $0x8] sm:$0xff]
        %v234 = vld [vmem:[%s201 + $0x10] sm:$0xff]
        %v235 = vld [vmem:[%s201 + $0x18] sm:$0xff]
        %v236 = vld [vmem:[%s201 + $0x20] sm:$0xff]
        %v237 = vld [vmem:[#allocation5] sm:$0x1]
        %v239 = vlaneseq
        %v240 = vshrl.u32 %v239, 7
        %v241 = vsub.s32 0, %v240
        %v242 = vrot.slane %v237, %v241
        %v244 = vmul.f32 %v232, %v242
        %v245 = vmul.f32 %v233, %v242
        %v246 = vmul.f32 %v234, %v242
        %v247 = vmul.f32 %v235, %v242
        %v248 = vmul.f32 %v236, %v242
        %v249 = vld [vmem:[#allocation7] sm:$0x1]
        %v251 = vlaneseq
        %v252 = vshrl.u32 %v251, 7
        %v253 = vsub.s32 0, %v252
        %v254 = vrot.slane %v249, %v253
        %v256 = vadd.f32 %v244, %v254
        %v257 = vadd.f32 %v245, %v254
        %v258 = vadd.f32 %v246, %v254
        %v259 = vadd.f32 %v247, %v254
        %v260 = vadd.f32 %v248, %v254
        %v261 = vmax.f32 %v256, 0.0
        %v262 = vmax.f32 %v257, 0.0
        %v263 = vmax.f32 %v258, 0.0
        %v264 = vmax.f32 %v259, 0.0
        %v265 = vmax.f32 %v260, 0.0
        %266 = vst [vmem:[%s231] sm:$0xff] %v261
        %267 = vst [vmem:[%s231 + $0x8] sm:$0xff] %v262
        %268 = vst [vmem:[%s231 + $0x10] sm:$0xff] %v263
        %269 = vst [vmem:[%s231 + $0x18] sm:$0xff] %v264
        %270 = vst [vmem:[%s231 + $0x20] sm:$0xff] %v265
        %s271 = sand.u32 %s113, 1
        %s272 = scalar_lea.sflag [#allocation4], %s271
        %s273 = sand.u32 %s113, 1
        %s274 = smul.addr %s273, 40
        %s275 = scalar_lea.vmem [#allocation8], %s274
        // Predicated region
        $region45: #{downsample_forward.5} parent=31 // pred_check
          %p276 = pneg %p123
        $region46: #{downsample_forward.5} parent=31 // pred_check_branch
          %278 = sbr.rel (%p276) target = $region48
        $region47: #{downsample_forward.5} parent=31 // pred_region
          %s280 = ssub.s32 640, 640
          %281 = vsyncadd %s272, %s280
          %s282 = smul.addr %s26, 5
          %s283 = smul.addr %s25, 10
          %s284 = sadd.s32 %s282, %s283
          %s285 = smul.addr %s284, 128
          %s286 = scalar_lea.hbm %s3, %s285
          %s287 = sshll.u32 %s275, 4
          %s288 = int_to_ptr.vmem [resolvable:$true] %s287
          %293 = dma.vmem_to_hbm [thread:$0]  %s288, 640, %s286, %s272, 128, 128, 8
        $region48: #{downsample_forward.5} parent=31 // pred_fallthru
          _
      $region32: #{downsample_forward.5} parent=5 // pred_fallthru
        _
      %p294 = scmp.le.s32.totalorder 2, %s16
      // Predicated region
      $region49: #{downsample_forward.5} parent=5 // pred_check
        %p295 = pneg %p294
      $region50: #{downsample_forward.5} parent=5 // pred_check_branch
        %297 = sbr.rel (%p295) target = $region52
      $region51: #{downsample_forward.5} parent=5 // pred_region
        %s298 = ssub.s32 %s16, 2
        // Predicated region
        $region53: #{downsample_forward.5} parent=51 // pred_check
          %p299 = pneg %p129
        $region54: #{downsample_forward.5} parent=51 // pred_check_branch
          %301 = sbr.rel (%p299) target = $region56
        $region55: #{downsample_forward.5} parent=51 // pred_region
          %s302 = sand.u32 %s114, 1
          %s303 = scalar_lea.sflag [#allocation4], %s302
          %s304 = sand.u32 %s114, 1
          %s305 = smul.addr %s304, 40
          %s306 = scalar_lea.vmem [#allocation8], %s305
          %307 = dma.done %s303, 640
        $region56: #{downsample_forward.5} parent=51 // pred_fallthru
          _
      $region52: #{downsample_forward.5} parent=5 // pred_fallthru
        _
    $region6: #{downsample_forward.5} parent=1 // loop_footer
      %s20 = sadd.s32 1, %s16
    $region7: #{downsample_forward.5} parent=1 // loop_footer_branch
      %15 = sbr.rel target = $region3
    $region8: #{downsample_forward.5} parent=1 // loop_exit
      _
    %308 = vsyncpa [#allocation3], 1
    %s309 = scalar_lea.sflag [#allocation3], 1
    %310 = vsyncpa %s309, 1
    %311 = vsyncpa [#allocation6], 1
    %312 = vsyncpa [#allocation4], 1
    %s313 = scalar_lea.sflag [#allocation4], 1
    %314 = vsyncpa %s313, 1

// kernel: downsample_forward.3
$region0: #{downsample_forward.3}
  #allocation0 [shape = 'u32[]', space=smem, size = 0x4, offset = 0x4, fixed_abs, tag = 'smem constant byte address 0x4 - core index']
  #allocation1 [shape = 'u32[144,128]{1,0:T(1,128)}', space=vmem, size = 0x12000, scoped, tag = 'internal scratch']
  #allocation2 [shape = 'bf16[62,4]{1,0:T(8,128)(2,1)}', space=vmem, size = 0x4000, scoped, tag = 'scratch operand']
  %s0 = inlined_call_operand.hbm [shape: bf16[2,2,4,62,4], index: 0, kind: input, shape index: {}]
  %s1 = inlined_call_operand.hbm [shape: bf16[9,4,128], index: 1, kind: input, shape index: {}]
  %s2 = inlined_call_operand.hbm [shape: f32[40,1], index: 2, kind: input, shape index: {}]
  %s3 = inlined_call_operand.hbm [shape: f32[2,2,40,128], index: 3, kind: output, shape index: {0}]
  %s4 = inlined_call_operand.hbm [shape: f32[1,128], index: 4, kind: output, shape index: {1}]
  %s5 = inlined_call_operand.hbm [shape: f32[1,128], index: 5, kind: output, shape index: {2}]
  %6 = xla_tuple %s3, %s4, %s5
  %s7 = sld [smem:[#allocation0]]
  $region77: #{downsample_forward.3} parent=0
    _
  %s9 = ssub.s32 1, %s7
  %s10 = scalar_select 0, %s9, %s7
  $region1: #{downsample_forward.3} parent=0
    #allocation3 [shape = 'u8[131072]{0}', space=vmem, size = 0x20000, scoped, tag = 'input window, operand 0']
    #allocation4 [shape = 's32[2]{0}', space=sflag, size = 0x8, scoped, tag = 'scoped memory for downsample_forward.3']
    #allocation5 [shape = 's32[2]{0}', space=sflag, size = 0x8, scoped, tag = 'scoped memory for downsample_forward.3']
    #allocation6 [shape = 'u8[9216]{0}', space=vmem, size = 0x2400, scoped, tag = 'input window, operand 1, single buffered']
    #allocation7 [shape = 's32[1]{0}', space=sflag, size = 0x4, scoped, tag = 'scoped memory for downsample_forward.3']
    #allocation8 [shape = 'u8[20480]{0}', space=vmem, size = 0x5000, scoped, tag = 'input window, operand 2, single buffered']
    #allocation9 [shape = 'u8[40960]{0}', space=vmem, size = 0xa000, scoped, tag = 'output window, operand 0']
    #allocation10 [shape = 'u8[512]{0}', space=vmem, size = 0x400, scoped, tag = 'output window, operand 1, single buffered']
    #allocation11 [shape = 's32[1]{0}', space=sflag, size = 0x4, scoped, tag = 'scoped memory for downsample_forward.3']
    #allocation12 [shape = 'u8[512]{0}', space=vmem, size = 0x400, scoped, tag = 'output window, operand 2, single buffered']
    %11 = vsyncpa [#allocation4], 0
    %s12 = scalar_lea.sflag [#allocation4], 1
    %13 = vsyncpa %s12, 0
    %14 = vsyncpa [#allocation7], 0
    %15 = vsyncpa [#allocation5], 0
    %s16 = scalar_lea.sflag [#allocation5], 1
    %17 = vsyncpa %s16, 0
    %18 = vsyncpa [#allocation11], 0
    loop: start=0, step=1, limit=6
    $region2: #{downsample_forward.3} parent=1 // loop_pre_header
      _
    $region3: #{downsample_forward.3} parent=1 // loop_header
      %s20 = sphi 0, %s24
      %p21 = scmp.ge.s32.totalorder %s20, 6
      %s27 = sphi 0, %s39
      %s28 = sphi 0, %s35
      %s29 = sphi 0, %s27
      %s30 = sphi 0, %s28
      %s31 = sphi 0, %s29
      %s32 = sphi 0, %s30
      %s44 = sphi 0, %s46
      %s47 = sphi 0, %s44
      %s48 = sphi 0, %s47
      %s64 = sphi 0, %s48
      %s68 = sphi 0, %s68
      %s70 = sphi 0, %s68
      %s71 = sphi 0, %s70
      %s85 = sphi 0, %s71
      %s89 = sphi 0, %s89
      %s91 = sphi 0, %s89
      %s92 = sphi 0, %s91
      %s106 = sphi 0, %s92
      %s114 = sphi 0, %s116
      %s117 = sphi 0, %s114
      %s118 = sphi 0, %s117
      %s134 = sphi 0, %s118
      %s138 = sphi 0, %s138
      %s140 = sphi 0, %s138
      %s141 = sphi 0, %s140
      %s155 = sphi 0, %s141
      %s159 = sphi 0, %s159
      %s161 = sphi 0, %s159
      %s162 = sphi 0, %s161
      %s176 = sphi 0, %s162
    $region4: #{downsample_forward.3} parent=1 // loop_header_branch
      %23 = sbr.rel (%p21) target = $region8
    $region5: #{downsample_forward.3} parent=1 // loop_body
      %s25 = ssub.s32 %s20, 1
      %s26 = ssub.s32 %s20, 2
      %s33 = sadd.s32 1, %s28
      %p34 = scmp.ge.s32.totalorder %s33, 2
      %s35 = scalar_select %p34, 0, %s33
      %s36 = sadd.s32 1, %s27
      %s37 = scalar_select %p34, %s36, %s27
      %p38 = scmp.ge.s32.totalorder %s37, 2
      %s39 = scalar_select %p38, 0, %s37
      %s40 = ssub.s32 %s27, %s39
      %s41 = ssub.s32 %s28, %s35
      %s42 = sor.u32 %s40, %s41
      %p43 = scmp.eq.s32.totalorder %s42, 0
      %s45 = sadd.s32 %s44, 1
      %s46 = scalar_select %p43, %s44, %s45
      %p49 = pneg %p43
      %p50 = scmp.eq.s32.totalorder %s20, 3
      %p51 = por %p49, %p50
      %p52 = scmp.ne.s32.totalorder %s44, %s47
      %p53 = scmp.eq.s32.totalorder %s20, 0
      %p54 = por %p52, %p53
      %p55 = scmp.ne.s32.totalorder %s44, %s47
      %p56 = scmp.eq.s32.totalorder %s25, 3
      %p57 = por %p55, %p56
      %p58 = scmp.ne.s32.totalorder %s47, %s48
      %p59 = scmp.eq.s32.totalorder %s25, 0
      %p60 = por %p58, %p59
      %p61 = scmp.ne.s32.totalorder %s47, %s48
      %p62 = scmp.eq.s32.totalorder %s26, 3
      %p63 = por %p61, %p62
      %p65 = scmp.ne.s32.totalorder %s48, %s64
      %p66 = scmp.eq.s32.totalorder %s26, 0
      %p67 = por %p65, %p66
      %s69 = sadd.s32 %s68, 1
      %p72 = scmp.eq.s32.totalorder %s20, 3
      %p73 = scmp.ne.s32.totalorder %s68, %s70
      %p74 = scmp.eq.s32.totalorder %s20, 0
      %p75 = por %p73, %p74
      %p76 = scmp.ne.s32.totalorder %s68, %s70
      %p77 = scmp.eq.s32.totalorder %s25, 3
      %p78 = por %p76, %p77
      %p79 = scmp.ne.s32.totalorder %s70, %s71
      %p80 = scmp.eq.s32.totalorder %s25, 0
      %p81 = por %p79, %p80
      %p82 = scmp.ne.s32.totalorder %s70, %s71
      %p83 = scmp.eq.s32.totalorder %s26, 3
      %p84 = por %p82, %p83
      %p86 = scmp.ne.s32.totalorder %s71, %s85
      %p87 = scmp.eq.s32.totalorder %s26, 0
      %p88 = por %p86, %p87
      %s90 = sadd.s32 %s89, 1
      %p93 = scmp.eq.s32.totalorder %s20, 3
      %p94 = scmp.ne.s32.totalorder %s89, %s91
      %p95 = scmp.eq.s32.totalorder %s20, 0
      %p96 = por %p94, %p95
      %p97 = scmp.ne.s32.totalorder %s89, %s91
      %p98 = scmp.eq.s32.totalorder %s25, 3
      %p99 = por %p97, %p98
      %p100 = scmp.ne.s32.totalorder %s91, %s92
      %p101 = scmp.eq.s32.totalorder %s25, 0
      %p102 = por %p100, %p101
      %p103 = scmp.ne.s32.totalorder %s91, %s92
      %p104 = scmp.eq.s32.totalorder %s26, 3
      %p105 = por %p103, %p104
      %p107 = scmp.ne.s32.totalorder %s92, %s106
      %p108 = scmp.eq.s32.totalorder %s26, 0
      %p109 = por %p107, %p108
      %s110 = ssub.s32 %s27, %s39
      %s111 = ssub.s32 %s28, %s35
      %s112 = sor.u32 %s110, %s111
      %p113 = scmp.eq.s32.totalorder %s112, 0
      %s115 = sadd.s32 %s114, 1
      %s116 = scalar_select %p113, %s114, %s115
      %p119 = pneg %p113
      %p120 = scmp.eq.s32.totalorder %s20, 3
      %p121 = por %p119, %p120
      %p122 = scmp.ne.s32.totalorder %s114, %s117
      %p123 = scmp.eq.s32.totalorder %s20, 0
      %p124 = por %p122, %p123
      %p125 = scmp.ne.s32.totalorder %s114, %s117
      %p126 = scmp.eq.s32.totalorder %s25, 3
      %p127 = por %p125, %p126
      %p128 = scmp.ne.s32.totalorder %s117, %s118
      %p129 = scmp.eq.s32.totalorder %s25, 0
      %p130 = por %p128, %p129
      %p131 = scmp.ne.s32.totalorder %s117, %s118
      %p132 = scmp.eq.s32.totalorder %s26, 3
      %p133 = por %p131, %p132
      %p135 = scmp.ne.s32.totalorder %s118, %s134
      %p136 = scmp.eq.s32.totalorder %s26, 0
      %p137 = por %p135, %p136
      %s139 = sadd.s32 %s138, 1
      %p142 = scmp.eq.s32.totalorder %s20, 3
      %p143 = scmp.ne.s32.totalorder %s138, %s140
      %p144 = scmp.eq.s32.totalorder %s20, 0
      %p145 = por %p143, %p144
      %p146 = scmp.ne.s32.totalorder %s138, %s140
      %p147 = scmp.eq.s32.totalorder %s25, 3
      %p148 = por %p146, %p147
      %p149 = scmp.ne.s32.totalorder %s140, %s141
      %p150 = scmp.eq.s32.totalorder %s25, 0
      %p151 = por %p149, %p150
      %p152 = scmp.ne.s32.totalorder %s140, %s141
      %p153 = scmp.eq.s32.totalorder %s26, 3
      %p154 = por %p152, %p153
      %p156 = scmp.ne.s32.totalorder %s141, %s155
      %p157 = scmp.eq.s32.totalorder %s26, 0
      %p158 = por %p156, %p157
      %s160 = sadd.s32 %s159, 1
      %p163 = scmp.eq.s32.totalorder %s20, 3
      %p164 = scmp.ne.s32.totalorder %s159, %s161
      %p165 = scmp.eq.s32.totalorder %s20, 0
      %p166 = por %p164, %p165
      %p167 = scmp.ne.s32.totalorder %s159, %s161
      %p168 = scmp.eq.s32.totalorder %s25, 3
      %p169 = por %p167, %p168
      %p170 = scmp.ne.s32.totalorder %s161, %s162
      %p171 = scmp.eq.s32.totalorder %s25, 0
      %p172 = por %p170, %p171
      %p173 = scmp.ne.s32.totalorder %s161, %s162
      %p174 = scmp.eq.s32.totalorder %s26, 3
      %p175 = por %p173, %p174
      %p177 = scmp.ne.s32.totalorder %s162, %s176
      %p178 = scmp.eq.s32.totalorder %s26, 0
      %p179 = por %p177, %p178
      %p180 = scmp.le.s32.totalorder 1, %s20
      %p181 = scmp.lt.s32.totalorder %s20, 5
      %p182 = pnand %p180, %p181
      %p183 = pneg %p182
      // Predicated region
      $region9: #{downsample_forward.3} parent=5 // pred_check
        _
      $region10: #{downsample_forward.3} parent=5 // pred_check_branch
        %185 = sbr.rel (%p182) target = $region12
      $region11: #{downsample_forward.3} parent=5 // pred_region
        %s186 = ssub.s32 %s20, 1
        // Predicated region
        $region13: #{downsample_forward.3} parent=11 // pred_check
          %p187 = pneg %p81
        $region14: #{downsample_forward.3} parent=11 // pred_check_branch
          %189 = sbr.rel (%p187) target = $region16
        $region15: #{downsample_forward.3} parent=11 // pred_region
          %s191 = ssub.s32 288, 288
          %192 = vsyncadd [#allocation7], %s191
          %s193 = sshll.u32 [#allocation6], 4
          %s194 = int_to_ptr.vmem [resolvable:$true] %s193
          %199 = dma.hbm_to_vmem [thread:$0]  %s1, 288, %s194, [#allocation7], 32, 32, 2
        $region16: #{downsample_forward.3} parent=11 // pred_fallthru
          _
        // Predicated region
        $region17: #{downsample_forward.3} parent=11 // pred_check
          %p200 = pneg %p102
        $region18: #{downsample_forward.3} parent=11 // pred_check_branch
          %202 = sbr.rel (%p200) target = $region20
        $region19: #{downsample_forward.3} parent=11 // pred_region
          %s204 = ssub.s32 640, 640
          %205 = vsyncadd [#allocation7], %s204
          %s206 = sshll.u32 [#allocation8], 4
          %s207 = int_to_ptr.vmem [resolvable:$true] %s206
          %212 = dma.hbm_to_vmem [thread:$0]  %s2, 640, %s207, [#allocation7], 128, 128, 8
        $region20: #{downsample_forward.3} parent=11 // pred_fallthru
          _
      $region12: #{downsample_forward.3} parent=5 // pred_fallthru
        _
      %p213 = scmp.lt.s32.totalorder %s20, 4
      // Predicated region
      $region21: #{downsample_forward.3} parent=5 // pred_check
        %p214 = pneg %p213
      $region22: #{downsample_forward.3} parent=5 // pred_check_branch
        %216 = sbr.rel (%p214) target = $region24
      $region23: #{downsample_forward.3} parent=5 // pred_region
        // Predicated region
        $region25: #{downsample_forward.3} parent=23 // pred_check
          %p217 = pneg %p54
        $region26: #{downsample_forward.3} parent=23 // pred_check_branch
          %219 = sbr.rel (%p217) target = $region28
        $region27: #{downsample_forward.3} parent=23 // pred_region
          %s220 = sand.u32 %s44, 1
          %s221 = scalar_lea.sflag [#allocation4], %s220
          %s222 = sand.u32 %s44, 1
          %s223 = smul.addr %s222, 128
          %s224 = scalar_lea.vmem [#allocation3], %s223
          %s226 = ssub.s32 2048, 2048
          %227 = vsyncadd %s221, %s226
          %s228 = smul.addr %s28, 32
          %s229 = smul.addr %s27, 64
          %s230 = sadd.s32 %s228, %s229
          %s231 = smul.addr %s230, 64
          %s232 = scalar_lea.hbm %s0, %s231
          %s233 = sshll.u32 %s224, 4
          %s234 = int_to_ptr.vmem [resolvable:$true] %s233
          %239 = dma.hbm_to_vmem [thread:$0]  %s232, 2048, %s234, %s221, 64, 64, 4
        $region28: #{downsample_forward.3} parent=23 // pred_fallthru
          _
      $region24: #{downsample_forward.3} parent=5 // pred_fallthru
        _
      %p240 = scmp.le.s32.totalorder 1, %s20
      %p241 = scmp.lt.s32.totalorder %s20, 5
      %p242 = pnand %p240, %p241
      %p243 = pneg %p242
      // Predicated region
      $region29: #{downsample_forward.3} parent=5 // pred_check
        _
      $region30: #{downsample_forward.3} parent=5 // pred_check_branch
        %245 = sbr.rel (%p242) target = $region32
      $region31: #{downsample_forward.3} parent=5 // pred_region
        %s246 = ssub.s32 %s20, 1
        %s247 = sand.u32 %s47, 1
        %s248 = scalar_lea.sflag [#allocation4], %s247
        %s249 = sand.u32 %s47, 1
        %s250 = smul.addr %s249, 128
        %s251 = scalar_lea.vmem [#allocation3], %s250
        // Predicated region
        $region33: #{downsample_forward.3} parent=31 // pred_check
          %p252 = pneg %p60
        $region34: #{downsample_forward.3} parent=31 // pred_check_branch
          %254 = sbr.rel (%p252) target = $region36
        $region35: #{downsample_forward.3} parent=31 // pred_region
          %255 = dma.done %s248, 2048
        $region36: #{downsample_forward.3} parent=31 // pred_fallthru
          _
        // Predicated region
        $region37: #{downsample_forward.3} parent=31 // pred_check
          %p256 = pneg %p81
        $region38: #{downsample_forward.3} parent=31 // pred_check_branch
          %258 = sbr.rel (%p256) target = $region40
        $region39: #{downsample_forward.3} parent=31 // pred_region
          %259 = dma.done [#allocation7], 288
        $region40: #{downsample_forward.3} parent=31 // pred_fallthru
          _
        // Predicated region
        $region41: #{downsample_forward.3} parent=31 // pred_check
          %p260 = pneg %p102
        $region42: #{downsample_forward.3} parent=31 // pred_check_branch
          %262 = sbr.rel (%p260) target = $region44
        $region43: #{downsample_forward.3} parent=31 // pred_region
          %263 = dma.done [#allocation7], 640
        $region44: #{downsample_forward.3} parent=31 // pred_fallthru
          _
        %s264 = sand.u32 %s47, 1
        %s265 = scalar_lea.sflag [#allocation4], %s264
        %s266 = sand.u32 %s47, 1
        %s267 = smul.addr %s266, 128
        %s268 = scalar_lea.vmem [#allocation3], %s267
        %p269 = pneg %p60
        %p270 = pneg %p57
        %p271 = pneg %p81
        %p272 = pneg %p78
        %p273 = pneg %p102
        %p274 = pneg %p99
        %p275 = pneg %p130
        %p276 = pneg %p127
        %s277 = sand.u32 %s117, 1
        %s278 = scalar_lea.sflag [#allocation5], %s277
        %s279 = sand.u32 %s117, 1
        %s280 = smul.addr %s279, 40
        %s281 = scalar_lea.vmem [#allocation9], %s280
        %p282 = pneg %p151
        %p283 = pneg %p148
        %p284 = pneg %p172
        %p285 = pneg %p169
        %v287 = vld [vmem:[%s251] sm:$0xf]
        %v288 = vld [vmem:[%s251 + $0x4] sm:$0xf]
        %v289 = vld [vmem:[%s251 + $0x8] sm:$0xf]
        %v290 = vld [vmem:[%s251 + $0xc] sm:$0xf]
        %v291 = vld [vmem:[%s251 + $0x10] sm:$0xf]
        %v292 = vld [vmem:[%s251 + $0x14] sm:$0xf]
        %v293 = vld [vmem:[%s251 + $0x18] sm:$0xf]
        %v294 = vld [vmem:[%s251 + $0x1c] sm:$0x7]
        %s295 = scalar_lea.vmem %s251, 32 [#allocation3]
        %v296 = vld [vmem:[%s295] sm:$0xf]
        %v297 = vld [vmem:[%s295 + $0x4] sm:$0xf]
        %v298 = vld [vmem:[%s295 + $0x8] sm:$0xf]
        %v299 = vld [vmem:[%s295 + $0xc] sm:$0xf]
        %v300 = vld [vmem:[%s295 + $0x10] sm:$0xf]
        %v301 = vld [vmem:[%s295 + $0x14] sm:$0xf]
        %v302 = vld [vmem:[%s295 + $0x18] sm:$0xf]
        %v303 = vld [vmem:[%s295 + $0x1c] sm:$0x7]
        %v304 = vmax.bf16 %v287, %v296
        %v305 = vmax.bf16 %v288, %v297
        %v306 = vmax.bf16 %v289, %v298
        %v307 = vmax.bf16 %v290, %v299
        %v308 = vmax.bf16 %v291, %v300
        %v309 = vmax.bf16 %v292, %v301
        %v310 = vmax.bf16 %v293, %v302
        %v311 = vmax.bf16 %v294, %v303
        %s312 = scalar_lea.vmem %s251, 64 [#allocation3]
        %v313 = vld [vmem:[%s312] sm:$0xf]
        %v314 = vld [vmem:[%s312 + $0x4] sm:$0xf]
        %v315 = vld [vmem:[%s312 + $0x8] sm:$0xf]
        %v316 = vld [vmem:[%s312 + $0xc] sm:$0xf]
        %v317 = vld [vmem:[%s312 + $0x10] sm:$0xf]
        %v318 = vld [vmem:[%s312 + $0x14] sm:$0xf]
        %v319 = vld [vmem:[%s312 + $0x18] sm:$0xf]
        %v320 = vld [vmem:[%s312 + $0x1c] sm:$0x7]
        %s321 = scalar_lea.vmem %s251, 96 [#allocation3]
        %v322 = vld [vmem:[%s321] sm:$0xf]
        %v323 = vld [vmem:[%s321 + $0x4] sm:$0xf]
        %v324 = vld [vmem:[%s321 + $0x8] sm:$0xf]
        %v325 = vld [vmem:[%s321 + $0xc] sm:$0xf]
        %v326 = vld [vmem:[%s321 + $0x10] sm:$0xf]
        %v327 = vld [vmem:[%s321 + $0x14] sm:$0xf]
        %v328 = vld [vmem:[%s321 + $0x18] sm:$0xf]
        %v329 = vld [vmem:[%s321 + $0x1c] sm:$0x7]
        %v330 = vmax.bf16 %v313, %v322
        %v331 = vmax.bf16 %v314, %v323
        %v332 = vmax.bf16 %v315, %v324
        %v333 = vmax.bf16 %v316, %v325
        %v334 = vmax.bf16 %v317, %v326
        %v335 = vmax.bf16 %v318, %v327
        %v336 = vmax.bf16 %v319, %v328
        %v337 = vmax.bf16 %v320, %v329
        %v338 = vmax.bf16 %v304, %v330
        %v339 = vmax.bf16 %v305, %v331
        %v340 = vmax.bf16 %v306, %v332
        %v341 = vmax.bf16 %v307, %v333
        %v342 = vmax.bf16 %v308, %v334
        %v343 = vmax.bf16 %v309, %v335
        %v344 = vmax.bf16 %v310, %v336
        %v345 = vmax.bf16 %v311, %v337
        %vm346 = vcmask 27648
        %347 = vst.msk [vmem:[#allocation2] sm:$0xf] %vm346, %v338
        %348 = vst.msk [vmem:[#allocation2 + $0x4] sm:$0xf] %vm346, %v339
        %349 = vst.msk [vmem:[#allocation2 + $0x8] sm:$0xf] %vm346, %v340
        %350 = vst.msk [vmem:[#allocation2 + $0xc] sm:$0xf] %vm346, %v341
        %351 = vst.msk [vmem:[#allocation2 + $0x10] sm:$0xf] %vm346, %v342
        %352 = vst.msk [vmem:[#allocation2 + $0x14] sm:$0xf] %vm346, %v343
        %353 = vst.msk [vmem:[#allocation2 + $0x18] sm:$0xf] %vm346, %v344
        %vm354 = vcmask 26624
        %355 = vst.msk [vmem:[#allocation2 + $0x1c] sm:$0x7] %vm354, %v345
        %v356 = vld [vmem:[#allocation2] sm:$0xf]
        %v357 = vld [vmem:[#allocation2 + $0x4] sm:$0xf]
        %v358 = vld [vmem:[#allocation2 + $0x8] sm:$0xf]
        %v359 = vld [vmem:[#allocation2 + $0xc] sm:$0xf]
        %v360 = vld [vmem:[#allocation2 + $0x10] sm:$0xf]
        %v361 = vld [vmem:[#allocation6] sm:$0x3]
        %v362 = vld [vmem:[#allocation2 + $0x14] sm:$0x1]
        %s363 = scalar_lea.vmem [#allocation6], 2
        %v364 = vld [vmem:[%s363] sm:$0x3]
        %v371 = vunpack.c.l.b16 %v356
        %v372 = vunpack.c.l.b16 %v357
        %v373 = vunpack.c.l.b16 %v358
        %v374 = vunpack.c.l.b16 %v359
        %v375 = vunpack.c.l.b16 %v360
        %v376 = vunpack.c.l.b16 %v362
        %v377 = vpack.c.b16 %v372, %v371
        %v378 = vpack.c.b16 %v374, %v373
        %v379 = vpack.c.b16 %v376, %v375
        %vm380 = vsmask.f32 7424
        %v382 = vshrl.u32 %v377, 16
        %v384 = vshll.u32 %v377, 16
        %v386 = vrot.slane %v384, 1
        %v387 = vor.u32 %v382, %v386
        %v389 = vshll.u32 %v378, 16
        %v391 = vrot.slane %v389, 1
        %v392 = vsel %vm380, %v387, %v391
        %v393 = vshrl.u32 %v378, 16
        %v395 = vor.u32 %v393, %v391
        %v397 = vshll.u32 %v379, 16
        %v399 = vrot.slane %v397, 1
        %v400 = vsel %vm380, %v395, %v399
        %v401 = vshrl.u32 %v379, 16
        %v403 = vor.u32 %v401, %v399
        %vm404 = vcmask 31744
        %v406 = vsel %vm404, %v392, 0
        %v409 = vsel %vm404, %v400, 0
        %v412 = vsel %vm404, %v403, 0
        %vm414 = vcmask 1041408
        %v416 = vsel %vm414, %v364, 0
        %418 = vmatprep.subr.bf16.mxu0 0
        %419 = vmatpush1.bf16.msra.mxu0 %v416
        %420 = vmatprep.subr.bf16.mxu0 0
        %421 = vmatpush1.bf16.msra.mxu0 0
        %422 = vmatprep.subr.bf16.mxu0 0
        %423 = vmatpush1.bf16.msra.mxu0 0
        %424 = vmatprep.subr.bf16.mxu0 0
        %425 = vmatpush1.bf16.msra.mxu0 0
        %426 = vmatprep.subr.bf16.mxu0 0
        %427 = vmatpush1.bf16.msra.mxu0 0
        %428 = vmatprep.subr.bf16.mxu0 0
        %429 = vmatpush1.bf16.msra.mxu0 0
        %430 = vmatprep.subr.bf16.mxu0 0
        %431 = vmatpush1.bf16.msra.mxu0 0
        %432 = vmatprep.subr.bf16.mxu0 0
        %433 = vmatpush1.bf16.msra.mxu0 0
        %434 = vmatprep.subr.bf16.mxu0 0
        %435 = vmatpush1.bf16.msra.mxu0 0
        %436 = vmatprep.subr.bf16.mxu0 0
        %437 = vmatpush1.bf16.msra.mxu0 0
        %438 = vmatprep.subr.bf16.mxu0 0
        %439 = vmatpush1.bf16.msra.mxu0 0
        %440 = vmatprep.subr.bf16.mxu0 0
        %441 = vmatpush1.bf16.msra.mxu0 0
        %442 = vmatprep.subr.bf16.mxu0 0
        %443 = vmatpush1.bf16.msra.mxu0 0
        %444 = vmatprep.subr.bf16.mxu0 0
        %445 = vmatpush1.bf16.msra.mxu0 0
        %446 = vmatprep.subr.bf16.mxu0 0
        %447 = vmatpush1.bf16.msra.mxu0 0
        %448 = vmatprep.subr.bf16.mxu0 0
        %449 = vmatpush1.bf16.msra.mxu0 0
        %450 = vmatprep.mubr.bf16.mxu0 0
        %451 = vmatmul.mubr.bf16.gmra.mrb[0].mxu0 %v406
        %v452 = vpop.f32.mrb[0].mxu0
        %v453 = vadd.f32 0.0, %v452
        %v454 = vpop.f32.mrb[0].mxu0
        %v455 = vpop.f32.mrb[0].mxu0
        %v456 = vadd.f32 0.0, %v455
        %v457 = vpop.f32.mrb[0].mxu0
        %458 = vmatprep.mubr.bf16.mxu0 0
        %459 = vmatmul.mubr.bf16.gmra.mrb[0].mxu0 %v409
        %v460 = vpop.f32.mrb[0].mxu0
        %v461 = vadd.f32 0.0, %v460
        %v462 = vpop.f32.mrb[0].mxu0
        %v463 = vpop.f32.mrb[0].mxu0
        %v464 = vadd.f32 0.0, %v463
        %v465 = vpop.f32.mrb[0].mxu0
        %466 = vmatprep.mubr.bf16.mxu0 0
        %467 = vmatmul.mubr.bf16.gmra.mrb[0].mxu0 %v412
        %v468 = vpop.f32.mrb[0].mxu0
        %v469 = vadd.f32 0.0, %v468
        %v470 = vpop.f32.mrb[0].mxu0
        %v471 = vpop.f32.mrb[0].mxu0
        %v472 = vpop.f32.mrb[0].mxu0
        %473 = vdwg.mxu0
        %v474 = vpack.c.b16 %v375, %v375
        %v475 = vsel %vm404, %v377, 0
        %v477 = vsel %vm404, %v378, 0
        %v480 = vsel %vm404, %v474, 0
        %v483 = vsel %vm414, %v361, 0
        %485 = vmatprep.subr.bf16.mxu0 0
        %486 = vmatpush1.bf16.msra.mxu0 %v483
        %487 = vmatprep.subr.bf16.mxu0 0
        %488 = vmatpush1.bf16.msra.mxu0 0
        %489 = vmatprep.subr.bf16.mxu0 0
        %490 = vmatpush1.bf16.msra.mxu0 0
        %491 = vmatprep.subr.bf16.mxu0 0
        %492 = vmatpush1.bf16.msra.mxu0 0
        %493 = vmatprep.subr.bf16.mxu0 0
        %494 = vmatpush1.bf16.msra.mxu0 0
        %495 = vmatprep.subr.bf16.mxu0 0
        %496 = vmatpush1.bf16.msra.mxu0 0
        %497 = vmatprep.subr.bf16.mxu0 0
        %498 = vmatpush1.bf16.msra.mxu0 0
        %499 = vmatprep.subr.bf16.mxu0 0
        %500 = vmatpush1.bf16.msra.mxu0 0
        %501 = vmatprep.subr.bf16.mxu0 0
        %502 = vmatpush1.bf16.msra.mxu0 0
        %503 = vmatprep.subr.bf16.mxu0 0
        %504 = vmatpush1.bf16.msra.mxu0 0
        %505 = vmatprep.subr.bf16.mxu0 0
        %506 = vmatpush1.bf16.msra.mxu0 0
        %507 = vmatprep.subr.bf16.mxu0 0
        %508 = vmatpush1.bf16.msra.mxu0 0
        %509 = vmatprep.subr.bf16.mxu0 0
        %510 = vmatpush1.bf16.msra.mxu0 0
        %511 = vmatprep.subr.bf16.mxu0 0
        %512 = vmatpush1.bf16.msra.mxu0 0
        %513 = vmatprep.subr.bf16.mxu0 0
        %514 = vmatpush1.bf16.msra.mxu0 0
        %515 = vmatprep.subr.bf16.mxu0 0
        %516 = vmatpush1.bf16.msra.mxu0 0
        %517 = vmatprep.mubr.bf16.mxu0 0
        %518 = vmatmul.mubr.bf16.gmra.mrb[0].mxu0 %v475
        %v519 = vpop.f32.mrb[0].mxu0
        %v520 = vadd.f32 %v453, %v519
        %v521 = vpop.f32.mrb[0].mxu0
        %v522 = vpop.f32.mrb[0].mxu0
        %v523 = vadd.f32 %v456, %v522
        %v524 = vpop.f32.mrb[0].mxu0
        %525 = vmatprep.mubr.bf16.mxu0 0
        %526 = vmatmul.mubr.bf16.gmra.mrb[0].mxu0 %v477
        %v527 = vpop.f32.mrb[0].mxu0
        %v528 = vadd.f32 %v461, %v527
        %v529 = vpop.f32.mrb[0].mxu0
        %v530 = vpop.f32.mrb[0].mxu0
        %v531 = vadd.f32 %v464, %v530
        %v532 = vpop.f32.mrb[0].mxu0
        %533 = vmatprep.mubr.bf16.mxu0 0
        %534 = vmatmul.mubr.bf16.gmra.mrb[0].mxu0 %v480
        %v535 = vpop.f32.mrb[0].mxu0
        %v536 = vadd.f32 %v469, %v535
        %v537 = vpop.f32.mrb[0].mxu0
        %v538 = vpop.f32.mrb[0].mxu0
        %v539 = vpop.f32.mrb[0].mxu0
        %540 = vdwg.mxu0
        %v541 = vld [vmem:[#allocation2] sm:$0xe]
        %s542 = scalar_lea.vmem [#allocation6], 4
        %v543 = vld [vmem:[%s542] sm:$0x3]
        %v545 = vunpack.c.l.b16 %v541
        %v546 = vpack.c.b16 %v372, %v545
        %vm547 = vcmask 1046528
        %v548 = vrot.slane %v546, 1
        %v549 = vrot.slane %v378, 1
        %v550 = vsel %vm547, %v548, %v549
        %v551 = vrot.slane %v379, 1
        %v552 = vsel %vm547, %v549, %v551
        %v554 = vsel %vm404, %v550, 0
        %v557 = vsel %vm404, %v552, 0
        %v560 = vsel %vm404, %v551, 0
        %v563 = vsel %vm414, %v543, 0
        %565 = vmatprep.subr.bf16.mxu0 0
        %566 = vmatpush1.bf16.msra.mxu0 %v563
        %567 = vmatprep.subr.bf16.mxu0 0
        %568 = vmatpush1.bf16.msra.mxu0 0
        %569 = vmatprep.subr.bf16.mxu0 0
        %570 = vmatpush1.bf16.msra.mxu0 0
        %571 = vmatprep.subr.bf16.mxu0 0
        %572 = vmatpush1.bf16.msra.mxu0 0
        %573 = vmatprep.subr.bf16.mxu0 0
        %574 = vmatpush1.bf16.msra.mxu0 0
        %575 = vmatprep.subr.bf16.mxu0 0
        %576 = vmatpush1.bf16.msra.mxu0 0
        %577 = vmatprep.subr.bf16.mxu0 0
        %578 = vmatpush1.bf16.msra.mxu0 0
        %579 = vmatprep.subr.bf16.mxu0 0
        %580 = vmatpush1.bf16.msra.mxu0 0
        %581 = vmatprep.subr.bf16.mxu0 0
        %582 = vmatpush1.bf16.msra.mxu0 0
        %583 = vmatprep.subr.bf16.mxu0 0
        %584 = vmatpush1.bf16.msra.mxu0 0
        %585 = vmatprep.subr.bf16.mxu0 0
        %586 = vmatpush1.bf16.msra.mxu0 0
        %587 = vmatprep.subr.bf16.mxu0 0
        %588 = vmatpush1.bf16.msra.mxu0 0
        %589 = vmatprep.subr.bf16.mxu0 0
        %590 = vmatpush1.bf16.msra.mxu0 0
        %591 = vmatprep.subr.bf16.mxu0 0
        %592 = vmatpush1.bf16.msra.mxu0 0
        %593 = vmatprep.subr.bf16.mxu0 0
        %594 = vmatpush1.bf16.msra.mxu0 0
        %595 = vmatprep.subr.bf16.mxu0 0
        %596 = vmatpush1.bf16.msra.mxu0 0
        %597 = vmatprep.mubr.bf16.mxu0 0
        %598 = vmatmul.mubr.bf16.gmra.mrb[0].mxu0 %v554
        %v599 = vpop.f32.mrb[0].mxu0
        %v600 = vadd.f32 0.0, %v599
        %v601 = vpop.f32.mrb[0].mxu0
        %v602 = vpop.f32.mrb[0].mxu0
        %v603 = vadd.f32 0.0, %v602
        %v604 = vpop.f32.mrb[0].mxu0
        %605 = vmatprep.mubr.bf16.mxu0 0
        %606 = vmatmul.mubr.bf16.gmra.mrb[0].mxu0 %v557
        %v607 = vpop.f32.mrb[0].mxu0
        %v608 = vadd.f32 0.0, %v607
        %v609 = vpop.f32.mrb[0].mxu0
        %v610 = vpop.f32.mrb[0].mxu0
        %v611 = vadd.f32 0.0, %v610
        %v612 = vpop.f32.mrb[0].mxu0
        %613 = vmatprep.mubr.bf16.mxu0 0
        %614 = vmatmul.mubr.bf16.gmra.mrb[0].mxu0 %v560
        %v615 = vpop.f32.mrb[0].mxu0
        %v616 = vadd.f32 0.0, %v615
        %v617 = vpop.f32.mrb[0].mxu0
        %v618 = vpop.f32.mrb[0].mxu0
        %v619 = vpop.f32.mrb[0].mxu0
        %620 = vdwg.mxu0
        %v621 = vadd.f32 %v520, %v600
        %v622 = vadd.f32 %v523, %v603
        %v623 = vadd.f32 %v528, %v608
        %v624 = vadd.f32 %v531, %v611
        %v625 = vadd.f32 %v536, %v616
        %v626 = vld [vmem:[#allocation2 + $0x4] sm:$0xe]
        %v627 = vld [vmem:[#allocation2 + $0x8] sm:$0xf]
        %v628 = vld [vmem:[#allocation2 + $0xc] sm:$0xf]
        %v629 = vld [vmem:[#allocation2 + $0x10] sm:$0xf]
        %v630 = vld [vmem:[#allocation2 + $0x14] sm:$0xf]
        %v631 = vld [vmem:[#allocation2 + $0x18] sm:$0x1]
        %s632 = scalar_lea.vmem [#allocation6], 6
        %v633 = vld [vmem:[%s632] sm:$0x3]
        %v640 = vunpack.c.l.b16 %v626
        %v641 = vunpack.c.l.b16 %v627
        %v642 = vunpack.c.l.b16 %v628
        %v643 = vunpack.c.l.b16 %v629
        %v644 = vunpack.c.l.b16 %v630
        %v645 = vunpack.c.l.b16 %v631
        %v646 = vpack.c.b16 %v641, %v640
        %v647 = vpack.c.b16 %v643, %v642
        %v648 = vpack.c.b16 %v645, %v644
        %v649 = vrot.slane %v646, 1
        %v650 = vrot.slane %v647, 1
        %v651 = vsel %vm547, %v649, %v650
        %v652 = vrot.slane %v648, 1
        %v653 = vsel %vm547, %v650, %v652
        %v655 = vsel %vm404, %v651, 0
        %v658 = vsel %vm404, %v653, 0
        %v661 = vsel %vm404, %v652, 0
        %v664 = vsel %vm414, %v633, 0
        %666 = vmatprep.subr.bf16.mxu0 0
        %667 = vmatpush1.bf16.msra.mxu0 %v664
        %668 = vmatprep.subr.bf16.mxu0 0
        %669 = vmatpush1.bf16.msra.mxu0 0
        %670 = vmatprep.subr.bf16.mxu0 0
        %671 = vmatpush1.bf16.msra.mxu0 0
        %672 = vmatprep.subr.bf16.mxu0 0
        %673 = vmatpush1.bf16.msra.mxu0 0
        %674 = vmatprep.subr.bf16.mxu0 0
        %675 = vmatpush1.bf16.msra.mxu0 0
        %676 = vmatprep.subr.bf16.mxu0 0
        %677 = vmatpush1.bf16.msra.mxu0 0
        %678 = vmatprep.subr.bf16.mxu0 0
        %679 = vmatpush1.bf16.msra.mxu0 0
        %680 = vmatprep.subr.bf16.mxu0 0
        %681 = vmatpush1.bf16.msra.mxu0 0
        %682 = vmatprep.subr.bf16.mxu0 0
        %683 = vmatpush1.bf16.msra.mxu0 0
        %684 = vmatprep.subr.bf16.mxu0 0
        %685 = vmatpush1.bf16.msra.mxu0 0
        %686 = vmatprep.subr.bf16.mxu0 0
        %687 = vmatpush1.bf16.msra.mxu0 0
        %688 = vmatprep.subr.bf16.mxu0 0
        %689 = vmatpush1.bf16.msra.mxu0 0
        %690 = vmatprep.subr.bf16.mxu0 0
        %691 = vmatpush1.bf16.msra.mxu0 0
        %692 = vmatprep.subr.bf16.mxu0 0
        %693 = vmatpush1.bf16.msra.mxu0 0
        %694 = vmatprep.subr.bf16.mxu0 0
        %695 = vmatpush1.bf16.msra.mxu0 0
        %696 = vmatprep.subr.bf16.mxu0 0
        %697 = vmatpush1.bf16.msra.mxu0 0
        %698 = vmatprep.mubr.bf16.mxu0 0
        %699 = vmatmul.mubr.bf16.gmra.mrb[0].mxu0 %v655
        %v700 = vpop.f32.mrb[0].mxu0
        %v701 = vadd.f32 0.0, %v700
        %v702 = vpop.f32.mrb[0].mxu0
        %v703 = vpop.f32.mrb[0].mxu0
        %v704 = vadd.f32 0.0, %v703
        %v705 = vpop.f32.mrb[0].mxu0
        %706 = vmatprep.mubr.bf16.mxu0 0
        %707 = vmatmul.mubr.bf16.gmra.mrb[0].mxu0 %v658
        %v708 = vpop.f32.mrb[0].mxu0
        %v709 = vadd.f32 0.0, %v708
        %v710 = vpop.f32.mrb[0].mxu0
        %v711 = vpop.f32.mrb[0].mxu0
        %v712 = vadd.f32 0.0, %v711
        %v713 = vpop.f32.mrb[0].mxu0
        %714 = vmatprep.mubr.bf16.mxu0 0
        %715 = vmatmul.mubr.bf16.gmra.mrb[0].mxu0 %v661
        %v716 = vpop.f32.mrb[0].mxu0
        %v717 = vadd.f32 0.0, %v716
        %v718 = vpop.f32.mrb[0].mxu0
        %v719 = vpop.f32.mrb[0].mxu0
        %v720 = vpop.f32.mrb[0].mxu0
        %721 = vdwg.mxu0
        %v722 = vadd.f32 %v621, %v701
        %v723 = vadd.f32 %v622, %v704
        %v724 = vadd.f32 %v623, %v709
        %v725 = vadd.f32 %v624, %v712
        %v726 = vadd.f32 %v625, %v717
        %v727 = vld [vmem:[#allocation2 + $0x18] sm:$0x3]
        %s728 = scalar_lea.vmem [#allocation6], 8
        %v729 = vld [vmem:[%s728] sm:$0x3]
        %v731 = vunpack.c.l.b16 %v727
        %v732 = vpack.c.b16 %v731, %v644
        %vm733 = vsmask.f32 6400
        %v735 = vshrl.u32 %v646, 16
        %v737 = vrot.slane %v735, 1
        %v738 = vshll.u32 %v646, 16
        %v740 = vrot.slane %v738, 2
        %v741 = vor.u32 %v737, %v740
        %v743 = vshrl.u32 %v647, 16
        %v745 = vrot.slane %v743, 1
        %v746 = vshll.u32 %v647, 16
        %v748 = vrot.slane %v746, 2
        %v749 = vor.u32 %v745, %v748
        %v750 = vsel %vm733, %v741, %v749
        %v752 = vshrl.u32 %v732, 16
        %v754 = vrot.slane %v752, 1
        %v755 = vshll.u32 %v732, 16
        %v757 = vrot.slane %v755, 2
        %v758 = vor.u32 %v754, %v757
        %v759 = vsel %vm733, %v749, %v758
        %v761 = vsel %vm404, %v750, 0
        %v764 = vsel %vm404, %v759, 0
        %v767 = vsel %vm404, %v758, 0
        %v770 = vsel %vm414, %v729, 0
        %772 = vmatprep.subr.bf16.mxu0 0
        %773 = vmatpush1.bf16.msra.mxu0 %v770
        %774 = vmatprep.subr.bf16.mxu0 0
        %775 = vmatpush1.bf16.msra.mxu0 0
        %776 = vmatprep.subr.bf16.mxu0 0
        %777 = vmatpush1.bf16.msra.mxu0 0
        %778 = vmatprep.subr.bf16.mxu0 0
        %779 = vmatpush1.bf16.msra.mxu0 0
        %780 = vmatprep.subr.bf16.mxu0 0
        %781 = vmatpush1.bf16.msra.mxu0 0
        %782 = vmatprep.subr.bf16.mxu0 0
        %783 = vmatpush1.bf16.msra.mxu0 0
        %784 = vmatprep.subr.bf16.mxu0 0
        %785 = vmatpush1.bf16.msra.mxu0 0
        %786 = vmatprep.subr.bf16.mxu0 0
        %787 = vmatpush1.bf16.msra.mxu0 0
        %788 = vmatprep.subr.bf16.mxu0 0
        %789 = vmatpush1.bf16.msra.mxu0 0
        %790 = vmatprep.subr.bf16.mxu0 0
        %791 = vmatpush1.bf16.msra.mxu0 0
        %792 = vmatprep.subr.bf16.mxu0 0
        %793 = vmatpush1.bf16.msra.mxu0 0
        %794 = vmatprep.subr.bf16.mxu0 0
        %795 = vmatpush1.bf16.msra.mxu0 0
        %796 = vmatprep.subr.bf16.mxu0 0
        %797 = vmatpush1.bf16.msra.mxu0 0
        %798 = vmatprep.subr.bf16.mxu0 0
        %799 = vmatpush1.bf16.msra.mxu0 0
        %800 = vmatprep.subr.bf16.mxu0 0
        %801 = vmatpush1.bf16.msra.mxu0 0
        %802 = vmatprep.subr.bf16.mxu0 0
        %803 = vmatpush1.bf16.msra.mxu0 0
        %804 = vmatprep.mubr.bf16.mxu0 0
        %805 = vmatmul.mubr.bf16.gmra.mrb[0].mxu0 %v761
        %v806 = vpop.f32.mrb[0].mxu0
        %v807 = vadd.f32 0.0, %v806
        %v808 = vpop.f32.mrb[0].mxu0
        %v809 = vpop.f32.mrb[0].mxu0
        %v810 = vadd.f32 0.0, %v809
        %v811 = vpop.f32.mrb[0].mxu0
        %812 = vmatprep.mubr.bf16.mxu0 0
        %813 = vmatmul.mubr.bf16.gmra.mrb[0].mxu0 %v764
        %v814 = vpop.f32.mrb[0].mxu0
        %v815 = vadd.f32 0.0, %v814
        %v816 = vpop.f32.mrb[0].mxu0
        %v817 = vpop.f32.mrb[0].mxu0
        %v818 = vadd.f32 0.0, %v817
        %v819 = vpop.f32.mrb[0].mxu0
        %820 = vmatprep.mubr.bf16.mxu0 0
        %821 = vmatmul.mubr.bf16.gmra.mrb[0].mxu0 %v767
        %v822 = vpop.f32.mrb[0].mxu0
        %v823 = vadd.f32 0.0, %v822
        %v824 = vpop.f32.mrb[0].mxu0
        %v825 = vpop.f32.mrb[0].mxu0
        %v826 = vpop.f32.mrb[0].mxu0
        %827 = vdwg.mxu0
        %v828 = vadd.f32 %v722, %v807
        %v829 = vadd.f32 %v723, %v810
        %v830 = vadd.f32 %v724, %v815
        %v831 = vadd.f32 %v725, %v818
        %v832 = vadd.f32 %v726, %v823
        %v833 = vld [vmem:[#allocation2 + $0x4] sm:$0xc]
        %s834 = scalar_lea.vmem [#allocation6], 10
        %v835 = vld [vmem:[%s834] sm:$0x3]
        %v837 = vunpack.c.l.b16 %v833
        %v838 = vpack.c.b16 %v641, %v837
        %vm839 = vcmask 1045504
        %v840 = vrot.slane %v838, 2
        %v841 = vrot.slane %v647, 2
        %v842 = vsel %vm839, %v840, %v841
        %v843 = vrot.slane %v732, 2
        %v844 = vsel %vm839, %v841, %v843
        %v846 = vsel %vm404, %v842, 0
        %v849 = vsel %vm404, %v844, 0
        %v852 = vsel %vm404, %v843, 0
        %v855 = vsel %vm414, %v835, 0
        %857 = vmatprep.subr.bf16.mxu0 0
        %858 = vmatpush1.bf16.msra.mxu0 %v855
        %859 = vmatprep.subr.bf16.mxu0 0
        %860 = vmatpush1.bf16.msra.mxu0 0
        %861 = vmatprep.subr.bf16.mxu0 0
        %862 = vmatpush1.bf16.msra.mxu0 0
        %863 = vmatprep.subr.bf16.mxu0 0
        %864 = vmatpush1.bf16.msra.mxu0 0
        %865 = vmatprep.subr.bf16.mxu0 0
        %866 = vmatpush1.bf16.msra.mxu0 0
        %867 = vmatprep.subr.bf16.mxu0 0
        %868 = vmatpush1.bf16.msra.mxu0 0
        %869 = vmatprep.subr.bf16.mxu0 0
        %870 = vmatpush1.bf16.msra.mxu0 0
        %871 = vmatprep.subr.bf16.mxu0 0
        %872 = vmatpush1.bf16.msra.mxu0 0
        %873 = vmatprep.subr.bf16.mxu0 0
        %874 = vmatpush1.bf16.msra.mxu0 0
        %875 = vmatprep.subr.bf16.mxu0 0
        %876 = vmatpush1.bf16.msra.mxu0 0
        %877 = vmatprep.subr.bf16.mxu0 0
        %878 = vmatpush1.bf16.msra.mxu0 0
        %879 = vmatprep.subr.bf16.mxu0 0
        %880 = vmatpush1.bf16.msra.mxu0 0
        %881 = vmatprep.subr.bf16.mxu0 0
        %882 = vmatpush1.bf16.msra.mxu0 0
        %883 = vmatprep.subr.bf16.mxu0 0
        %884 = vmatpush1.bf16.msra.mxu0 0
        %885 = vmatprep.subr.bf16.mxu0 0
        %886 = vmatpush1.bf16.msra.mxu0 0
        %887 = vmatprep.subr.bf16.mxu0 0
        %888 = vmatpush1.bf16.msra.mxu0 0
        %889 = vmatprep.mubr.bf16.mxu0 0
        %890 = vmatmul.mubr.bf16.gmra.mrb[0].mxu0 %v846
        %v891 = vpop.f32.mrb[0].mxu0
        %v892 = vadd.f32 0.0, %v891
        %v893 = vpop.f32.mrb[0].mxu0
        %v894 = vpop.f32.mrb[0].mxu0
        %v895 = vadd.f32 0.0, %v894
        %v896 = vpop.f32.mrb[0].mxu0
        %897 = vmatprep.mubr.bf16.mxu0 0
        %898 = vmatmul.mubr.bf16.gmra.mrb[0].mxu0 %v849
        %v899 = vpop.f32.mrb[0].mxu0
        %v900 = vadd.f32 0.0, %v899
        %v901 = vpop.f32.mrb[0].mxu0
        %v902 = vpop.f32.mrb[0].mxu0
        %v903 = vadd.f32 0.0, %v902
        %v904 = vpop.f32.mrb[0].mxu0
        %905 = vmatprep.mubr.bf16.mxu0 0
        %906 = vmatmul.mubr.bf16.gmra.mrb[0].mxu0 %v852
        %v907 = vpop.f32.mrb[0].mxu0
        %v908 = vadd.f32 0.0, %v907
        %v909 = vpop.f32.mrb[0].mxu0
        %v910 = vpop.f32.mrb[0].mxu0
        %v911 = vpop.f32.mrb[0].mxu0
        %912 = vdwg.mxu0
        %v913 = vadd.f32 %v828, %v892
        %v914 = vadd.f32 %v829, %v895
        %v915 = vadd.f32 %v830, %v900
        %v916 = vadd.f32 %v831, %v903
        %v917 = vadd.f32 %v832, %v908
        %v918 = vld [vmem:[#allocation2 + $0x8] sm:$0xc]
        %v919 = vld [vmem:[#allocation2 + $0xc] sm:$0xf]
        %v920 = vld [vmem:[#allocation2 + $0x10] sm:$0xf]
        %v921 = vld [vmem:[#allocation2 + $0x14] sm:$0xf]
        %v922 = vld [vmem:[#allocation2 + $0x18] sm:$0xf]
        %v923 = vld [vmem:[#allocation2 + $0x1c] sm:$0x3]
        %s924 = scalar_lea.vmem [#allocation6], 12
        %v925 = vld [vmem:[%s924] sm:$0x3]
        %v932 = vunpack.c.l.b16 %v918
        %v933 = vunpack.c.l.b16 %v919
        %v934 = vunpack.c.l.b16 %v920
        %v935 = vunpack.c.l.b16 %v921
        %v936 = vunpack.c.l.b16 %v922
        %v937 = vunpack.c.l.b16 %v923
        %v938 = vpack.c.b16 %v933, %v932
        %v939 = vpack.c.b16 %v935, %v934
        %v940 = vpack.c.b16 %v937, %v936
        %v941 = vrot.slane %v938, 2
        %v942 = vrot.slane %v939, 2
        %v943 = vsel %vm839, %v941, %v942
        %v944 = vrot.slane %v940, 2
        %v945 = vsel %vm839, %v942, %v944
        %v947 = vsel %vm404, %v943, 0
        %v950 = vsel %vm404, %v945, 0
        %v953 = vsel %vm404, %v944, 0
        %v956 = vsel %vm414, %v925, 0
        %958 = vmatprep.subr.bf16.mxu0 0
        %959 = vmatpush1.bf16.msra.mxu0 %v956
        %960 = vmatprep.subr.bf16.mxu0 0
        %961 = vmatpush1.bf16.msra.mxu0 0
        %962 = vmatprep.subr.bf16.mxu0 0
        %963 = vmatpush1.bf16.msra.mxu0 0
        %964 = vmatprep.subr.bf16.mxu0 0
        %965 = vmatpush1.bf16.msra.mxu0 0
        %966 = vmatprep.subr.bf16.mxu0 0
        %967 = vmatpush1.bf16.msra.mxu0 0
        %968 = vmatprep.subr.bf16.mxu0 0
        %969 = vmatpush1.bf16.msra.mxu0 0
        %970 = vmatprep.subr.bf16.mxu0 0
        %971 = vmatpush1.bf16.msra.mxu0 0
        %972 = vmatprep.subr.bf16.mxu0 0
        %973 = vmatpush1.bf16.msra.mxu0 0
        %974 = vmatprep.subr.bf16.mxu0 0
        %975 = vmatpush1.bf16.msra.mxu0 0
        %976 = vmatprep.subr.bf16.mxu0 0
        %977 = vmatpush1.bf16.msra.mxu0 0
        %978 = vmatprep.subr.bf16.mxu0 0
        %979 = vmatpush1.bf16.msra.mxu0 0
        %980 = vmatprep.subr.bf16.mxu0 0
        %981 = vmatpush1.bf16.msra.mxu0 0
        %982 = vmatprep.subr.bf16.mxu0 0
        %983 = vmatpush1.bf16.msra.mxu0 0
        %984 = vmatprep.subr.bf16.mxu0 0
        %985 = vmatpush1.bf16.msra.mxu0 0
        %986 = vmatprep.subr.bf16.mxu0 0
        %987 = vmatpush1.bf16.msra.mxu0 0
        %988 = vmatprep.subr.bf16.mxu0 0
        %989 = vmatpush1.bf16.msra.mxu0 0
        %990 = vmatprep.mubr.bf16.mxu0 0
        %991 = vmatmul.mubr.bf16.gmra.mrb[0].mxu0 %v947
        %v992 = vpop.f32.mrb[0].mxu0
        %v993 = vadd.f32 0.0, %v992
        %v994 = vpop.f32.mrb[0].mxu0
        %v995 = vpop.f32.mrb[0].mxu0
        %v996 = vadd.f32 0.0, %v995
        %v997 = vpop.f32.mrb[0].mxu0
        %998 = vmatprep.mubr.bf16.mxu0 0
        %999 = vmatmul.mubr.bf16.gmra.mrb[0].mxu0 %v950
        %v1000 = vpop.f32.mrb[0].mxu0
        %v1001 = vadd.f32 0.0, %v1000
        %v1002 = vpop.f32.mrb[0].mxu0
        %v1003 = vpop.f32.mrb[0].mxu0
        %v1004 = vadd.f32 0.0, %v1003
        %v1005 = vpop.f32.mrb[0].mxu0
        %1006 = vmatprep.mubr.bf16.mxu0 0
        %1007 = vmatmul.mubr.bf16.gmra.mrb[0].mxu0 %v953
        %v1008 = vpop.f32.mrb[0].mxu0
        %v1009 = vadd.f32 0.0, %v1008
        %v1010 = vpop.f32.mrb[0].mxu0
        %v1011 = vpop.f32.mrb[0].mxu0
        %v1012 = vpop.f32.mrb[0].mxu0
        %1013 = vdwg.mxu0
        %v1014 = vadd.f32 %v913, %v993
        %v1015 = vadd.f32 %v914, %v996
        %v1016 = vadd.f32 %v915, %v1001
        %v1017 = vadd.f32 %v916, %v1004
        %v1018 = vadd.f32 %v917, %v1009
        %v1019 = vld [vmem:[#allocation2 + $0x1c] sm:$0x7]
        %s1020 = scalar_lea.vmem [#allocation6], 14
        %v1021 = vld [vmem:[%s1020] sm:$0x3]
        %v1023 = vunpack.c.l.b16 %v1019
        %v1024 = vpack.c.b16 %v1023, %v936
        %vm1025 = vsmask.f32 5376
        %v1027 = vshrl.u32 %v938, 16
        %v1029 = vrot.slane %v1027, 2
        %v1030 = vshll.u32 %v938, 16
        %v1032 = vrot.slane %v1030, 3
        %v1033 = vor.u32 %v1029, %v1032
        %v1035 = vshrl.u32 %v939, 16
        %v1037 = vrot.slane %v1035, 2
        %v1038 = vshll.u32 %v939, 16
        %v1040 = vrot.slane %v1038, 3
        %v1041 = vor.u32 %v1037, %v1040
        %v1042 = vsel %vm1025, %v1033, %v1041
        %v1044 = vshrl.u32 %v1024, 16
        %v1046 = vrot.slane %v1044, 2
        %v1047 = vshll.u32 %v1024, 16
        %v1049 = vrot.slane %v1047, 3
        %v1050 = vor.u32 %v1046, %v1049
        %v1051 = vsel %vm1025, %v1041, %v1050
        %v1053 = vsel %vm404, %v1042, 0
        %v1056 = vsel %vm404, %v1051, 0
        %v1059 = vsel %vm404, %v1050, 0
        %v1062 = vsel %vm414, %v1021, 0
        %1064 = vmatprep.subr.bf16.mxu0 0
        %1065 = vmatpush1.bf16.msra.mxu0 %v1062
        %1066 = vmatprep.subr.bf16.mxu0 0
        %1067 = vmatpush1.bf16.msra.mxu0 0
        %1068 = vmatprep.subr.bf16.mxu0 0
        %1069 = vmatpush1.bf16.msra.mxu0 0
        %1070 = vmatprep.subr.bf16.mxu0 0
        %1071 = vmatpush1.bf16.msra.mxu0 0
        %1072 = vmatprep.subr.bf16.mxu0 0
        %1073 = vmatpush1.bf16.msra.mxu0 0
        %1074 = vmatprep.subr.bf16.mxu0 0
        %1075 = vmatpush1.bf16.msra.mxu0 0
        %1076 = vmatprep.subr.bf16.mxu0 0
        %1077 = vmatpush1.bf16.msra.mxu0 0
        %1078 = vmatprep.subr.bf16.mxu0 0
        %1079 = vmatpush1.bf16.msra.mxu0 0
        %1080 = vmatprep.subr.bf16.mxu0 0
        %1081 = vmatpush1.bf16.msra.mxu0 0
        %1082 = vmatprep.subr.bf16.mxu0 0
        %1083 = vmatpush1.bf16.msra.mxu0 0
        %1084 = vmatprep.subr.bf16.mxu0 0
        %1085 = vmatpush1.bf16.msra.mxu0 0
        %1086 = vmatprep.subr.bf16.mxu0 0
        %1087 = vmatpush1.bf16.msra.mxu0 0
        %1088 = vmatprep.subr.bf16.mxu0 0
        %1089 = vmatpush1.bf16.msra.mxu0 0
        %1090 = vmatprep.subr.bf16.mxu0 0
        %1091 = vmatpush1.bf16.msra.mxu0 0
        %1092 = vmatprep.subr.bf16.mxu0 0
        %1093 = vmatpush1.bf16.msra.mxu0 0
        %1094 = vmatprep.subr.bf16.mxu0 0
        %1095 = vmatpush1.bf16.msra.mxu0 0
        %1096 = vmatprep.mubr.bf16.mxu0 0
        %1097 = vmatmul.mubr.bf16.gmra.mrb[0].mxu0 %v1053
        %v1098 = vpop.f32.mrb[0].mxu0
        %v1099 = vadd.f32 0.0, %v1098
        %v1100 = vpop.f32.mrb[0].mxu0
        %v1101 = vpop.f32.mrb[0].mxu0
        %v1102 = vadd.f32 0.0, %v1101
        %v1103 = vpop.f32.mrb[0].mxu0
        %1104 = vmatprep.mubr.bf16.mxu0 0
        %1105 = vmatmul.mubr.bf16.gmra.mrb[0].mxu0 %v1056
        %v1106 = vpop.f32.mrb[0].mxu0
        %v1107 = vadd.f32 0.0, %v1106
        %v1108 = vpop.f32.mrb[0].mxu0
        %v1109 = vpop.f32.mrb[0].mxu0
        %v1110 = vadd.f32 0.0, %v1109
        %v1111 = vpop.f32.mrb[0].mxu0
        %1112 = vmatprep.mubr.bf16.mxu0 0
        %1113 = vmatmul.mubr.bf16.gmra.mrb[0].mxu0 %v1059
        %v1114 = vpop.f32.mrb[0].mxu0
        %v1115 = vadd.f32 0.0, %v1114
        %v1116 = vpop.f32.mrb[0].mxu0
        %v1117 = vpop.f32.mrb[0].mxu0
        %v1118 = vpop.f32.mrb[0].mxu0
        %1119 = vdwg.mxu0
        %v1120 = vadd.f32 %v1014, %v1099
        %v1121 = vadd.f32 %v1015, %v1102
        %v1122 = vadd.f32 %v1016, %v1107
        %v1123 = vadd.f32 %v1017, %v1110
        %v1124 = vadd.f32 %v1018, %v1115
        %v1125 = vld [vmem:[#allocation2 + $0x8] sm:$0x8]
        %s1126 = scalar_lea.vmem [#allocation6], 16
        %v1127 = vld [vmem:[%s1126] sm:$0x3]
        %v1129 = vunpack.c.l.b16 %v1125
        %v1130 = vpack.c.b16 %v933, %v1129
        %vm1131 = vcmask 1044480
        %v1132 = vrot.slane %v1130, 3
        %v1133 = vrot.slane %v939, 3
        %v1134 = vsel %vm1131, %v1132, %v1133
        %v1135 = vrot.slane %v1024, 3
        %v1136 = vsel %vm1131, %v1133, %v1135
        %v1138 = vsel %vm404, %v1134, 0
        %v1141 = vsel %vm404, %v1136, 0
        %v1144 = vsel %vm404, %v1135, 0
        %v1147 = vsel %vm414, %v1127, 0
        %1149 = vmatprep.subr.bf16.mxu0 0
        %1150 = vmatpush1.bf16.msra.mxu0 %v1147
        %1151 = vmatprep.subr.bf16.mxu0 0
        %1152 = vmatpush1.bf16.msra.mxu0 0
        %1153 = vmatprep.subr.bf16.mxu0 0
        %1154 = vmatpush1.bf16.msra.mxu0 0
        %1155 = vmatprep.subr.bf16.mxu0 0
        %1156 = vmatpush1.bf16.msra.mxu0 0
        %1157 = vmatprep.subr.bf16.mxu0 0
        %1158 = vmatpush1.bf16.msra.mxu0 0
        %1159 = vmatprep.subr.bf16.mxu0 0
        %1160 = vmatpush1.bf16.msra.mxu0 0
        %1161 = vmatprep.subr.bf16.mxu0 0
        %1162 = vmatpush1.bf16.msra.mxu0 0
        %1163 = vmatprep.subr.bf16.mxu0 0
        %1164 = vmatpush1.bf16.msra.mxu0 0
        %1165 = vmatprep.subr.bf16.mxu0 0
        %1166 = vmatpush1.bf16.msra.mxu0 0
        %1167 = vmatprep.subr.bf16.mxu0 0
        %1168 = vmatpush1.bf16.msra.mxu0 0
        %1169 = vmatprep.subr.bf16.mxu0 0
        %1170 = vmatpush1.bf16.msra.mxu0 0
        %1171 = vmatprep.subr.bf16.mxu0 0
        %1172 = vmatpush1.bf16.msra.mxu0 0
        %1173 = vmatprep.subr.bf16.mxu0 0
        %1174 = vmatpush1.bf16.msra.mxu0 0
        %1175 = vmatprep.subr.bf16.mxu0 0
        %1176 = vmatpush1.bf16.msra.mxu0 0
        %1177 = vmatprep.subr.bf16.mxu0 0
        %1178 = vmatpush1.bf16.msra.mxu0 0
        %1179 = vmatprep.subr.bf16.mxu0 0
        %1180 = vmatpush1.bf16.msra.mxu0 0
        %1181 = vmatprep.mubr.bf16.mxu0 0
        %1182 = vmatmul.mubr.bf16.gmra.mrb[0].mxu0 %v1138
        %v1183 = vpop.f32.mrb[0].mxu0
        %v1184 = vadd.f32 0.0, %v1183
        %v1185 = vpop.f32.mrb[0].mxu0
        %v1186 = vpop.f32.mrb[0].mxu0
        %v1187 = vadd.f32 0.0, %v1186
        %v1188 = vpop.f32.mrb[0].mxu0
        %1189 = vmatprep.mubr.bf16.mxu0 0
        %1190 = vmatmul.mubr.bf16.gmra.mrb[0].mxu0 %v1141
        %v1191 = vpop.f32.mrb[0].mxu0
        %v1192 = vadd.f32 0.0, %v1191
        %v1193 = vpop.f32.mrb[0].mxu0
        %v1194 = vpop.f32.mrb[0].mxu0
        %v1195 = vadd.f32 0.0, %v1194
        %v1196 = vpop.f32.mrb[0].mxu0
        %1197 = vmatprep.mubr.bf16.mxu0 0
        %1198 = vmatmul.mubr.bf16.gmra.mrb[0].mxu0 %v1144
        %v1199 = vpop.f32.mrb[0].mxu0
        %v1200 = vadd.f32 0.0, %v1199
        %v1201 = vpop.f32.mrb[0].mxu0
        %v1202 = vpop.f32.mrb[0].mxu0
        %v1203 = vpop.f32.mrb[0].mxu0
        %1204 = vdwg.mxu0
        %v1205 = vadd.f32 %v1120, %v1184
        %v1206 = vadd.f32 %v1121, %v1187
        %v1207 = vadd.f32 %v1122, %v1192
        %v1208 = vadd.f32 %v1123, %v1195
        %v1209 = vadd.f32 %v1124, %v1200
        %1210 = vst [vmem:[%s281] sm:$0xff] %v1205
        %1211 = vst [vmem:[%s281 + $0x8] sm:$0xff] %v1206
        %1212 = vst [vmem:[%s281 + $0x10] sm:$0xff] %v1207
        %1213 = vst [vmem:[%s281 + $0x18] sm:$0xff] %v1208
        %1214 = vst [vmem:[%s281 + $0x20] sm:$0xff] %v1209
        %v1215 = vld [vmem:[#allocation8] sm:$0xff]
        %v1216 = vld [vmem:[#allocation8 + $0x8] sm:$0xff]
        %v1217 = vld [vmem:[#allocation8 + $0x10] sm:$0xff]
        %v1218 = vld [vmem:[#allocation8 + $0x18] sm:$0xff]
        %v1219 = vld [vmem:[#allocation8 + $0x20] sm:$0xff]
        %p1220 = scmp.eq.s32.totalorder %s29, 0
        %p1221 = scmp.eq.s32.totalorder %s30, 0
        %p1222 = pnand %p1220, %p1221
        %p1223 = pneg %p1222
        // Predicated region
        $region45: #{downsample_forward.3} parent=31 // pred_check
          _
        $region46: #{downsample_forward.3} parent=31 // pred_check_branch
          %1225 = sbr.rel (%p1222) target = $region48
        $region47: #{downsample_forward.3} parent=31 // pred_region
          %1226 = vst [vmem:[#allocation10] sm:$0x1] 0.0
          %1227 = vst [vmem:[#allocation12] sm:$0x1] 0.0
        $region48: #{downsample_forward.3} parent=31 // pred_fallthru
          _
        %1229 = vset.pattern.permute.xlu0 0
        %1230 = vperm.xlu0 %1229, %v1215
        %v1231 = vpop.permute.xlu0 %1230
        %1234 = vset.pattern.permute.xlu0 0
        %1235 = vperm.xlu0 %1234, %v1216
        %v1236 = vpop.permute.xlu0 %1235
        %1239 = vset.pattern.permute.xlu0 0
        %1240 = vperm.xlu0 %1239, %v1217
        %v1241 = vpop.permute.xlu0 %1240
        %1244 = vset.pattern.permute.xlu0 0
        %1245 = vperm.xlu0 %1244, %v1218
        %v1246 = vpop.permute.xlu0 %1245
        %1249 = vset.pattern.permute.xlu0 0
        %1250 = vperm.xlu0 %1249, %v1219
        %v1251 = vpop.permute.xlu0 %1250
        %v1253 = vmul.f32 %v1205, %v1231
        %v1254 = vmul.f32 %v1206, %v1236
        %v1255 = vmul.f32 %v1207, %v1241
        %v1256 = vmul.f32 %v1208, %v1246
        %v1257 = vmul.f32 %v1209, %v1251
        %v1258 = vld [vmem:[#allocation10] sm:$0x1]
        %v1259 = vadd.f32 %v1253, %v1254
        %v1260 = vadd.f32 %v1259, %v1255
        %v1261 = vadd.f32 %v1260, %v1256
        %v1262 = vadd.f32 %v1261, %v1257
        %v1263 = vrot.slane %v1262, 4
        %v1264 = vadd.f32 %v1262, %v1263
        %v1265 = vrot.slane %v1264, 2
        %v1266 = vadd.f32 %v1264, %v1265
        %v1267 = vrot.slane %v1266, 1
        %v1268 = vadd.f32 %v1266, %v1267
        %v1269 = vadd.f32 %v1258, %v1268
        %1270 = vst [vmem:[#allocation10] sm:$0x1] %v1269
        %v1271 = vld [vmem:[#allocation12] sm:$0x1]
        %v1272 = vmul.f32 %v1253, %v1205
        %v1273 = vmul.f32 %v1254, %v1206
        %v1274 = vmul.f32 %v1255, %v1207
        %v1275 = vmul.f32 %v1256, %v1208
        %v1276 = vmul.f32 %v1257, %v1209
        %v1277 = vadd.f32 %v1272, %v1273
        %v1278 = vadd.f32 %v1277, %v1274
        %v1279 = vadd.f32 %v1278, %v1275
        %v1280 = vadd.f32 %v1279, %v1276
        %v1281 = vrot.slane %v1280, 4
        %v1282 = vadd.f32 %v1280, %v1281
        %v1283 = vrot.slane %v1282, 2
        %v1284 = vadd.f32 %v1282, %v1283
        %v1285 = vrot.slane %v1284, 1
        %v1286 = vadd.f32 %v1284, %v1285
        %v1287 = vadd.f32 %v1271, %v1286
        %1288 = vst [vmem:[#allocation12] sm:$0x1] %v1287
        %s1289 = sand.u32 %s117, 1
        %s1290 = scalar_lea.sflag [#allocation5], %s1289
        %s1291 = sand.u32 %s117, 1
        %s1292 = smul.addr %s1291, 40
        %s1293 = scalar_lea.vmem [#allocation9], %s1292
        // Predicated region
        $region49: #{downsample_forward.3} parent=31 // pred_check
          %p1294 = pneg %p127
        $region50: #{downsample_forward.3} parent=31 // pred_check_branch
          %1296 = sbr.rel (%p1294) target = $region52
        $region51: #{downsample_forward.3} parent=31 // pred_region
          %s1298 = ssub.s32 640, 640
          %1299 = vsyncadd %s1290, %s1298
          %s1300 = smul.addr %s30, 5
          %s1301 = smul.addr %s29, 10
          %s1302 = sadd.s32 %s1300, %s1301
          %s1303 = smul.addr %s1302, 128
          %s1304 = scalar_lea.hbm %s3, %s1303
          %s1305 = sshll.u32 %s1293, 4
          %s1306 = int_to_ptr.vmem [resolvable:$true] %s1305
          %1311 = dma.vmem_to_hbm [thread:$0]  %s1306, 640, %s1304, %s1290, 128, 128, 8
        $region52: #{downsample_forward.3} parent=31 // pred_fallthru
          _
        // Predicated region
        $region53: #{downsample_forward.3} parent=31 // pred_check
          %p1312 = pneg %p148
        $region54: #{downsample_forward.3} parent=31 // pred_check_branch
          %1314 = sbr.rel (%p1312) target = $region56
        $region55: #{downsample_forward.3} parent=31 // pred_region
          %s1316 = ssub.s32 16, 16
          %1317 = vsyncadd [#allocation11], %s1316
          %s1319 = sshll.u32 [#allocation10], 4
          %s1320 = int_to_ptr.vmem [resolvable:$true] %s1319
          %1322 = dma.vmem_to_hbm [thread:$0]  %s1320, 16, %s4, [#allocation11]
        $region56: #{downsample_forward.3} parent=31 // pred_fallthru
          _
        // Predicated region
        $region57: #{downsample_forward.3} parent=31 // pred_check
          %p1323 = pneg %p169
        $region58: #{downsample_forward.3} parent=31 // pred_check_branch
          %1325 = sbr.rel (%p1323) target = $region60
        $region59: #{downsample_forward.3} parent=31 // pred_region
          %s1327 = ssub.s32 16, 16
          %1328 = vsyncadd [#allocation11], %s1327
          %s1330 = sshll.u32 [#allocation12], 4
          %s1331 = int_to_ptr.vmem [resolvable:$true] %s1330
          %1333 = dma.vmem_to_hbm [thread:$0]  %s1331, 16, %s5, [#allocation11]
        $region60: #{downsample_forward.3} parent=31 // pred_fallthru
          _
        // Predicated region
        $region61: #{downsample_forward.3} parent=31 // pred_check
          %p1334 = pneg %p148
        $region62: #{downsample_forward.3} parent=31 // pred_check_branch
          %1336 = sbr.rel (%p1334) target = $region64
        $region63: #{downsample_forward.3} parent=31 // pred_region
          %1337 = dma.done [#allocation11], 16
        $region64: #{downsample_forward.3} parent=31 // pred_fallthru
          _
        // Predicated region
        $region65: #{downsample_forward.3} parent=31 // pred_check
          %p1338 = pneg %p169
        $region66: #{downsample_forward.3} parent=31 // pred_check_branch
          %1340 = sbr.rel (%p1338) target = $region68
        $region67: #{downsample_forward.3} parent=31 // pred_region
          %1341 = dma.done [#allocation11], 16
        $region68: #{downsample_forward.3} parent=31 // pred_fallthru
          _
      $region32: #{downsample_forward.3} parent=5 // pred_fallthru
        _
      %p1342 = scmp.le.s32.totalorder 2, %s20
      // Predicated region
      $region69: #{downsample_forward.3} parent=5 // pred_check
        %p1343 = pneg %p1342
      $region70: #{downsample_forward.3} parent=5 // pred_check_branch
        %1345 = sbr.rel (%p1343) target = $region72
      $region71: #{downsample_forward.3} parent=5 // pred_region
        %s1346 = ssub.s32 %s20, 2
        // Predicated region
        $region73: #{downsample_forward.3} parent=71 // pred_check
          %p1347 = pneg %p133
        $region74: #{downsample_forward.3} parent=71 // pred_check_branch
          %1349 = sbr.rel (%p1347) target = $region76
        $region75: #{downsample_forward.3} parent=71 // pred_region
          %s1350 = sand.u32 %s118, 1
          %s1351 = scalar_lea.sflag [#allocation5], %s1350
          %s1352 = sand.u32 %s118, 1
          %s1353 = smul.addr %s1352, 40
          %s1354 = scalar_lea.vmem [#allocation9], %s1353
          %1355 = dma.done %s1351, 640
        $region76: #{downsample_forward.3} parent=71 // pred_fallthru
          _
      $region72: #{downsample_forward.3} parent=5 // pred_fallthru
        _
    $region6: #{downsample_forward.3} parent=1 // loop_footer
      %s24 = sadd.s32 1, %s20
    $region7: #{downsample_forward.3} parent=1 // loop_footer_branch
      %19 = sbr.rel target = $region3
    $region8: #{downsample_forward.3} parent=1 // loop_exit
      _
    %1356 = vsyncpa [#allocation4], 1
    %s1357 = scalar_lea.sflag [#allocation4], 1
    %1358 = vsyncpa %s1357, 1
    %1359 = vsyncpa [#allocation7], 1
    %1360 = vsyncpa [#allocation5], 1
    %s1361 = scalar_lea.sflag [#allocation5], 1
    %1362 = vsyncpa %s1361, 1
    %1363 = vsyncpa [#allocation11], 1

// kernel: downsample_forward.4
$region0: #{downsample_forward.4}
  #allocation0 [shape = 'u32[]', space=smem, size = 0x4, offset = 0x4, fixed_abs, tag = 'smem constant byte address 0x4 - core index']
  #allocation1 [shape = 'u32[144,128]{1,0:T(1,128)}', space=vmem, size = 0x12000, scoped, tag = 'internal scratch']
  #allocation2 [shape = 'bf16[62,128]{1,0:T(8,128)(2,1)}', space=vmem, size = 0x4000, scoped, tag = 'scratch operand']
  %s0 = inlined_call_operand.hbm [shape: f32[2,2,62,128], index: 0, kind: input, shape index: {}]
  %s1 = inlined_call_operand.hbm [shape: bf16[9,128,128], index: 1, kind: input, shape index: {}]
  %s2 = inlined_call_operand.hbm [shape: f32[1,128], index: 2, kind: input, shape index: {}]
  %s3 = inlined_call_operand.hbm [shape: f32[1,128], index: 3, kind: input, shape index: {}]
  %s4 = inlined_call_operand.hbm [shape: f32[2,62,1], index: 4, kind: input, shape index: {}]
  %s5 = inlined_call_operand.hbm [shape: f32[40,1], index: 5, kind: input, shape index: {}]
  %s6 = inlined_call_operand.hbm [shape: f32[2,2,40,128], index: 6, kind: output, shape index: {0}]
  %s7 = inlined_call_operand.hbm [shape: f32[1,128], index: 7, kind: output, shape index: {1}]
  %s8 = inlined_call_operand.hbm [shape: f32[1,128], index: 8, kind: output, shape index: {2}]
  %9 = xla_tuple %s6, %s7, %s8
  %s10 = sld [smem:[#allocation0]]
  $region101: #{downsample_forward.4} parent=0
    _
  %s12 = ssub.s32 1, %s10
  %s13 = scalar_select 0, %s12, %s10
  $region1: #{downsample_forward.4} parent=0
    #allocation3 [shape = 'u8[65536]{0}', space=vmem, size = 0x10000, scoped, tag = 'input window, operand 0']
    #allocation4 [shape = 's32[2]{0}', space=sflag, size = 0x8, scoped, tag = 'scoped memory for downsample_forward.4']
    #allocation5 [shape = 's32[2]{0}', space=sflag, size = 0x8, scoped, tag = 'scoped memory for downsample_forward.4']
    #allocation6 [shape = 'u8[294912]{0}', space=vmem, size = 0x48000, scoped, tag = 'input window, operand 1, single buffered']
    #allocation7 [shape = 's32[1]{0}', space=sflag, size = 0x4, scoped, tag = 'scoped memory for downsample_forward.4']
    #allocation8 [shape = 'u8[512]{0}', space=vmem, size = 0x400, scoped, tag = 'input window, operand 2, single buffered']
    #allocation9 [shape = 'u8[512]{0}', space=vmem, size = 0x400, scoped, tag = 'input window, operand 3, single buffered']
    #allocation10 [shape = 's32[1]{0}', space=sflag, size = 0x4, scoped, tag = 'scoped memory for downsample_forward.4']
    #allocation11 [shape = 'u8[65536]{0}', space=vmem, size = 0x10000, scoped, tag = 'input window, operand 4']
    #allocation12 [shape = 'u8[20480]{0}', space=vmem, size = 0x5000, scoped, tag = 'input window, operand 5, single buffered']
    #allocation13 [shape = 'u8[40960]{0}', space=vmem, size = 0xa000, scoped, tag = 'output window, operand 0']
    #allocation14 [shape = 'u8[512]{0}', space=vmem, size = 0x400, scoped, tag = 'output window, operand 1, single buffered']
    #allocation15 [shape = 's32[1]{0}', space=sflag, size = 0x4, scoped, tag = 'scoped memory for downsample_forward.4']
    #allocation16 [shape = 'u8[512]{0}', space=vmem, size = 0x400, scoped, tag = 'output window, operand 2, single buffered']
    %14 = vsyncpa [#allocation4], 0
    %s15 = scalar_lea.sflag [#allocation4], 1
    %16 = vsyncpa %s15, 0
    %17 = vsyncpa [#allocation7], 0
    %18 = vsyncpa [#allocation10], 0
    %19 = vsyncpa [#allocation5], 0
    %s20 = scalar_lea.sflag [#allocation5], 1
    %21 = vsyncpa %s20, 0
    %22 = vsyncpa [#allocation15], 0
    loop: start=0, step=1, limit=6
    $region2: #{downsample_forward.4} parent=1 // loop_pre_header
      _
    $region3: #{downsample_forward.4} parent=1 // loop_header
      %s24 = sphi 0, %s28
      %p25 = scmp.ge.s32.totalorder %s24, 6
      %s31 = sphi 0, %s43
      %s32 = sphi 0, %s39
      %s33 = sphi 0, %s31
      %s34 = sphi 0, %s32
      %s35 = sphi 0, %s33
      %s36 = sphi 0, %s34
      %s48 = sphi 0, %s50
      %s51 = sphi 0, %s48
      %s52 = sphi 0, %s51
      %s68 = sphi 0, %s52
      %s72 = sphi 0, %s72
      %s74 = sphi 0, %s72
      %s75 = sphi 0, %s74
      %s89 = sphi 0, %s75
      %s93 = sphi 0, %s93
      %s95 = sphi 0, %s93
      %s96 = sphi 0, %s95
      %s110 = sphi 0, %s96
      %s114 = sphi 0, %s114
      %s116 = sphi 0, %s114
      %s117 = sphi 0, %s116
      %s131 = sphi 0, %s117
      %s137 = sphi 0, %s139
      %s140 = sphi 0, %s137
      %s141 = sphi 0, %s140
      %s157 = sphi 0, %s141
      %s161 = sphi 0, %s161
      %s163 = sphi 0, %s161
      %s164 = sphi 0, %s163
      %s178 = sphi 0, %s164
      %s186 = sphi 0, %s188
      %s189 = sphi 0, %s186
      %s190 = sphi 0, %s189
      %s206 = sphi 0, %s190
      %s210 = sphi 0, %s210
      %s212 = sphi 0, %s210
      %s213 = sphi 0, %s212
      %s227 = sphi 0, %s213
      %s231 = sphi 0, %s231
      %s233 = sphi 0, %s231
      %s234 = sphi 0, %s233
      %s248 = sphi 0, %s234
    $region4: #{downsample_forward.4} parent=1 // loop_header_branch
      %27 = sbr.rel (%p25) target = $region8
    $region5: #{downsample_forward.4} parent=1 // loop_body
      %s29 = ssub.s32 %s24, 1
      %s30 = ssub.s32 %s24, 2
      %s37 = sadd.s32 1, %s32
      %p38 = scmp.ge.s32.totalorder %s37, 2
      %s39 = scalar_select %p38, 0, %s37
      %s40 = sadd.s32 1, %s31
      %s41 = scalar_select %p38, %s40, %s31
      %p42 = scmp.ge.s32.totalorder %s41, 2
      %s43 = scalar_select %p42, 0, %s41
      %s44 = ssub.s32 %s31, %s43
      %s45 = ssub.s32 %s32, %s39
      %s46 = sor.u32 %s44, %s45
      %p47 = scmp.eq.s32.totalorder %s46, 0
      %s49 = sadd.s32 %s48, 1
      %s50 = scalar_select %p47, %s48, %s49
      %p53 = pneg %p47
      %p54 = scmp.eq.s32.totalorder %s24, 3
      %p55 = por %p53, %p54
      %p56 = scmp.ne.s32.totalorder %s48, %s51
      %p57 = scmp.eq.s32.totalorder %s24, 0
      %p58 = por %p56, %p57
      %p59 = scmp.ne.s32.totalorder %s48, %s51
      %p60 = scmp.eq.s32.totalorder %s29, 3
      %p61 = por %p59, %p60
      %p62 = scmp.ne.s32.totalorder %s51, %s52
      %p63 = scmp.eq.s32.totalorder %s29, 0
      %p64 = por %p62, %p63
      %p65 = scmp.ne.s32.totalorder %s51, %s52
      %p66 = scmp.eq.s32.totalorder %s30, 3
      %p67 = por %p65, %p66
      %p69 = scmp.ne.s32.totalorder %s52, %s68
      %p70 = scmp.eq.s32.totalorder %s30, 0
      %p71 = por %p69, %p70
      %s73 = sadd.s32 %s72, 1
      %p76 = scmp.eq.s32.totalorder %s24, 3
      %p77 = scmp.ne.s32.totalorder %s72, %s74
      %p78 = scmp.eq.s32.totalorder %s24, 0
      %p79 = por %p77, %p78
      %p80 = scmp.ne.s32.totalorder %s72, %s74
      %p81 = scmp.eq.s32.totalorder %s29, 3
      %p82 = por %p80, %p81
      %p83 = scmp.ne.s32.totalorder %s74, %s75
      %p84 = scmp.eq.s32.totalorder %s29, 0
      %p85 = por %p83, %p84
      %p86 = scmp.ne.s32.totalorder %s74, %s75
      %p87 = scmp.eq.s32.totalorder %s30, 3
      %p88 = por %p86, %p87
      %p90 = scmp.ne.s32.totalorder %s75, %s89
      %p91 = scmp.eq.s32.totalorder %s30, 0
      %p92 = por %p90, %p91
      %s94 = sadd.s32 %s93, 1
      %p97 = scmp.eq.s32.totalorder %s24, 3
      %p98 = scmp.ne.s32.totalorder %s93, %s95
      %p99 = scmp.eq.s32.totalorder %s24, 0
      %p100 = por %p98, %p99
      %p101 = scmp.ne.s32.totalorder %s93, %s95
      %p102 = scmp.eq.s32.totalorder %s29, 3
      %p103 = por %p101, %p102
      %p104 = scmp.ne.s32.totalorder %s95, %s96
      %p105 = scmp.eq.s32.totalorder %s29, 0
      %p106 = por %p104, %p105
      %p107 = scmp.ne.s32.totalorder %s95, %s96
      %p108 = scmp.eq.s32.totalorder %s30, 3
      %p109 = por %p107, %p108
      %p111 = scmp.ne.s32.totalorder %s96, %s110
      %p112 = scmp.eq.s32.totalorder %s30, 0
      %p113 = por %p111, %p112
      %s115 = sadd.s32 %s114, 1
      %p118 = scmp.eq.s32.totalorder %s24, 3
      %p119 = scmp.ne.s32.totalorder %s114, %s116
      %p120 = scmp.eq.s32.totalorder %s24, 0
      %p121 = por %p119, %p120
      %p122 = scmp.ne.s32.totalorder %s114, %s116
      %p123 = scmp.eq.s32.totalorder %s29, 3
      %p124 = por %p122, %p123
      %p125 = scmp.ne.s32.totalorder %s116, %s117
      %p126 = scmp.eq.s32.totalorder %s29, 0
      %p127 = por %p125, %p126
      %p128 = scmp.ne.s32.totalorder %s116, %s117
      %p129 = scmp.eq.s32.totalorder %s30, 3
      %p130 = por %p128, %p129
      %p132 = scmp.ne.s32.totalorder %s117, %s131
      %p133 = scmp.eq.s32.totalorder %s30, 0
      %p134 = por %p132, %p133
      %s135 = ssub.s32 %s32, %s39
      %p136 = scmp.eq.s32.totalorder %s135, 0
      %s138 = sadd.s32 %s137, 1
      %s139 = scalar_select %p136, %s137, %s138
      %p142 = pneg %p136
      %p143 = scmp.eq.s32.totalorder %s24, 3
      %p144 = por %p142, %p143
      %p145 = scmp.ne.s32.totalorder %s137, %s140
      %p146 = scmp.eq.s32.totalorder %s24, 0
      %p147 = por %p145, %p146
      %p148 = scmp.ne.s32.totalorder %s137, %s140
      %p149 = scmp.eq.s32.totalorder %s29, 3
      %p150 = por %p148, %p149
      %p151 = scmp.ne.s32.totalorder %s140, %s141
      %p152 = scmp.eq.s32.totalorder %s29, 0
      %p153 = por %p151, %p152
      %p154 = scmp.ne.s32.totalorder %s140, %s141
      %p155 = scmp.eq.s32.totalorder %s30, 3
      %p156 = por %p154, %p155
      %p158 = scmp.ne.s32.totalorder %s141, %s157
      %p159 = scmp.eq.s32.totalorder %s30, 0
      %p160 = por %p158, %p159
      %s162 = sadd.s32 %s161, 1
      %p165 = scmp.eq.s32.totalorder %s24, 3
      %p166 = scmp.ne.s32.totalorder %s161, %s163
      %p167 = scmp.eq.s32.totalorder %s24, 0
      %p168 = por %p166, %p167
      %p169 = scmp.ne.s32.totalorder %s161, %s163
      %p170 = scmp.eq.s32.totalorder %s29, 3
      %p171 = por %p169, %p170
      %p172 = scmp.ne.s32.totalorder %s163, %s164
      %p173 = scmp.eq.s32.totalorder %s29, 0
      %p174 = por %p172, %p173
      %p175 = scmp.ne.s32.totalorder %s163, %s164
      %p176 = scmp.eq.s32.totalorder %s30, 3
      %p177 = por %p175, %p176
      %p179 = scmp.ne.s32.totalorder %s164, %s178
      %p180 = scmp.eq.s32.totalorder %s30, 0
      %p181 = por %p179, %p180
      %s182 = ssub.s32 %s31, %s43
      %s183 = ssub.s32 %s32, %s39
      %s184 = sor.u32 %s182, %s183
      %p185 = scmp.eq.s32.totalorder %s184, 0
      %s187 = sadd.s32 %s186, 1
      %s188 = scalar_select %p185, %s186, %s187
      %p191 = pneg %p185
      %p192 = scmp.eq.s32.totalorder %s24, 3
      %p193 = por %p191, %p192
      %p194 = scmp.ne.s32.totalorder %s186, %s189
      %p195 = scmp.eq.s32.totalorder %s24, 0
      %p196 = por %p194, %p195
      %p197 = scmp.ne.s32.totalorder %s186, %s189
      %p198 = scmp.eq.s32.totalorder %s29, 3
      %p199 = por %p197, %p198
      %p200 = scmp.ne.s32.totalorder %s189, %s190
      %p201 = scmp.eq.s32.totalorder %s29, 0
      %p202 = por %p200, %p201
      %p203 = scmp.ne.s32.totalorder %s189, %s190
      %p204 = scmp.eq.s32.totalorder %s30, 3
      %p205 = por %p203, %p204
      %p207 = scmp.ne.s32.totalorder %s190, %s206
      %p208 = scmp.eq.s32.totalorder %s30, 0
      %p209 = por %p207, %p208
      %s211 = sadd.s32 %s210, 1
      %p214 = scmp.eq.s32.totalorder %s24, 3
      %p215 = scmp.ne.s32.totalorder %s210, %s212
      %p216 = scmp.eq.s32.totalorder %s24, 0
      %p217 = por %p215, %p216
      %p218 = scmp.ne.s32.totalorder %s210, %s212
      %p219 = scmp.eq.s32.totalorder %s29, 3
      %p220 = por %p218, %p219
      %p221 = scmp.ne.s32.totalorder %s212, %s213
      %p222 = scmp.eq.s32.totalorder %s29, 0
      %p223 = por %p221, %p222
      %p224 = scmp.ne.s32.totalorder %s212, %s213
      %p225 = scmp.eq.s32.totalorder %s30, 3
      %p226 = por %p224, %p225
      %p228 = scmp.ne.s32.totalorder %s213, %s227
      %p229 = scmp.eq.s32.totalorder %s30, 0
      %p230 = por %p228, %p229
      %s232 = sadd.s32 %s231, 1
      %p235 = scmp.eq.s32.totalorder %s24, 3
      %p236 = scmp.ne.s32.totalorder %s231, %s233
      %p237 = scmp.eq.s32.totalorder %s24, 0
      %p238 = por %p236, %p237
      %p239 = scmp.ne.s32.totalorder %s231, %s233
      %p240 = scmp.eq.s32.totalorder %s29, 3
      %p241 = por %p239, %p240
      %p242 = scmp.ne.s32.totalorder %s233, %s234
      %p243 = scmp.eq.s32.totalorder %s29, 0
      %p244 = por %p242, %p243
      %p245 = scmp.ne.s32.totalorder %s233, %s234
      %p246 = scmp.eq.s32.totalorder %s30, 3
      %p247 = por %p245, %p246
      %p249 = scmp.ne.s32.totalorder %s234, %s248
      %p250 = scmp.eq.s32.totalorder %s30, 0
      %p251 = por %p249, %p250
      %p252 = scmp.le.s32.totalorder 1, %s24
      %p253 = scmp.lt.s32.totalorder %s24, 5
      %p254 = pnand %p252, %p253
      %p255 = pneg %p254
      // Predicated region
      $region9: #{downsample_forward.4} parent=5 // pred_check
        _
      $region10: #{downsample_forward.4} parent=5 // pred_check_branch
        %257 = sbr.rel (%p254) target = $region12
      $region11: #{downsample_forward.4} parent=5 // pred_region
        %s258 = ssub.s32 %s24, 1
        // Predicated region
        $region13: #{downsample_forward.4} parent=11 // pred_check
          %p259 = pneg %p85
        $region14: #{downsample_forward.4} parent=11 // pred_check_branch
          %261 = sbr.rel (%p259) target = $region16
        $region15: #{downsample_forward.4} parent=11 // pred_region
          %s263 = ssub.s32 9216, 9216
          %264 = vsyncadd [#allocation7], %s263
          %s265 = sshll.u32 [#allocation6], 4
          %s266 = int_to_ptr.vmem [resolvable:$true] %s265
          %271 = dma.hbm_to_vmem [thread:$0]  %s1, 9216, %s266, [#allocation7], 64, 64, 4
        $region16: #{downsample_forward.4} parent=11 // pred_fallthru
          _
        // Predicated region
        $region17: #{downsample_forward.4} parent=11 // pred_check
          %p272 = pneg %p106
        $region18: #{downsample_forward.4} parent=11 // pred_check_branch
          %274 = sbr.rel (%p272) target = $region20
        $region19: #{downsample_forward.4} parent=11 // pred_region
          %s276 = ssub.s32 16, 16
          %277 = vsyncadd [#allocation7], %s276
          %s279 = sshll.u32 [#allocation8], 4
          %s280 = int_to_ptr.vmem [resolvable:$true] %s279
          %282 = dma.hbm_to_vmem [thread:$0]  %s2, 16, %s280, [#allocation7]
        $region20: #{downsample_forward.4} parent=11 // pred_fallthru
          _
        // Predicated region
        $region21: #{downsample_forward.4} parent=11 // pred_check
          %p283 = pneg %p127
        $region22: #{downsample_forward.4} parent=11 // pred_check_branch
          %285 = sbr.rel (%p283) target = $region24
        $region23: #{downsample_forward.4} parent=11 // pred_region
          %s287 = ssub.s32 16, 16
          %288 = vsyncadd [#allocation10], %s287
          %s290 = sshll.u32 [#allocation9], 4
          %s291 = int_to_ptr.vmem [resolvable:$true] %s290
          %293 = dma.hbm_to_vmem [thread:$0]  %s3, 16, %s291, [#allocation10]
        $region24: #{downsample_forward.4} parent=11 // pred_fallthru
          _
        // Predicated region
        $region25: #{downsample_forward.4} parent=11 // pred_check
          %p294 = pneg %p174
        $region26: #{downsample_forward.4} parent=11 // pred_check_branch
          %296 = sbr.rel (%p294) target = $region28
        $region27: #{downsample_forward.4} parent=11 // pred_region
          %s298 = ssub.s32 640, 640
          %299 = vsyncadd [#allocation7], %s298
          %s300 = sshll.u32 [#allocation12], 4
          %s301 = int_to_ptr.vmem [resolvable:$true] %s300
          %306 = dma.hbm_to_vmem [thread:$0]  %s5, 640, %s301, [#allocation7], 128, 128, 8
        $region28: #{downsample_forward.4} parent=11 // pred_fallthru
          _
      $region12: #{downsample_forward.4} parent=5 // pred_fallthru
        _
      %p307 = scmp.lt.s32.totalorder %s24, 4
      // Predicated region
      $region29: #{downsample_forward.4} parent=5 // pred_check
        %p308 = pneg %p307
      $region30: #{downsample_forward.4} parent=5 // pred_check_branch
        %310 = sbr.rel (%p308) target = $region32
      $region31: #{downsample_forward.4} parent=5 // pred_region
        // Predicated region
        $region33: #{downsample_forward.4} parent=31 // pred_check
          %p311 = pneg %p58
        $region34: #{downsample_forward.4} parent=31 // pred_check_branch
          %313 = sbr.rel (%p311) target = $region36
        $region35: #{downsample_forward.4} parent=31 // pred_region
          %s314 = sand.u32 %s24, 1
          %s315 = scalar_lea.sflag [#allocation4], %s314
          %s316 = sand.u32 %s48, 1
          %s317 = smul.addr %s316, 64
          %s318 = scalar_lea.vmem [#allocation3], %s317
          %s320 = ssub.s32 1024, 1024
          %321 = vsyncadd %s315, %s320
          %s322 = smul.addr %s32, 8
          %s323 = smul.addr %s31, 16
          %s324 = sadd.s32 %s322, %s323
          %s325 = smul.addr %s324, 128
          %s326 = scalar_lea.hbm %s0, %s325
          %s327 = sshll.u32 %s318, 4
          %s328 = int_to_ptr.vmem [resolvable:$true] %s327
          %333 = dma.hbm_to_vmem [thread:$0]  %s326, 1024, %s328, %s315, 128, 128, 8
        $region36: #{downsample_forward.4} parent=31 // pred_fallthru
          _
        // Predicated region
        $region37: #{downsample_forward.4} parent=31 // pred_check
          %p334 = pneg %p147
        $region38: #{downsample_forward.4} parent=31 // pred_check_branch
          %336 = sbr.rel (%p334) target = $region40
        $region39: #{downsample_forward.4} parent=31 // pred_region
          %s337 = sand.u32 %s24, 1
          %s338 = scalar_lea.sflag [#allocation4], %s337
          %s339 = sand.u32 %s137, 1
          %s340 = smul.addr %s339, 64
          %s341 = scalar_lea.vmem [#allocation11], %s340
          %s343 = ssub.s32 1024, 1024
          %344 = vsyncadd %s338, %s343
          %s345 = smul.addr %s32, 8
          %s346 = smul.addr %s345, 128
          %s347 = scalar_lea.hbm %s4, %s346
          %s348 = sshll.u32 %s341, 4
          %s349 = int_to_ptr.vmem [resolvable:$true] %s348
          %354 = dma.hbm_to_vmem [thread:$0]  %s347, 1024, %s349, %s338, 128, 128, 8
        $region40: #{downsample_forward.4} parent=31 // pred_fallthru
          _
      $region32: #{downsample_forward.4} parent=5 // pred_fallthru
        _
      %p355 = scmp.le.s32.totalorder 1, %s24
      %p356 = scmp.lt.s32.totalorder %s24, 5
      %p357 = pnand %p355, %p356
      %p358 = pneg %p357
      // Predicated region
      $region41: #{downsample_forward.4} parent=5 // pred_check
        _
      $region42: #{downsample_forward.4} parent=5 // pred_check_branch
        %360 = sbr.rel (%p357) target = $region44
      $region43: #{downsample_forward.4} parent=5 // pred_region
        %s361 = ssub.s32 %s24, 1
        %s362 = sand.u32 %s29, 1
        %s363 = scalar_lea.sflag [#allocation4], %s362
        %s364 = sand.u32 %s51, 1
        %s365 = smul.addr %s364, 64
        %s366 = scalar_lea.vmem [#allocation3], %s365
        // Predicated region
        $region45: #{downsample_forward.4} parent=43 // pred_check
          %p367 = pneg %p64
        $region46: #{downsample_forward.4} parent=43 // pred_check_branch
          %369 = sbr.rel (%p367) target = $region48
        $region47: #{downsample_forward.4} parent=43 // pred_region
          %370 = dma.done %s363, 1024
        $region48: #{downsample_forward.4} parent=43 // pred_fallthru
          _
        // Predicated region
        $region49: #{downsample_forward.4} parent=43 // pred_check
          %p371 = pneg %p85
        $region50: #{downsample_forward.4} parent=43 // pred_check_branch
          %373 = sbr.rel (%p371) target = $region52
        $region51: #{downsample_forward.4} parent=43 // pred_region
          %374 = dma.done [#allocation7], 9216
        $region52: #{downsample_forward.4} parent=43 // pred_fallthru
          _
        // Predicated region
        $region53: #{downsample_forward.4} parent=43 // pred_check
          %p375 = pneg %p106
        $region54: #{downsample_forward.4} parent=43 // pred_check_branch
          %377 = sbr.rel (%p375) target = $region56
        $region55: #{downsample_forward.4} parent=43 // pred_region
          %378 = dma.done [#allocation7], 16
        $region56: #{downsample_forward.4} parent=43 // pred_fallthru
          _
        // Predicated region
        $region57: #{downsample_forward.4} parent=43 // pred_check
          %p379 = pneg %p127
        $region58: #{downsample_forward.4} parent=43 // pred_check_branch
          %381 = sbr.rel (%p379) target = $region60
        $region59: #{downsample_forward.4} parent=43 // pred_region
          %382 = dma.done [#allocation10], 16
        $region60: #{downsample_forward.4} parent=43 // pred_fallthru
          _
        %s383 = sand.u32 %s29, 1
        %s384 = scalar_lea.sflag [#allocation4], %s383
        %s385 = sand.u32 %s140, 1
        %s386 = smul.addr %s385, 64
        %s387 = scalar_lea.vmem [#allocation11], %s386
        // Predicated region
        $region61: #{downsample_forward.4} parent=43 // pred_check
          %p388 = pneg %p153
        $region62: #{downsample_forward.4} parent=43 // pred_check_branch
          %390 = sbr.rel (%p388) target = $region64
        $region63: #{downsample_forward.4} parent=43 // pred_region
          %391 = dma.done %s384, 1024
        $region64: #{downsample_forward.4} parent=43 // pred_fallthru
          _
        // Predicated region
        $region65: #{downsample_forward.4} parent=43 // pred_check
          %p392 = pneg %p174
        $region66: #{downsample_forward.4} parent=43 // pred_check_branch
          %394 = sbr.rel (%p392) target = $region68
        $region67: #{downsample_forward.4} parent=43 // pred_region
          %395 = dma.done [#allocation7], 640
        $region68: #{downsample_forward.4} parent=43 // pred_fallthru
          _
        %s396 = sand.u32 %s29, 1
        %s397 = scalar_lea.sflag [#allocation4], %s396
        %s398 = sand.u32 %s51, 1
        %s399 = smul.addr %s398, 64
        %s400 = scalar_lea.vmem [#allocation3], %s399
        %p401 = pneg %p64
        %p402 = pneg %p61
        %p403 = pneg %p85
        %p404 = pneg %p82
        %p405 = pneg %p106
        %p406 = pneg %p103
        %p407 = pneg %p127
        %p408 = pneg %p124
        %s409 = sand.u32 %s29, 1
        %s410 = scalar_lea.sflag [#allocation4], %s409
        %s411 = sand.u32 %s140, 1
        %s412 = smul.addr %s411, 64
        %s413 = scalar_lea.vmem [#allocation11], %s412
        %p414 = pneg %p153
        %p415 = pneg %p150
        %p416 = pneg %p174
        %p417 = pneg %p171
        %p418 = pneg %p202
        %p419 = pneg %p199
        %s420 = sand.u32 %s189, 1
        %s421 = scalar_lea.sflag [#allocation5], %s420
        %s422 = sand.u32 %s189, 1
        %s423 = smul.addr %s422, 40
        %s424 = scalar_lea.vmem [#allocation13], %s423
        %p425 = pneg %p223
        %p426 = pneg %p220
        %p427 = pneg %p244
        %p428 = pneg %p241
        %v430 = vld [vmem:[%s366] sm:$0xff]
        %v431 = vld [vmem:[%s366 + $0x8] sm:$0xff]
        %v432 = vld [vmem:[%s366 + $0x10] sm:$0xff]
        %v433 = vld [vmem:[%s366 + $0x18] sm:$0xff]
        %v434 = vld [vmem:[%s366 + $0x20] sm:$0xff]
        %v435 = vld [vmem:[%s366 + $0x28] sm:$0xff]
        %v436 = vld [vmem:[%s366 + $0x30] sm:$0xff]
        %v437 = vld [vmem:[%s366 + $0x38] sm:$0x3f]
        %v438 = vld [vmem:[#allocation8] sm:$0x1]
        %v440 = vlaneseq
        %v441 = vshrl.u32 %v440, 7
        %v442 = vsub.s32 0, %v441
        %v443 = vrot.slane %v438, %v442
        %v445 = vmul.f32 %v430, %v443
        %v446 = vmul.f32 %v431, %v443
        %v447 = vmul.f32 %v432, %v443
        %v448 = vmul.f32 %v433, %v443
        %v449 = vmul.f32 %v434, %v443
        %v450 = vmul.f32 %v435, %v443
        %v451 = vmul.f32 %v436, %v443
        %v452 = vmul.f32 %v437, %v443
        %v453 = vld [vmem:[#allocation9] sm:$0x1]
        %v455 = vlaneseq
        %v456 = vshrl.u32 %v455, 7
        %v457 = vsub.s32 0, %v456
        %v458 = vrot.slane %v453, %v457
        %v460 = vadd.f32 %v445, %v458
        %v461 = vadd.f32 %v446, %v458
        %v462 = vadd.f32 %v447, %v458
        %v463 = vadd.f32 %v448, %v458
        %v464 = vadd.f32 %v449, %v458
        %v465 = vadd.f32 %v450, %v458
        %v466 = vadd.f32 %v451, %v458
        %v467 = vadd.f32 %v452, %v458
        %v468 = vmax.f32 %v460, 0.0
        %v469 = vmax.f32 %v461, 0.0
        %v470 = vmax.f32 %v462, 0.0
        %v471 = vmax.f32 %v463, 0.0
        %v472 = vmax.f32 %v464, 0.0
        %v473 = vmax.f32 %v465, 0.0
        %v474 = vmax.f32 %v466, 0.0
        %v475 = vmax.f32 %v467, 0.0
        %v476 = vld [vmem:[%s387] sm:$0xff]
        %v477 = vld [vmem:[%s387 + $0x8] sm:$0xff]
        %v478 = vld [vmem:[%s387 + $0x10] sm:$0xff]
        %v479 = vld [vmem:[%s387 + $0x18] sm:$0xff]
        %v480 = vld [vmem:[%s387 + $0x20] sm:$0xff]
        %v481 = vld [vmem:[%s387 + $0x28] sm:$0xff]
        %v482 = vld [vmem:[%s387 + $0x30] sm:$0xff]
        %v483 = vld [vmem:[%s387 + $0x38] sm:$0x3f]
        %485 = vset.pattern.permute.xlu0 0
        %486 = vperm.xlu0 %485, %v476
        %v487 = vpop.permute.xlu0 %486
        %490 = vset.pattern.permute.xlu0 0
        %491 = vperm.xlu0 %490, %v477
        %v492 = vpop.permute.xlu0 %491
        %495 = vset.pattern.permute.xlu0 0
        %496 = vperm.xlu0 %495, %v478
        %v497 = vpop.permute.xlu0 %496
        %500 = vset.pattern.permute.xlu0 0
        %501 = vperm.xlu0 %500, %v479
        %v502 = vpop.permute.xlu0 %501
        %505 = vset.pattern.permute.xlu0 0
        %506 = vperm.xlu0 %505, %v480
        %v507 = vpop.permute.xlu0 %506
        %510 = vset.pattern.permute.xlu0 0
        %511 = vperm.xlu0 %510, %v481
        %v512 = vpop.permute.xlu0 %511
        %515 = vset.pattern.permute.xlu0 0
        %516 = vperm.xlu0 %515, %v482
        %v517 = vpop.permute.xlu0 %516
        %520 = vset.pattern.permute.xlu0 0
        %521 = vperm.xlu0 %520, %v483
        %v522 = vpop.permute.xlu0 %521
        %v524 = vmul.f32 %v468, %v487
        %v525 = vmul.f32 %v469, %v492
        %v526 = vmul.f32 %v470, %v497
        %v527 = vmul.f32 %v471, %v502
        %v528 = vmul.f32 %v472, %v507
        %v529 = vmul.f32 %v473, %v512
        %v530 = vmul.f32 %v474, %v517
        %v531 = vmul.f32 %v475, %v522
        %v532 = vpack.c.bf16 %v525, %v524
        %v533 = vpack.c.bf16 %v527, %v526
        %v534 = vpack.c.bf16 %v529, %v528
        %v535 = vpack.c.bf16 %v531, %v530
        %v540 = vunpack.c.l.b16 %v532
        %v541 = vunpack.c.h.b16 %v532
        %v542 = vunpack.c.l.b16 %v533
        %v543 = vunpack.c.h.b16 %v533
        %v544 = vunpack.c.l.b16 %v534
        %v545 = vunpack.c.h.b16 %v534
        %v546 = vunpack.c.l.b16 %v535
        %v547 = vunpack.c.h.b16 %v535
        %v548 = vpack.c.b16 %v540, %v540
        %v549 = vpack.c.b16 %v541, %v541
        %v550 = vpack.c.b16 %v542, %v542
        %v551 = vpack.c.b16 %v543, %v543
        %v552 = vpack.c.b16 %v544, %v544
        %v553 = vpack.c.b16 %v545, %v545
        %v554 = vpack.c.b16 %v546, %v546
        %v555 = vpack.c.b16 %v547, %v547
        %564 = vst [vmem:[#allocation2] sm:$0xf] %v548
        %565 = vst [vmem:[#allocation2 + $0x4] sm:$0xf] %v549
        %566 = vst [vmem:[#allocation2 + $0x8] sm:$0xf] %v550
        %567 = vst [vmem:[#allocation2 + $0xc] sm:$0xf] %v551
        %568 = vst [vmem:[#allocation2 + $0x10] sm:$0xf] %v552
        %569 = vst [vmem:[#allocation2 + $0x14] sm:$0xf] %v553
        %570 = vst [vmem:[#allocation2 + $0x18] sm:$0xf] %v554
        %571 = vst [vmem:[#allocation2 + $0x1c] sm:$0x7] %v555
        %v572 = vld [vmem:[#allocation2] sm:$0xf]
        %v573 = vld [vmem:[#allocation2 + $0x4] sm:$0xf]
        %v574 = vld [vmem:[#allocation2 + $0x8] sm:$0xf]
        %v575 = vld [vmem:[#allocation2 + $0xc] sm:$0xf]
        %v576 = vld [vmem:[#allocation2 + $0x10] sm:$0xf]
        %v577 = vld [vmem:[#allocation6] sm:$0xf]
        %v578 = vld [vmem:[#allocation6 + $0x4] sm:$0xf]
        %v579 = vld [vmem:[#allocation6 + $0x8] sm:$0xf]
        %v580 = vld [vmem:[#allocation6 + $0xc] sm:$0xf]
        %v581 = vld [vmem:[#allocation6 + $0x10] sm:$0xf]
        %v582 = vld [vmem:[#allocation6 + $0x14] sm:$0xf]
        %v583 = vld [vmem:[#allocation6 + $0x18] sm:$0xf]
        %v584 = vld [vmem:[#allocation6 + $0x1c] sm:$0xf]
        %v585 = vld [vmem:[#allocation6 + $0x20] sm:$0xf]
        %v586 = vld [vmem:[#allocation6 + $0x24] sm:$0xf]
        %v587 = vld [vmem:[#allocation6 + $0x28] sm:$0xf]
        %v588 = vld [vmem:[#allocation6 + $0x2c] sm:$0xf]
        %v589 = vld [vmem:[#allocation6 + $0x30] sm:$0xf]
        %v590 = vld [vmem:[#allocation6 + $0x34] sm:$0xf]
        %v591 = vld [vmem:[#allocation6 + $0x38] sm:$0xf]
        %v592 = vld [vmem:[#allocation6 + $0x3c] sm:$0xf]
        %v593 = vld [vmem:[#allocation2 + $0x14] sm:$0x1]
        %s594 = scalar_lea.vmem [#allocation6], 64
        %v595 = vld [vmem:[%s594] sm:$0xf]
        %v596 = vld [vmem:[%s594 + $0x4] sm:$0xf]
        %v597 = vld [vmem:[%s594 + $0x8] sm:$0xf]
        %v598 = vld [vmem:[%s594 + $0xc] sm:$0xf]
        %v599 = vld [vmem:[%s594 + $0x10] sm:$0xf]
        %v600 = vld [vmem:[%s594 + $0x14] sm:$0xf]
        %v601 = vld [vmem:[%s594 + $0x18] sm:$0xf]
        %v602 = vld [vmem:[%s594 + $0x1c] sm:$0xf]
        %v603 = vld [vmem:[%s594 + $0x20] sm:$0xf]
        %v604 = vld [vmem:[%s594 + $0x24] sm:$0xf]
        %v605 = vld [vmem:[%s594 + $0x28] sm:$0xf]
        %v606 = vld [vmem:[%s594 + $0x2c] sm:$0xf]
        %v607 = vld [vmem:[%s594 + $0x30] sm:$0xf]
        %v608 = vld [vmem:[%s594 + $0x34] sm:$0xf]
        %v609 = vld [vmem:[%s594 + $0x38] sm:$0xf]
        %v610 = vld [vmem:[%s594 + $0x3c] sm:$0xf]
        %v617 = vunpack.c.l.b16 %v572
        %v618 = vunpack.c.l.b16 %v573
        %v619 = vunpack.c.l.b16 %v574
        %v620 = vunpack.c.l.b16 %v575
        %v621 = vunpack.c.l.b16 %v576
        %v622 = vunpack.c.l.b16 %v593
        %v623 = vpack.c.b16 %v618, %v617
        %v624 = vpack.c.b16 %v620, %v619
        %v625 = vpack.c.b16 %v622, %v621
        %vm626 = vsmask.f32 7424
        %v628 = vshrl.u32 %v623, 16
        %v630 = vshll.u32 %v623, 16
        %v632 = vrot.slane %v630, 1
        %v633 = vor.u32 %v628, %v632
        %v635 = vshll.u32 %v624, 16
        %v637 = vrot.slane %v635, 1
        %v638 = vsel %vm626, %v633, %v637
        %v639 = vshrl.u32 %v624, 16
        %v641 = vor.u32 %v639, %v637
        %v643 = vshll.u32 %v625, 16
        %v645 = vrot.slane %v643, 1
        %v646 = vsel %vm626, %v641, %v645
        %v647 = vshrl.u32 %v625, 16
        %v649 = vor.u32 %v647, %v645
        %v669 = vunpack.c.l.b16 %v595
        %v670 = vunpack.c.l.b16 %v596
        %v671 = vunpack.c.l.b16 %v597
        %v672 = vunpack.c.l.b16 %v598
        %v673 = vunpack.c.l.b16 %v599
        %v674 = vunpack.c.l.b16 %v600
        %v675 = vunpack.c.l.b16 %v601
        %v676 = vunpack.c.l.b16 %v602
        %v677 = vunpack.c.l.b16 %v603
        %v678 = vunpack.c.l.b16 %v604
        %v679 = vunpack.c.l.b16 %v605
        %v680 = vunpack.c.l.b16 %v606
        %v681 = vunpack.c.l.b16 %v607
        %v682 = vunpack.c.l.b16 %v608
        %v683 = vunpack.c.l.b16 %v609
        %v684 = vunpack.c.l.b16 %v610
        %v685 = vpack.c.b16 %v670, %v669
        %v686 = vpack.c.b16 %v672, %v671
        %v687 = vpack.c.b16 %v674, %v673
        %v688 = vpack.c.b16 %v676, %v675
        %v689 = vpack.c.b16 %v678, %v677
        %v690 = vpack.c.b16 %v680, %v679
        %v691 = vpack.c.b16 %v682, %v681
        %v692 = vpack.c.b16 %v684, %v683
        %701 = vmatprep.subr.bf16.mxu0 0
        %702 = vmatpush1.bf16.msra.mxu0 %v685
        %703 = vmatprep.subr.bf16.mxu0 0
        %704 = vmatpush1.bf16.msra.mxu0 %v686
        %705 = vmatprep.subr.bf16.mxu0 0
        %706 = vmatpush1.bf16.msra.mxu0 %v687
        %707 = vmatprep.subr.bf16.mxu0 0
        %708 = vmatpush1.bf16.msra.mxu0 %v688
        %709 = vmatprep.subr.bf16.mxu0 0
        %710 = vmatpush1.bf16.msra.mxu0 %v689
        %711 = vmatprep.subr.bf16.mxu0 0
        %712 = vmatpush1.bf16.msra.mxu0 %v690
        %713 = vmatprep.subr.bf16.mxu0 0
        %714 = vmatpush1.bf16.msra.mxu0 %v691
        %715 = vmatprep.subr.bf16.mxu0 0
        %716 = vmatpush1.bf16.msra.mxu0 %v692
        %717 = vmatprep.subr.bf16.mxu0 0
        %718 = vmatpush1.bf16.msra.mxu0 0
        %719 = vmatprep.subr.bf16.mxu0 0
        %720 = vmatpush1.bf16.msra.mxu0 0
        %721 = vmatprep.subr.bf16.mxu0 0
        %722 = vmatpush1.bf16.msra.mxu0 0
        %723 = vmatprep.subr.bf16.mxu0 0
        %724 = vmatpush1.bf16.msra.mxu0 0
        %725 = vmatprep.subr.bf16.mxu0 0
        %726 = vmatpush1.bf16.msra.mxu0 0
        %727 = vmatprep.subr.bf16.mxu0 0
        %728 = vmatpush1.bf16.msra.mxu0 0
        %729 = vmatprep.subr.bf16.mxu0 0
        %730 = vmatpush1.bf16.msra.mxu0 0
        %731 = vmatprep.subr.bf16.mxu0 0
        %732 = vmatpush1.bf16.msra.mxu0 0
        %733 = vmatprep.mubr.bf16.mxu0 0
        %734 = vmatmul.mubr.bf16.gmra.mrb[0].mxu0 %v638
        %v735 = vpop.f32.mrb[0].mxu0
        %v736 = vadd.f32 0.0, %v735
        %v737 = vpop.f32.mrb[0].mxu0
        %v738 = vpop.f32.mrb[0].mxu0
        %v739 = vadd.f32 0.0, %v738
        %v740 = vpop.f32.mrb[0].mxu0
        %741 = vmatprep.mubr.bf16.mxu0 0
        %742 = vmatmul.mubr.bf16.gmra.mrb[0].mxu0 %v646
        %v743 = vpop.f32.mrb[0].mxu0
        %v744 = vadd.f32 0.0, %v743
        %v745 = vpop.f32.mrb[0].mxu0
        %v746 = vpop.f32.mrb[0].mxu0
        %v747 = vadd.f32 0.0, %v746
        %v748 = vpop.f32.mrb[0].mxu0
        %749 = vmatprep.mubr.bf16.mxu0 0
        %750 = vmatmul.mubr.bf16.gmra.mrb[0].mxu0 %v649
        %v751 = vpop.f32.mrb[0].mxu0
        %v752 = vadd.f32 0.0, %v751
        %v753 = vpop.f32.mrb[0].mxu0
        %v754 = vpop.f32.mrb[0].mxu0
        %v755 = vpop.f32.mrb[0].mxu0
        %756 = vdwg.mxu0
        %v757 = vpack.c.b16 %v621, %v621
        %v777 = vunpack.c.l.b16 %v577
        %v778 = vunpack.c.l.b16 %v578
        %v779 = vunpack.c.l.b16 %v579
        %v780 = vunpack.c.l.b16 %v580
        %v781 = vunpack.c.l.b16 %v581
        %v782 = vunpack.c.l.b16 %v582
        %v783 = vunpack.c.l.b16 %v583
        %v784 = vunpack.c.l.b16 %v584
        %v785 = vunpack.c.l.b16 %v585
        %v786 = vunpack.c.l.b16 %v586
        %v787 = vunpack.c.l.b16 %v587
        %v788 = vunpack.c.l.b16 %v588
        %v789 = vunpack.c.l.b16 %v589
        %v790 = vunpack.c.l.b16 %v590
        %v791 = vunpack.c.l.b16 %v591
        %v792 = vunpack.c.l.b16 %v592
        %v793 = vpack.c.b16 %v778, %v777
        %v794 = vpack.c.b16 %v780, %v779
        %v795 = vpack.c.b16 %v782, %v781
        %v796 = vpack.c.b16 %v784, %v783
        %v797 = vpack.c.b16 %v786, %v785
        %v798 = vpack.c.b16 %v788, %v787
        %v799 = vpack.c.b16 %v790, %v789
        %v800 = vpack.c.b16 %v792, %v791
        %809 = vmatprep.subr.bf16.mxu0 0
        %810 = vmatpush1.bf16.msra.mxu0 %v793
        %811 = vmatprep.subr.bf16.mxu0 0
        %812 = vmatpush1.bf16.msra.mxu0 %v794
        %813 = vmatprep.subr.bf16.mxu0 0
        %814 = vmatpush1.bf16.msra.mxu0 %v795
        %815 = vmatprep.subr.bf16.mxu0 0
        %816 = vmatpush1.bf16.msra.mxu0 %v796
        %817 = vmatprep.subr.bf16.mxu0 0
        %818 = vmatpush1.bf16.msra.mxu0 %v797
        %819 = vmatprep.subr.bf16.mxu0 0
        %820 = vmatpush1.bf16.msra.mxu0 %v798
        %821 = vmatprep.subr.bf16.mxu0 0
        %822 = vmatpush1.bf16.msra.mxu0 %v799
        %823 = vmatprep.subr.bf16.mxu0 0
        %824 = vmatpush1.bf16.msra.mxu0 %v800
        %825 = vmatprep.subr.bf16.mxu0 0
        %826 = vmatpush1.bf16.msra.mxu0 0
        %827 = vmatprep.subr.bf16.mxu0 0
        %828 = vmatpush1.bf16.msra.mxu0 0
        %829 = vmatprep.subr.bf16.mxu0 0
        %830 = vmatpush1.bf16.msra.mxu0 0
        %831 = vmatprep.subr.bf16.mxu0 0
        %832 = vmatpush1.bf16.msra.mxu0 0
        %833 = vmatprep.subr.bf16.mxu0 0
        %834 = vmatpush1.bf16.msra.mxu0 0
        %835 = vmatprep.subr.bf16.mxu0 0
        %836 = vmatpush1.bf16.msra.mxu0 0
        %837 = vmatprep.subr.bf16.mxu0 0
        %838 = vmatpush1.bf16.msra.mxu0 0
        %839 = vmatprep.subr.bf16.mxu0 0
        %840 = vmatpush1.bf16.msra.mxu0 0
        %841 = vmatprep.mubr.bf16.mxu0 0
        %842 = vmatmul.mubr.bf16.gmra.mrb[0].mxu0 %v623
        %v843 = vpop.f32.mrb[0].mxu0
        %v844 = vadd.f32 %v736, %v843
        %v845 = vpop.f32.mrb[0].mxu0
        %v846 = vpop.f32.mrb[0].mxu0
        %v847 = vadd.f32 %v739, %v846
        %v848 = vpop.f32.mrb[0].mxu0
        %849 = vmatprep.mubr.bf16.mxu0 0
        %850 = vmatmul.mubr.bf16.gmra.mrb[0].mxu0 %v624
        %v851 = vpop.f32.mrb[0].mxu0
        %v852 = vadd.f32 %v744, %v851
        %v853 = vpop.f32.mrb[0].mxu0
        %v854 = vpop.f32.mrb[0].mxu0
        %v855 = vadd.f32 %v747, %v854
        %v856 = vpop.f32.mrb[0].mxu0
        %857 = vmatprep.mubr.bf16.mxu0 0
        %858 = vmatmul.mubr.bf16.gmra.mrb[0].mxu0 %v757
        %v859 = vpop.f32.mrb[0].mxu0
        %v860 = vadd.f32 %v752, %v859
        %v861 = vpop.f32.mrb[0].mxu0
        %v862 = vpop.f32.mrb[0].mxu0
        %v863 = vpop.f32.mrb[0].mxu0
        %864 = vdwg.mxu0
        %v865 = vld [vmem:[#allocation2] sm:$0xe]
        %s866 = scalar_lea.vmem [#allocation6], 128
        %v867 = vld [vmem:[%s866] sm:$0xf]
        %v868 = vld [vmem:[%s866 + $0x4] sm:$0xf]
        %v869 = vld [vmem:[%s866 + $0x8] sm:$0xf]
        %v870 = vld [vmem:[%s866 + $0xc] sm:$0xf]
        %v871 = vld [vmem:[%s866 + $0x10] sm:$0xf]
        %v872 = vld [vmem:[%s866 + $0x14] sm:$0xf]
        %v873 = vld [vmem:[%s866 + $0x18] sm:$0xf]
        %v874 = vld [vmem:[%s866 + $0x1c] sm:$0xf]
        %v875 = vld [vmem:[%s866 + $0x20] sm:$0xf]
        %v876 = vld [vmem:[%s866 + $0x24] sm:$0xf]
        %v877 = vld [vmem:[%s866 + $0x28] sm:$0xf]
        %v878 = vld [vmem:[%s866 + $0x2c] sm:$0xf]
        %v879 = vld [vmem:[%s866 + $0x30] sm:$0xf]
        %v880 = vld [vmem:[%s866 + $0x34] sm:$0xf]
        %v881 = vld [vmem:[%s866 + $0x38] sm:$0xf]
        %v882 = vld [vmem:[%s866 + $0x3c] sm:$0xf]
        %v884 = vunpack.c.l.b16 %v865
        %v885 = vpack.c.b16 %v618, %v884
        %vm886 = vcmask 1046528
        %v887 = vrot.slane %v885, 1
        %v888 = vrot.slane %v624, 1
        %v889 = vsel %vm886, %v887, %v888
        %v890 = vrot.slane %v625, 1
        %v891 = vsel %vm886, %v888, %v890
        %v911 = vunpack.c.l.b16 %v867
        %v912 = vunpack.c.l.b16 %v868
        %v913 = vunpack.c.l.b16 %v869
        %v914 = vunpack.c.l.b16 %v870
        %v915 = vunpack.c.l.b16 %v871
        %v916 = vunpack.c.l.b16 %v872
        %v917 = vunpack.c.l.b16 %v873
        %v918 = vunpack.c.l.b16 %v874
        %v919 = vunpack.c.l.b16 %v875
        %v920 = vunpack.c.l.b16 %v876
        %v921 = vunpack.c.l.b16 %v877
        %v922 = vunpack.c.l.b16 %v878
        %v923 = vunpack.c.l.b16 %v879
        %v924 = vunpack.c.l.b16 %v880
        %v925 = vunpack.c.l.b16 %v881
        %v926 = vunpack.c.l.b16 %v882
        %v927 = vpack.c.b16 %v912, %v911
        %v928 = vpack.c.b16 %v914, %v913
        %v929 = vpack.c.b16 %v916, %v915
        %v930 = vpack.c.b16 %v918, %v917
        %v931 = vpack.c.b16 %v920, %v919
        %v932 = vpack.c.b16 %v922, %v921
        %v933 = vpack.c.b16 %v924, %v923
        %v934 = vpack.c.b16 %v926, %v925
        %943 = vmatprep.subr.bf16.mxu0 0
        %944 = vmatpush1.bf16.msra.mxu0 %v927
        %945 = vmatprep.subr.bf16.mxu0 0
        %946 = vmatpush1.bf16.msra.mxu0 %v928
        %947 = vmatprep.subr.bf16.mxu0 0
        %948 = vmatpush1.bf16.msra.mxu0 %v929
        %949 = vmatprep.subr.bf16.mxu0 0
        %950 = vmatpush1.bf16.msra.mxu0 %v930
        %951 = vmatprep.subr.bf16.mxu0 0
        %952 = vmatpush1.bf16.msra.mxu0 %v931
        %953 = vmatprep.subr.bf16.mxu0 0
        %954 = vmatpush1.bf16.msra.mxu0 %v932
        %955 = vmatprep.subr.bf16.mxu0 0
        %956 = vmatpush1.bf16.msra.mxu0 %v933
        %957 = vmatprep.subr.bf16.mxu0 0
        %958 = vmatpush1.bf16.msra.mxu0 %v934
        %959 = vmatprep.subr.bf16.mxu0 0
        %960 = vmatpush1.bf16.msra.mxu0 0
        %961 = vmatprep.subr.bf16.mxu0 0
        %962 = vmatpush1.bf16.msra.mxu0 0
        %963 = vmatprep.subr.bf16.mxu0 0
        %964 = vmatpush1.bf16.msra.mxu0 0
        %965 = vmatprep.subr.bf16.mxu0 0
        %966 = vmatpush1.bf16.msra.mxu0 0
        %967 = vmatprep.subr.bf16.mxu0 0
        %968 = vmatpush1.bf16.msra.mxu0 0
        %969 = vmatprep.subr.bf16.mxu0 0
        %970 = vmatpush1.bf16.msra.mxu0 0
        %971 = vmatprep.subr.bf16.mxu0 0
        %972 = vmatpush1.bf16.msra.mxu0 0
        %973 = vmatprep.subr.bf16.mxu0 0
        %974 = vmatpush1.bf16.msra.mxu0 0
        %975 = vmatprep.mubr.bf16.mxu0 0
        %976 = vmatmul.mubr.bf16.gmra.mrb[0].mxu0 %v889
        %v977 = vpop.f32.mrb[0].mxu0
        %v978 = vadd.f32 0.0, %v977
        %v979 = vpop.f32.mrb[0].mxu0
        %v980 = vpop.f32.mrb[0].mxu0
        %v981 = vadd.f32 0.0, %v980
        %v982 = vpop.f32.mrb[0].mxu0
        %983 = vmatprep.mubr.bf16.mxu0 0
        %984 = vmatmul.mubr.bf16.gmra.mrb[0].mxu0 %v891
        %v985 = vpop.f32.mrb[0].mxu0
        %v986 = vadd.f32 0.0, %v985
        %v987 = vpop.f32.mrb[0].mxu0
        %v988 = vpop.f32.mrb[0].mxu0
        %v989 = vadd.f32 0.0, %v988
        %v990 = vpop.f32.mrb[0].mxu0
        %991 = vmatprep.mubr.bf16.mxu0 0
        %992 = vmatmul.mubr.bf16.gmra.mrb[0].mxu0 %v890
        %v993 = vpop.f32.mrb[0].mxu0
        %v994 = vadd.f32 0.0, %v993
        %v995 = vpop.f32.mrb[0].mxu0
        %v996 = vpop.f32.mrb[0].mxu0
        %v997 = vpop.f32.mrb[0].mxu0
        %998 = vdwg.mxu0
        %v999 = vadd.f32 %v844, %v978
        %v1000 = vadd.f32 %v847, %v981
        %v1001 = vadd.f32 %v852, %v986
        %v1002 = vadd.f32 %v855, %v989
        %v1003 = vadd.f32 %v860, %v994
        %v1004 = vld [vmem:[#allocation2 + $0x4] sm:$0xe]
        %v1005 = vld [vmem:[#allocation2 + $0x8] sm:$0xf]
        %v1006 = vld [vmem:[#allocation2 + $0xc] sm:$0xf]
        %v1007 = vld [vmem:[#allocation2 + $0x10] sm:$0xf]
        %v1008 = vld [vmem:[#allocation2 + $0x14] sm:$0xf]
        %v1009 = vld [vmem:[#allocation2 + $0x18] sm:$0x1]
        %s1010 = scalar_lea.vmem [#allocation6], 192
        %v1011 = vld [vmem:[%s1010] sm:$0xf]
        %v1012 = vld [vmem:[%s1010 + $0x4] sm:$0xf]
        %v1013 = vld [vmem:[%s1010 + $0x8] sm:$0xf]
        %v1014 = vld [vmem:[%s1010 + $0xc] sm:$0xf]
        %v1015 = vld [vmem:[%s1010 + $0x10] sm:$0xf]
        %v1016 = vld [vmem:[%s1010 + $0x14] sm:$0xf]
        %v1017 = vld [vmem:[%s1010 + $0x18] sm:$0xf]
        %v1018 = vld [vmem:[%s1010 + $0x1c] sm:$0xf]
        %v1019 = vld [vmem:[%s1010 + $0x20] sm:$0xf]
        %v1020 = vld [vmem:[%s1010 + $0x24] sm:$0xf]
        %v1021 = vld [vmem:[%s1010 + $0x28] sm:$0xf]
        %v1022 = vld [vmem:[%s1010 + $0x2c] sm:$0xf]
        %v1023 = vld [vmem:[%s1010 + $0x30] sm:$0xf]
        %v1024 = vld [vmem:[%s1010 + $0x34] sm:$0xf]
        %v1025 = vld [vmem:[%s1010 + $0x38] sm:$0xf]
        %v1026 = vld [vmem:[%s1010 + $0x3c] sm:$0xf]
        %v1033 = vunpack.c.l.b16 %v1004
        %v1034 = vunpack.c.l.b16 %v1005
        %v1035 = vunpack.c.l.b16 %v1006
        %v1036 = vunpack.c.l.b16 %v1007
        %v1037 = vunpack.c.l.b16 %v1008
        %v1038 = vunpack.c.l.b16 %v1009
        %v1039 = vpack.c.b16 %v1034, %v1033
        %v1040 = vpack.c.b16 %v1036, %v1035
        %v1041 = vpack.c.b16 %v1038, %v1037
        %v1042 = vrot.slane %v1039, 1
        %v1043 = vrot.slane %v1040, 1
        %v1044 = vsel %vm886, %v1042, %v1043
        %v1045 = vrot.slane %v1041, 1
        %v1046 = vsel %vm886, %v1043, %v1045
        %v1066 = vunpack.c.l.b16 %v1011
        %v1067 = vunpack.c.l.b16 %v1012
        %v1068 = vunpack.c.l.b16 %v1013
        %v1069 = vunpack.c.l.b16 %v1014
        %v1070 = vunpack.c.l.b16 %v1015
        %v1071 = vunpack.c.l.b16 %v1016
        %v1072 = vunpack.c.l.b16 %v1017
        %v1073 = vunpack.c.l.b16 %v1018
        %v1074 = vunpack.c.l.b16 %v1019
        %v1075 = vunpack.c.l.b16 %v1020
        %v1076 = vunpack.c.l.b16 %v1021
        %v1077 = vunpack.c.l.b16 %v1022
        %v1078 = vunpack.c.l.b16 %v1023
        %v1079 = vunpack.c.l.b16 %v1024
        %v1080 = vunpack.c.l.b16 %v1025
        %v1081 = vunpack.c.l.b16 %v1026
        %v1082 = vpack.c.b16 %v1067, %v1066
        %v1083 = vpack.c.b16 %v1069, %v1068
        %v1084 = vpack.c.b16 %v1071, %v1070
        %v1085 = vpack.c.b16 %v1073, %v1072
        %v1086 = vpack.c.b16 %v1075, %v1074
        %v1087 = vpack.c.b16 %v1077, %v1076
        %v1088 = vpack.c.b16 %v1079, %v1078
        %v1089 = vpack.c.b16 %v1081, %v1080
        %1098 = vmatprep.subr.bf16.mxu0 0
        %1099 = vmatpush1.bf16.msra.mxu0 %v1082
        %1100 = vmatprep.subr.bf16.mxu0 0
        %1101 = vmatpush1.bf16.msra.mxu0 %v1083
        %1102 = vmatprep.subr.bf16.mxu0 0
        %1103 = vmatpush1.bf16.msra.mxu0 %v1084
        %1104 = vmatprep.subr.bf16.mxu0 0
        %1105 = vmatpush1.bf16.msra.mxu0 %v1085
        %1106 = vmatprep.subr.bf16.mxu0 0
        %1107 = vmatpush1.bf16.msra.mxu0 %v1086
        %1108 = vmatprep.subr.bf16.mxu0 0
        %1109 = vmatpush1.bf16.msra.mxu0 %v1087
        %1110 = vmatprep.subr.bf16.mxu0 0
        %1111 = vmatpush1.bf16.msra.mxu0 %v1088
        %1112 = vmatprep.subr.bf16.mxu0 0
        %1113 = vmatpush1.bf16.msra.mxu0 %v1089
        %1114 = vmatprep.subr.bf16.mxu0 0
        %1115 = vmatpush1.bf16.msra.mxu0 0
        %1116 = vmatprep.subr.bf16.mxu0 0
        %1117 = vmatpush1.bf16.msra.mxu0 0
        %1118 = vmatprep.subr.bf16.mxu0 0
        %1119 = vmatpush1.bf16.msra.mxu0 0
        %1120 = vmatprep.subr.bf16.mxu0 0
        %1121 = vmatpush1.bf16.msra.mxu0 0
        %1122 = vmatprep.subr.bf16.mxu0 0
        %1123 = vmatpush1.bf16.msra.mxu0 0
        %1124 = vmatprep.subr.bf16.mxu0 0
        %1125 = vmatpush1.bf16.msra.mxu0 0
        %1126 = vmatprep.subr.bf16.mxu0 0
        %1127 = vmatpush1.bf16.msra.mxu0 0
        %1128 = vmatprep.subr.bf16.mxu0 0
        %1129 = vmatpush1.bf16.msra.mxu0 0
        %1130 = vmatprep.mubr.bf16.mxu0 0
        %1131 = vmatmul.mubr.bf16.gmra.mrb[0].mxu0 %v1044
        %v1132 = vpop.f32.mrb[0].mxu0
        %v1133 = vadd.f32 0.0, %v1132
        %v1134 = vpop.f32.mrb[0].mxu0
        %v1135 = vpop.f32.mrb[0].mxu0
        %v1136 = vadd.f32 0.0, %v1135
        %v1137 = vpop.f32.mrb[0].mxu0
        %1138 = vmatprep.mubr.bf16.mxu0 0
        %1139 = vmatmul.mubr.bf16.gmra.mrb[0].mxu0 %v1046
        %v1140 = vpop.f32.mrb[0].mxu0
        %v1141 = vadd.f32 0.0, %v1140
        %v1142 = vpop.f32.mrb[0].mxu0
        %v1143 = vpop.f32.mrb[0].mxu0
        %v1144 = vadd.f32 0.0, %v1143
        %v1145 = vpop.f32.mrb[0].mxu0
        %1146 = vmatprep.mubr.bf16.mxu0 0
        %1147 = vmatmul.mubr.bf16.gmra.mrb[0].mxu0 %v1045
        %v1148 = vpop.f32.mrb[0].mxu0
        %v1149 = vadd.f32 0.0, %v1148
        %v1150 = vpop.f32.mrb[0].mxu0
        %v1151 = vpop.f32.mrb[0].mxu0
        %v1152 = vpop.f32.mrb[0].mxu0
        %1153 = vdwg.mxu0
        %v1154 = vadd.f32 %v999, %v1133
        %v1155 = vadd.f32 %v1000, %v1136
        %v1156 = vadd.f32 %v1001, %v1141
        %v1157 = vadd.f32 %v1002, %v1144
        %v1158 = vadd.f32 %v1003, %v1149
        %v1159 = vld [vmem:[#allocation2 + $0x18] sm:$0x3]
        %s1160 = scalar_lea.vmem [#allocation6], 256
        %v1161 = vld [vmem:[%s1160] sm:$0xf]
        %v1162 = vld [vmem:[%s1160 + $0x4] sm:$0xf]
        %v1163 = vld [vmem:[%s1160 + $0x8] sm:$0xf]
        %v1164 = vld [vmem:[%s1160 + $0xc] sm:$0xf]
        %v1165 = vld [vmem:[%s1160 + $0x10] sm:$0xf]
        %v1166 = vld [vmem:[%s1160 + $0x14] sm:$0xf]
        %v1167 = vld [vmem:[%s1160 + $0x18] sm:$0xf]
        %v1168 = vld [vmem:[%s1160 + $0x1c] sm:$0xf]
        %v1169 = vld [vmem:[%s1160 + $0x20] sm:$0xf]
        %v1170 = vld [vmem:[%s1160 + $0x24] sm:$0xf]
        %v1171 = vld [vmem:[%s1160 + $0x28] sm:$0xf]
        %v1172 = vld [vmem:[%s1160 + $0x2c] sm:$0xf]
        %v1173 = vld [vmem:[%s1160 + $0x30] sm:$0xf]
        %v1174 = vld [vmem:[%s1160 + $0x34] sm:$0xf]
        %v1175 = vld [vmem:[%s1160 + $0x38] sm:$0xf]
        %v1176 = vld [vmem:[%s1160 + $0x3c] sm:$0xf]
        %v1178 = vunpack.c.l.b16 %v1159
        %v1179 = vpack.c.b16 %v1178, %v1037
        %vm1180 = vsmask.f32 6400
        %v1182 = vshrl.u32 %v1039, 16
        %v1184 = vrot.slane %v1182, 1
        %v1185 = vshll.u32 %v1039, 16
        %v1187 = vrot.slane %v1185, 2
        %v1188 = vor.u32 %v1184, %v1187
        %v1190 = vshrl.u32 %v1040, 16
        %v1192 = vrot.slane %v1190, 1
        %v1193 = vshll.u32 %v1040, 16
        %v1195 = vrot.slane %v1193, 2
        %v1196 = vor.u32 %v1192, %v1195
        %v1197 = vsel %vm1180, %v1188, %v1196
        %v1199 = vshrl.u32 %v1179, 16
        %v1201 = vrot.slane %v1199, 1
        %v1202 = vshll.u32 %v1179, 16
        %v1204 = vrot.slane %v1202, 2
        %v1205 = vor.u32 %v1201, %v1204
        %v1206 = vsel %vm1180, %v1196, %v1205
        %v1226 = vunpack.c.l.b16 %v1161
        %v1227 = vunpack.c.l.b16 %v1162
        %v1228 = vunpack.c.l.b16 %v1163
        %v1229 = vunpack.c.l.b16 %v1164
        %v1230 = vunpack.c.l.b16 %v1165
        %v1231 = vunpack.c.l.b16 %v1166
        %v1232 = vunpack.c.l.b16 %v1167
        %v1233 = vunpack.c.l.b16 %v1168
        %v1234 = vunpack.c.l.b16 %v1169
        %v1235 = vunpack.c.l.b16 %v1170
        %v1236 = vunpack.c.l.b16 %v1171
        %v1237 = vunpack.c.l.b16 %v1172
        %v1238 = vunpack.c.l.b16 %v1173
        %v1239 = vunpack.c.l.b16 %v1174
        %v1240 = vunpack.c.l.b16 %v1175
        %v1241 = vunpack.c.l.b16 %v1176
        %v1242 = vpack.c.b16 %v1227, %v1226
        %v1243 = vpack.c.b16 %v1229, %v1228
        %v1244 = vpack.c.b16 %v1231, %v1230
        %v1245 = vpack.c.b16 %v1233, %v1232
        %v1246 = vpack.c.b16 %v1235, %v1234
        %v1247 = vpack.c.b16 %v1237, %v1236
        %v1248 = vpack.c.b16 %v1239, %v1238
        %v1249 = vpack.c.b16 %v1241, %v1240
        %1258 = vmatprep.subr.bf16.mxu0 0
        %1259 = vmatpush1.bf16.msra.mxu0 %v1242
        %1260 = vmatprep.subr.bf16.mxu0 0
        %1261 = vmatpush1.bf16.msra.mxu0 %v1243
        %1262 = vmatprep.subr.bf16.mxu0 0
        %1263 = vmatpush1.bf16.msra.mxu0 %v1244
        %1264 = vmatprep.subr.bf16.mxu0 0
        %1265 = vmatpush1.bf16.msra.mxu0 %v1245
        %1266 = vmatprep.subr.bf16.mxu0 0
        %1267 = vmatpush1.bf16.msra.mxu0 %v1246
        %1268 = vmatprep.subr.bf16.mxu0 0
        %1269 = vmatpush1.bf16.msra.mxu0 %v1247
        %1270 = vmatprep.subr.bf16.mxu0 0
        %1271 = vmatpush1.bf16.msra.mxu0 %v1248
        %1272 = vmatprep.subr.bf16.mxu0 0
        %1273 = vmatpush1.bf16.msra.mxu0 %v1249
        %1274 = vmatprep.subr.bf16.mxu0 0
        %1275 = vmatpush1.bf16.msra.mxu0 0
        %1276 = vmatprep.subr.bf16.mxu0 0
        %1277 = vmatpush1.bf16.msra.mxu0 0
        %1278 = vmatprep.subr.bf16.mxu0 0
        %1279 = vmatpush1.bf16.msra.mxu0 0
        %1280 = vmatprep.subr.bf16.mxu0 0
        %1281 = vmatpush1.bf16.msra.mxu0 0
        %1282 = vmatprep.subr.bf16.mxu0 0
        %1283 = vmatpush1.bf16.msra.mxu0 0
        %1284 = vmatprep.subr.bf16.mxu0 0
        %1285 = vmatpush1.bf16.msra.mxu0 0
        %1286 = vmatprep.subr.bf16.mxu0 0
        %1287 = vmatpush1.bf16.msra.mxu0 0
        %1288 = vmatprep.subr.bf16.mxu0 0
        %1289 = vmatpush1.bf16.msra.mxu0 0
        %1290 = vmatprep.mubr.bf16.mxu0 0
        %1291 = vmatmul.mubr.bf16.gmra.mrb[0].mxu0 %v1197
        %v1292 = vpop.f32.mrb[0].mxu0
        %v1293 = vadd.f32 0.0, %v1292
        %v1294 = vpop.f32.mrb[0].mxu0
        %v1295 = vpop.f32.mrb[0].mxu0
        %v1296 = vadd.f32 0.0, %v1295
        %v1297 = vpop.f32.mrb[0].mxu0
        %1298 = vmatprep.mubr.bf16.mxu0 0
        %1299 = vmatmul.mubr.bf16.gmra.mrb[0].mxu0 %v1206
        %v1300 = vpop.f32.mrb[0].mxu0
        %v1301 = vadd.f32 0.0, %v1300
        %v1302 = vpop.f32.mrb[0].mxu0
        %v1303 = vpop.f32.mrb[0].mxu0
        %v1304 = vadd.f32 0.0, %v1303
        %v1305 = vpop.f32.mrb[0].mxu0
        %1306 = vmatprep.mubr.bf16.mxu0 0
        %1307 = vmatmul.mubr.bf16.gmra.mrb[0].mxu0 %v1205
        %v1308 = vpop.f32.mrb[0].mxu0
        %v1309 = vadd.f32 0.0, %v1308
        %v1310 = vpop.f32.mrb[0].mxu0
        %v1311 = vpop.f32.mrb[0].mxu0
        %v1312 = vpop.f32.mrb[0].mxu0
        %1313 = vdwg.mxu0
        %v1314 = vadd.f32 %v1154, %v1293
        %v1315 = vadd.f32 %v1155, %v1296
        %v1316 = vadd.f32 %v1156, %v1301
        %v1317 = vadd.f32 %v1157, %v1304
        %v1318 = vadd.f32 %v1158, %v1309
        %v1319 = vld [vmem:[#allocation2 + $0x4] sm:$0xc]
        %s1320 = scalar_lea.vmem [#allocation6], 320
        %v1321 = vld [vmem:[%s1320] sm:$0xf]
        %v1322 = vld [vmem:[%s1320 + $0x4] sm:$0xf]
        %v1323 = vld [vmem:[%s1320 + $0x8] sm:$0xf]
        %v1324 = vld [vmem:[%s1320 + $0xc] sm:$0xf]
        %v1325 = vld [vmem:[%s1320 + $0x10] sm:$0xf]
        %v1326 = vld [vmem:[%s1320 + $0x14] sm:$0xf]
        %v1327 = vld [vmem:[%s1320 + $0x18] sm:$0xf]
        %v1328 = vld [vmem:[%s1320 + $0x1c] sm:$0xf]
        %v1329 = vld [vmem:[%s1320 + $0x20] sm:$0xf]
        %v1330 = vld [vmem:[%s1320 + $0x24] sm:$0xf]
        %v1331 = vld [vmem:[%s1320 + $0x28] sm:$0xf]
        %v1332 = vld [vmem:[%s1320 + $0x2c] sm:$0xf]
        %v1333 = vld [vmem:[%s1320 + $0x30] sm:$0xf]
        %v1334 = vld [vmem:[%s1320 + $0x34] sm:$0xf]
        %v1335 = vld [vmem:[%s1320 + $0x38] sm:$0xf]
        %v1336 = vld [vmem:[%s1320 + $0x3c] sm:$0xf]
        %v1338 = vunpack.c.l.b16 %v1319
        %v1339 = vpack.c.b16 %v1034, %v1338
        %vm1340 = vcmask 1045504
        %v1341 = vrot.slane %v1339, 2
        %v1342 = vrot.slane %v1040, 2
        %v1343 = vsel %vm1340, %v1341, %v1342
        %v1344 = vrot.slane %v1179, 2
        %v1345 = vsel %vm1340, %v1342, %v1344
        %v1365 = vunpack.c.l.b16 %v1321
        %v1366 = vunpack.c.l.b16 %v1322
        %v1367 = vunpack.c.l.b16 %v1323
        %v1368 = vunpack.c.l.b16 %v1324
        %v1369 = vunpack.c.l.b16 %v1325
        %v1370 = vunpack.c.l.b16 %v1326
        %v1371 = vunpack.c.l.b16 %v1327
        %v1372 = vunpack.c.l.b16 %v1328
        %v1373 = vunpack.c.l.b16 %v1329
        %v1374 = vunpack.c.l.b16 %v1330
        %v1375 = vunpack.c.l.b16 %v1331
        %v1376 = vunpack.c.l.b16 %v1332
        %v1377 = vunpack.c.l.b16 %v1333
        %v1378 = vunpack.c.l.b16 %v1334
        %v1379 = vunpack.c.l.b16 %v1335
        %v1380 = vunpack.c.l.b16 %v1336
        %v1381 = vpack.c.b16 %v1366, %v1365
        %v1382 = vpack.c.b16 %v1368, %v1367
        %v1383 = vpack.c.b16 %v1370, %v1369
        %v1384 = vpack.c.b16 %v1372, %v1371
        %v1385 = vpack.c.b16 %v1374, %v1373
        %v1386 = vpack.c.b16 %v1376, %v1375
        %v1387 = vpack.c.b16 %v1378, %v1377
        %v1388 = vpack.c.b16 %v1380, %v1379
        %1397 = vmatprep.subr.bf16.mxu0 0
        %1398 = vmatpush1.bf16.msra.mxu0 %v1381
        %1399 = vmatprep.subr.bf16.mxu0 0
        %1400 = vmatpush1.bf16.msra.mxu0 %v1382
        %1401 = vmatprep.subr.bf16.mxu0 0
        %1402 = vmatpush1.bf16.msra.mxu0 %v1383
        %1403 = vmatprep.subr.bf16.mxu0 0
        %1404 = vmatpush1.bf16.msra.mxu0 %v1384
        %1405 = vmatprep.subr.bf16.mxu0 0
        %1406 = vmatpush1.bf16.msra.mxu0 %v1385
        %1407 = vmatprep.subr.bf16.mxu0 0
        %1408 = vmatpush1.bf16.msra.mxu0 %v1386
        %1409 = vmatprep.subr.bf16.mxu0 0
        %1410 = vmatpush1.bf16.msra.mxu0 %v1387
        %1411 = vmatprep.subr.bf16.mxu0 0
        %1412 = vmatpush1.bf16.msra.mxu0 %v1388
        %1413 = vmatprep.subr.bf16.mxu0 0
        %1414 = vmatpush1.bf16.msra.mxu0 0
        %1415 = vmatprep.subr.bf16.mxu0 0
        %1416 = vmatpush1.bf16.msra.mxu0 0
        %1417 = vmatprep.subr.bf16.mxu0 0
        %1418 = vmatpush1.bf16.msra.mxu0 0
        %1419 = vmatprep.subr.bf16.mxu0 0
        %1420 = vmatpush1.bf16.msra.mxu0 0
        %1421 = vmatprep.subr.bf16.mxu0 0
        %1422 = vmatpush1.bf16.msra.mxu0 0
        %1423 = vmatprep.subr.bf16.mxu0 0
        %1424 = vmatpush1.bf16.msra.mxu0 0
        %1425 = vmatprep.subr.bf16.mxu0 0
        %1426 = vmatpush1.bf16.msra.mxu0 0
        %1427 = vmatprep.subr.bf16.mxu0 0
        %1428 = vmatpush1.bf16.msra.mxu0 0
        %1429 = vmatprep.mubr.bf16.mxu0 0
        %1430 = vmatmul.mubr.bf16.gmra.mrb[0].mxu0 %v1343
        %v1431 = vpop.f32.mrb[0].mxu0
        %v1432 = vadd.f32 0.0, %v1431
        %v1433 = vpop.f32.mrb[0].mxu0
        %v1434 = vpop.f32.mrb[0].mxu0
        %v1435 = vadd.f32 0.0, %v1434
        %v1436 = vpop.f32.mrb[0].mxu0
        %1437 = vmatprep.mubr.bf16.mxu0 0
        %1438 = vmatmul.mubr.bf16.gmra.mrb[0].mxu0 %v1345
        %v1439 = vpop.f32.mrb[0].mxu0
        %v1440 = vadd.f32 0.0, %v1439
        %v1441 = vpop.f32.mrb[0].mxu0
        %v1442 = vpop.f32.mrb[0].mxu0
        %v1443 = vadd.f32 0.0, %v1442
        %v1444 = vpop.f32.mrb[0].mxu0
        %1445 = vmatprep.mubr.bf16.mxu0 0
        %1446 = vmatmul.mubr.bf16.gmra.mrb[0].mxu0 %v1344
        %v1447 = vpop.f32.mrb[0].mxu0
        %v1448 = vadd.f32 0.0, %v1447
        %v1449 = vpop.f32.mrb[0].mxu0
        %v1450 = vpop.f32.mrb[0].mxu0
        %v1451 = vpop.f32.mrb[0].mxu0
        %1452 = vdwg.mxu0
        %v1453 = vadd.f32 %v1314, %v1432
        %v1454 = vadd.f32 %v1315, %v1435
        %v1455 = vadd.f32 %v1316, %v1440
        %v1456 = vadd.f32 %v1317, %v1443
        %v1457 = vadd.f32 %v1318, %v1448
        %v1458 = vld [vmem:[#allocation2 + $0x8] sm:$0xc]
        %v1459 = vld [vmem:[#allocation2 + $0xc] sm:$0xf]
        %v1460 = vld [vmem:[#allocation2 + $0x10] sm:$0xf]
        %v1461 = vld [vmem:[#allocation2 + $0x14] sm:$0xf]
        %v1462 = vld [vmem:[#allocation2 + $0x18] sm:$0xf]
        %v1463 = vld [vmem:[#allocation2 + $0x1c] sm:$0x3]
        %s1464 = scalar_lea.vmem [#allocation6], 384
        %v1465 = vld [vmem:[%s1464] sm:$0xf]
        %v1466 = vld [vmem:[%s1464 + $0x4] sm:$0xf]
        %v1467 = vld [vmem:[%s1464 + $0x8] sm:$0xf]
        %v1468 = vld [vmem:[%s1464 + $0xc] sm:$0xf]
        %v1469 = vld [vmem:[%s1464 + $0x10] sm:$0xf]
        %v1470 = vld [vmem:[%s1464 + $0x14] sm:$0xf]
        %v1471 = vld [vmem:[%s1464 + $0x18] sm:$0xf]
        %v1472 = vld [vmem:[%s1464 + $0x1c] sm:$0xf]
        %v1473 = vld [vmem:[%s1464 + $0x20] sm:$0xf]
        %v1474 = vld [vmem:[%s1464 + $0x24] sm:$0xf]
        %v1475 = vld [vmem:[%s1464 + $0x28] sm:$0xf]
        %v1476 = vld [vmem:[%s1464 + $0x2c] sm:$0xf]
        %v1477 = vld [vmem:[%s1464 + $0x30] sm:$0xf]
        %v1478 = vld [vmem:[%s1464 + $0x34] sm:$0xf]
        %v1479 = vld [vmem:[%s1464 + $0x38] sm:$0xf]
        %v1480 = vld [vmem:[%s1464 + $0x3c] sm:$0xf]
        %v1487 = vunpack.c.l.b16 %v1458
        %v1488 = vunpack.c.l.b16 %v1459
        %v1489 = vunpack.c.l.b16 %v1460
        %v1490 = vunpack.c.l.b16 %v1461
        %v1491 = vunpack.c.l.b16 %v1462
        %v1492 = vunpack.c.l.b16 %v1463
        %v1493 = vpack.c.b16 %v1488, %v1487
        %v1494 = vpack.c.b16 %v1490, %v1489
        %v1495 = vpack.c.b16 %v1492, %v1491
        %v1496 = vrot.slane %v1493, 2
        %v1497 = vrot.slane %v1494, 2
        %v1498 = vsel %vm1340, %v1496, %v1497
        %v1499 = vrot.slane %v1495, 2
        %v1500 = vsel %vm1340, %v1497, %v1499
        %v1520 = vunpack.c.l.b16 %v1465
        %v1521 = vunpack.c.l.b16 %v1466
        %v1522 = vunpack.c.l.b16 %v1467
        %v1523 = vunpack.c.l.b16 %v1468
        %v1524 = vunpack.c.l.b16 %v1469
        %v1525 = vunpack.c.l.b16 %v1470
        %v1526 = vunpack.c.l.b16 %v1471
        %v1527 = vunpack.c.l.b16 %v1472
        %v1528 = vunpack.c.l.b16 %v1473
        %v1529 = vunpack.c.l.b16 %v1474
        %v1530 = vunpack.c.l.b16 %v1475
        %v1531 = vunpack.c.l.b16 %v1476
        %v1532 = vunpack.c.l.b16 %v1477
        %v1533 = vunpack.c.l.b16 %v1478
        %v1534 = vunpack.c.l.b16 %v1479
        %v1535 = vunpack.c.l.b16 %v1480
        %v1536 = vpack.c.b16 %v1521, %v1520
        %v1537 = vpack.c.b16 %v1523, %v1522
        %v1538 = vpack.c.b16 %v1525, %v1524
        %v1539 = vpack.c.b16 %v1527, %v1526
        %v1540 = vpack.c.b16 %v1529, %v1528
        %v1541 = vpack.c.b16 %v1531, %v1530
        %v1542 = vpack.c.b16 %v1533, %v1532
        %v1543 = vpack.c.b16 %v1535, %v1534
        %1552 = vmatprep.subr.bf16.mxu0 0
        %1553 = vmatpush1.bf16.msra.mxu0 %v1536
        %1554 = vmatprep.subr.bf16.mxu0 0
        %1555 = vmatpush1.bf16.msra.mxu0 %v1537
        %1556 = vmatprep.subr.bf16.mxu0 0
        %1557 = vmatpush1.bf16.msra.mxu0 %v1538
        %1558 = vmatprep.subr.bf16.mxu0 0
        %1559 = vmatpush1.bf16.msra.mxu0 %v1539
        %1560 = vmatprep.subr.bf16.mxu0 0
        %1561 = vmatpush1.bf16.msra.mxu0 %v1540
        %1562 = vmatprep.subr.bf16.mxu0 0
        %1563 = vmatpush1.bf16.msra.mxu0 %v1541
        %1564 = vmatprep.subr.bf16.mxu0 0
        %1565 = vmatpush1.bf16.msra.mxu0 %v1542
        %1566 = vmatprep.subr.bf16.mxu0 0
        %1567 = vmatpush1.bf16.msra.mxu0 %v1543
        %1568 = vmatprep.subr.bf16.mxu0 0
        %1569 = vmatpush1.bf16.msra.mxu0 0
        %1570 = vmatprep.subr.bf16.mxu0 0
        %1571 = vmatpush1.bf16.msra.mxu0 0
        %1572 = vmatprep.subr.bf16.mxu0 0
        %1573 = vmatpush1.bf16.msra.mxu0 0
        %1574 = vmatprep.subr.bf16.mxu0 0
        %1575 = vmatpush1.bf16.msra.mxu0 0
        %1576 = vmatprep.subr.bf16.mxu0 0
        %1577 = vmatpush1.bf16.msra.mxu0 0
        %1578 = vmatprep.subr.bf16.mxu0 0
        %1579 = vmatpush1.bf16.msra.mxu0 0
        %1580 = vmatprep.subr.bf16.mxu0 0
        %1581 = vmatpush1.bf16.msra.mxu0 0
        %1582 = vmatprep.subr.bf16.mxu0 0
        %1583 = vmatpush1.bf16.msra.mxu0 0
        %1584 = vmatprep.mubr.bf16.mxu0 0
        %1585 = vmatmul.mubr.bf16.gmra.mrb[0].mxu0 %v1498
        %v1586 = vpop.f32.mrb[0].mxu0
        %v1587 = vadd.f32 0.0, %v1586
        %v1588 = vpop.f32.mrb[0].mxu0
        %v1589 = vpop.f32.mrb[0].mxu0
        %v1590 = vadd.f32 0.0, %v1589
        %v1591 = vpop.f32.mrb[0].mxu0
        %1592 = vmatprep.mubr.bf16.mxu0 0
        %1593 = vmatmul.mubr.bf16.gmra.mrb[0].mxu0 %v1500
        %v1594 = vpop.f32.mrb[0].mxu0
        %v1595 = vadd.f32 0.0, %v1594
        %v1596 = vpop.f32.mrb[0].mxu0
        %v1597 = vpop.f32.mrb[0].mxu0
        %v1598 = vadd.f32 0.0, %v1597
        %v1599 = vpop.f32.mrb[0].mxu0
        %1600 = vmatprep.mubr.bf16.mxu0 0
        %1601 = vmatmul.mubr.bf16.gmra.mrb[0].mxu0 %v1499
        %v1602 = vpop.f32.mrb[0].mxu0
        %v1603 = vadd.f32 0.0, %v1602
        %v1604 = vpop.f32.mrb[0].mxu0
        %v1605 = vpop.f32.mrb[0].mxu0
        %v1606 = vpop.f32.mrb[0].mxu0
        %1607 = vdwg.mxu0
        %v1608 = vadd.f32 %v1453, %v1587
        %v1609 = vadd.f32 %v1454, %v1590
        %v1610 = vadd.f32 %v1455, %v1595
        %v1611 = vadd.f32 %v1456, %v1598
        %v1612 = vadd.f32 %v1457, %v1603
        %v1613 = vld [vmem:[#allocation2 + $0x1c] sm:$0x7]
        %s1614 = scalar_lea.vmem [#allocation6], 448
        %v1615 = vld [vmem:[%s1614] sm:$0xf]
        %v1616 = vld [vmem:[%s1614 + $0x4] sm:$0xf]
        %v1617 = vld [vmem:[%s1614 + $0x8] sm:$0xf]
        %v1618 = vld [vmem:[%s1614 + $0xc] sm:$0xf]
        %v1619 = vld [vmem:[%s1614 + $0x10] sm:$0xf]
        %v1620 = vld [vmem:[%s1614 + $0x14] sm:$0xf]
        %v1621 = vld [vmem:[%s1614 + $0x18] sm:$0xf]
        %v1622 = vld [vmem:[%s1614 + $0x1c] sm:$0xf]
        %v1623 = vld [vmem:[%s1614 + $0x20] sm:$0xf]
        %v1624 = vld [vmem:[%s1614 + $0x24] sm:$0xf]
        %v1625 = vld [vmem:[%s1614 + $0x28] sm:$0xf]
        %v1626 = vld [vmem:[%s1614 + $0x2c] sm:$0xf]
        %v1627 = vld [vmem:[%s1614 + $0x30] sm:$0xf]
        %v1628 = vld [vmem:[%s1614 + $0x34] sm:$0xf]
        %v1629 = vld [vmem:[%s1614 + $0x38] sm:$0xf]
        %v1630 = vld [vmem:[%s1614 + $0x3c] sm:$0xf]
        %v1632 = vunpack.c.l.b16 %v1613
        %v1633 = vpack.c.b16 %v1632, %v1491
        %vm1634 = vsmask.f32 5376
        %v1636 = vshrl.u32 %v1493, 16
        %v1638 = vrot.slane %v1636, 2
        %v1639 = vshll.u32 %v1493, 16
        %v1641 = vrot.slane %v1639, 3
        %v1642 = vor.u32 %v1638, %v1641
        %v1644 = vshrl.u32 %v1494, 16
        %v1646 = vrot.slane %v1644, 2
        %v1647 = vshll.u32 %v1494, 16
        %v1649 = vrot.slane %v1647, 3
        %v1650 = vor.u32 %v1646, %v1649
        %v1651 = vsel %vm1634, %v1642, %v1650
        %v1653 = vshrl.u32 %v1633, 16
        %v1655 = vrot.slane %v1653, 2
        %v1656 = vshll.u32 %v1633, 16
        %v1658 = vrot.slane %v1656, 3
        %v1659 = vor.u32 %v1655, %v1658
        %v1660 = vsel %vm1634, %v1650, %v1659
        %v1680 = vunpack.c.l.b16 %v1615
        %v1681 = vunpack.c.l.b16 %v1616
        %v1682 = vunpack.c.l.b16 %v1617
        %v1683 = vunpack.c.l.b16 %v1618
        %v1684 = vunpack.c.l.b16 %v1619
        %v1685 = vunpack.c.l.b16 %v1620
        %v1686 = vunpack.c.l.b16 %v1621
        %v1687 = vunpack.c.l.b16 %v1622
        %v1688 = vunpack.c.l.b16 %v1623
        %v1689 = vunpack.c.l.b16 %v1624
        %v1690 = vunpack.c.l.b16 %v1625
        %v1691 = vunpack.c.l.b16 %v1626
        %v1692 = vunpack.c.l.b16 %v1627
        %v1693 = vunpack.c.l.b16 %v1628
        %v1694 = vunpack.c.l.b16 %v1629
        %v1695 = vunpack.c.l.b16 %v1630
        %v1696 = vpack.c.b16 %v1681, %v1680
        %v1697 = vpack.c.b16 %v1683, %v1682
        %v1698 = vpack.c.b16 %v1685, %v1684
        %v1699 = vpack.c.b16 %v1687, %v1686
        %v1700 = vpack.c.b16 %v1689, %v1688
        %v1701 = vpack.c.b16 %v1691, %v1690
        %v1702 = vpack.c.b16 %v1693, %v1692
        %v1703 = vpack.c.b16 %v1695, %v1694
        %1712 = vmatprep.subr.bf16.mxu0 0
        %1713 = vmatpush1.bf16.msra.mxu0 %v1696
        %1714 = vmatprep.subr.bf16.mxu0 0
        %1715 = vmatpush1.bf16.msra.mxu0 %v1697
        %1716 = vmatprep.subr.bf16.mxu0 0
        %1717 = vmatpush1.bf16.msra.mxu0 %v1698
        %1718 = vmatprep.subr.bf16.mxu0 0
        %1719 = vmatpush1.bf16.msra.mxu0 %v1699
        %1720 = vmatprep.subr.bf16.mxu0 0
        %1721 = vmatpush1.bf16.msra.mxu0 %v1700
        %1722 = vmatprep.subr.bf16.mxu0 0
        %1723 = vmatpush1.bf16.msra.mxu0 %v1701
        %1724 = vmatprep.subr.bf16.mxu0 0
        %1725 = vmatpush1.bf16.msra.mxu0 %v1702
        %1726 = vmatprep.subr.bf16.mxu0 0
        %1727 = vmatpush1.bf16.msra.mxu0 %v1703
        %1728 = vmatprep.subr.bf16.mxu0 0
        %1729 = vmatpush1.bf16.msra.mxu0 0
        %1730 = vmatprep.subr.bf16.mxu0 0
        %1731 = vmatpush1.bf16.msra.mxu0 0
        %1732 = vmatprep.subr.bf16.mxu0 0
        %1733 = vmatpush1.bf16.msra.mxu0 0
        %1734 = vmatprep.subr.bf16.mxu0 0
        %1735 = vmatpush1.bf16.msra.mxu0 0
        %1736 = vmatprep.subr.bf16.mxu0 0
        %1737 = vmatpush1.bf16.msra.mxu0 0
        %1738 = vmatprep.subr.bf16.mxu0 0
        %1739 = vmatpush1.bf16.msra.mxu0 0
        %1740 = vmatprep.subr.bf16.mxu0 0
        %1741 = vmatpush1.bf16.msra.mxu0 0
        %1742 = vmatprep.subr.bf16.mxu0 0
        %1743 = vmatpush1.bf16.msra.mxu0 0
        %1744 = vmatprep.mubr.bf16.mxu0 0
        %1745 = vmatmul.mubr.bf16.gmra.mrb[0].mxu0 %v1651
        %v1746 = vpop.f32.mrb[0].mxu0
        %v1747 = vadd.f32 0.0, %v1746
        %v1748 = vpop.f32.mrb[0].mxu0
        %v1749 = vpop.f32.mrb[0].mxu0
        %v1750 = vadd.f32 0.0, %v1749
        %v1751 = vpop.f32.mrb[0].mxu0
        %1752 = vmatprep.mubr.bf16.mxu0 0
        %1753 = vmatmul.mubr.bf16.gmra.mrb[0].mxu0 %v1660
        %v1754 = vpop.f32.mrb[0].mxu0
        %v1755 = vadd.f32 0.0, %v1754
        %v1756 = vpop.f32.mrb[0].mxu0
        %v1757 = vpop.f32.mrb[0].mxu0
        %v1758 = vadd.f32 0.0, %v1757
        %v1759 = vpop.f32.mrb[0].mxu0
        %1760 = vmatprep.mubr.bf16.mxu0 0
        %1761 = vmatmul.mubr.bf16.gmra.mrb[0].mxu0 %v1659
        %v1762 = vpop.f32.mrb[0].mxu0
        %v1763 = vadd.f32 0.0, %v1762
        %v1764 = vpop.f32.mrb[0].mxu0
        %v1765 = vpop.f32.mrb[0].mxu0
        %v1766 = vpop.f32.mrb[0].mxu0
        %1767 = vdwg.mxu0
        %v1768 = vadd.f32 %v1608, %v1747
        %v1769 = vadd.f32 %v1609, %v1750
        %v1770 = vadd.f32 %v1610, %v1755
        %v1771 = vadd.f32 %v1611, %v1758
        %v1772 = vadd.f32 %v1612, %v1763
        %v1773 = vld [vmem:[#allocation2 + $0x8] sm:$0x8]
        %s1774 = scalar_lea.vmem [#allocation6], 512
        %v1775 = vld [vmem:[%s1774] sm:$0xf]
        %v1776 = vld [vmem:[%s1774 + $0x4] sm:$0xf]
        %v1777 = vld [vmem:[%s1774 + $0x8] sm:$0xf]
        %v1778 = vld [vmem:[%s1774 + $0xc] sm:$0xf]
        %v1779 = vld [vmem:[%s1774 + $0x10] sm:$0xf]
        %v1780 = vld [vmem:[%s1774 + $0x14] sm:$0xf]
        %v1781 = vld [vmem:[%s1774 + $0x18] sm:$0xf]
        %v1782 = vld [vmem:[%s1774 + $0x1c] sm:$0xf]
        %v1783 = vld [vmem:[%s1774 + $0x20] sm:$0xf]
        %v1784 = vld [vmem:[%s1774 + $0x24] sm:$0xf]
        %v1785 = vld [vmem:[%s1774 + $0x28] sm:$0xf]
        %v1786 = vld [vmem:[%s1774 + $0x2c] sm:$0xf]
        %v1787 = vld [vmem:[%s1774 + $0x30] sm:$0xf]
        %v1788 = vld [vmem:[%s1774 + $0x34] sm:$0xf]
        %v1789 = vld [vmem:[%s1774 + $0x38] sm:$0xf]
        %v1790 = vld [vmem:[%s1774 + $0x3c] sm:$0xf]
        %v1792 = vunpack.c.l.b16 %v1773
        %v1793 = vpack.c.b16 %v1488, %v1792
        %vm1794 = vcmask 1044480
        %v1795 = vrot.slane %v1793, 3
        %v1796 = vrot.slane %v1494, 3
        %v1797 = vsel %vm1794, %v1795, %v1796
        %v1798 = vrot.slane %v1633, 3
        %v1799 = vsel %vm1794, %v1796, %v1798
        %v1819 = vunpack.c.l.b16 %v1775
        %v1820 = vunpack.c.l.b16 %v1776
        %v1821 = vunpack.c.l.b16 %v1777
        %v1822 = vunpack.c.l.b16 %v1778
        %v1823 = vunpack.c.l.b16 %v1779
        %v1824 = vunpack.c.l.b16 %v1780
        %v1825 = vunpack.c.l.b16 %v1781
        %v1826 = vunpack.c.l.b16 %v1782
        %v1827 = vunpack.c.l.b16 %v1783
        %v1828 = vunpack.c.l.b16 %v1784
        %v1829 = vunpack.c.l.b16 %v1785
        %v1830 = vunpack.c.l.b16 %v1786
        %v1831 = vunpack.c.l.b16 %v1787
        %v1832 = vunpack.c.l.b16 %v1788
        %v1833 = vunpack.c.l.b16 %v1789
        %v1834 = vunpack.c.l.b16 %v1790
        %v1835 = vpack.c.b16 %v1820, %v1819
        %v1836 = vpack.c.b16 %v1822, %v1821
        %v1837 = vpack.c.b16 %v1824, %v1823
        %v1838 = vpack.c.b16 %v1826, %v1825
        %v1839 = vpack.c.b16 %v1828, %v1827
        %v1840 = vpack.c.b16 %v1830, %v1829
        %v1841 = vpack.c.b16 %v1832, %v1831
        %v1842 = vpack.c.b16 %v1834, %v1833
        %1851 = vmatprep.subr.bf16.mxu0 0
        %1852 = vmatpush1.bf16.msra.mxu0 %v1835
        %1853 = vmatprep.subr.bf16.mxu0 0
        %1854 = vmatpush1.bf16.msra.mxu0 %v1836
        %1855 = vmatprep.subr.bf16.mxu0 0
        %1856 = vmatpush1.bf16.msra.mxu0 %v1837
        %1857 = vmatprep.subr.bf16.mxu0 0
        %1858 = vmatpush1.bf16.msra.mxu0 %v1838
        %1859 = vmatprep.subr.bf16.mxu0 0
        %1860 = vmatpush1.bf16.msra.mxu0 %v1839
        %1861 = vmatprep.subr.bf16.mxu0 0
        %1862 = vmatpush1.bf16.msra.mxu0 %v1840
        %1863 = vmatprep.subr.bf16.mxu0 0
        %1864 = vmatpush1.bf16.msra.mxu0 %v1841
        %1865 = vmatprep.subr.bf16.mxu0 0
        %1866 = vmatpush1.bf16.msra.mxu0 %v1842
        %1867 = vmatprep.subr.bf16.mxu0 0
        %1868 = vmatpush1.bf16.msra.mxu0 0
        %1869 = vmatprep.subr.bf16.mxu0 0
        %1870 = vmatpush1.bf16.msra.mxu0 0
        %1871 = vmatprep.subr.bf16.mxu0 0
        %1872 = vmatpush1.bf16.msra.mxu0 0
        %1873 = vmatprep.subr.bf16.mxu0 0
        %1874 = vmatpush1.bf16.msra.mxu0 0
        %1875 = vmatprep.subr.bf16.mxu0 0
        %1876 = vmatpush1.bf16.msra.mxu0 0
        %1877 = vmatprep.subr.bf16.mxu0 0
        %1878 = vmatpush1.bf16.msra.mxu0 0
        %1879 = vmatprep.subr.bf16.mxu0 0
        %1880 = vmatpush1.bf16.msra.mxu0 0
        %1881 = vmatprep.subr.bf16.mxu0 0
        %1882 = vmatpush1.bf16.msra.mxu0 0
        %1883 = vmatprep.mubr.bf16.mxu0 0
        %1884 = vmatmul.mubr.bf16.gmra.mrb[0].mxu0 %v1797
        %v1885 = vpop.f32.mrb[0].mxu0
        %v1886 = vadd.f32 0.0, %v1885
        %v1887 = vpop.f32.mrb[0].mxu0
        %v1888 = vpop.f32.mrb[0].mxu0
        %v1889 = vadd.f32 0.0, %v1888
        %v1890 = vpop.f32.mrb[0].mxu0
        %1891 = vmatprep.mubr.bf16.mxu0 0
        %1892 = vmatmul.mubr.bf16.gmra.mrb[0].mxu0 %v1799
        %v1893 = vpop.f32.mrb[0].mxu0
        %v1894 = vadd.f32 0.0, %v1893
        %v1895 = vpop.f32.mrb[0].mxu0
        %v1896 = vpop.f32.mrb[0].mxu0
        %v1897 = vadd.f32 0.0, %v1896
        %v1898 = vpop.f32.mrb[0].mxu0
        %1899 = vmatprep.mubr.bf16.mxu0 0
        %1900 = vmatmul.mubr.bf16.gmra.mrb[0].mxu0 %v1798
        %v1901 = vpop.f32.mrb[0].mxu0
        %v1902 = vadd.f32 0.0, %v1901
        %v1903 = vpop.f32.mrb[0].mxu0
        %v1904 = vpop.f32.mrb[0].mxu0
        %v1905 = vpop.f32.mrb[0].mxu0
        %1906 = vdwg.mxu0
        %v1907 = vadd.f32 %v1768, %v1886
        %v1908 = vadd.f32 %v1769, %v1889
        %v1909 = vadd.f32 %v1770, %v1894
        %v1910 = vadd.f32 %v1771, %v1897
        %v1911 = vadd.f32 %v1772, %v1902
        %1912 = vst [vmem:[%s424] sm:$0xff] %v1907
        %1913 = vst [vmem:[%s424 + $0x8] sm:$0xff] %v1908
        %1914 = vst [vmem:[%s424 + $0x10] sm:$0xff] %v1909
        %1915 = vst [vmem:[%s424 + $0x18] sm:$0xff] %v1910
        %1916 = vst [vmem:[%s424 + $0x20] sm:$0xff] %v1911
        %v1917 = vld [vmem:[#allocation12] sm:$0xff]
        %v1918 = vld [vmem:[#allocation12 + $0x8] sm:$0xff]
        %v1919 = vld [vmem:[#allocation12 + $0x10] sm:$0xff]
        %v1920 = vld [vmem:[#allocation12 + $0x18] sm:$0xff]
        %v1921 = vld [vmem:[#allocation12 + $0x20] sm:$0xff]
        %p1922 = scmp.eq.s32.totalorder %s33, 0
        %p1923 = scmp.eq.s32.totalorder %s34, 0
        %p1924 = pnand %p1922, %p1923
        %p1925 = pneg %p1924
        // Predicated region
        $region69: #{downsample_forward.4} parent=43 // pred_check
          _
        $region70: #{downsample_forward.4} parent=43 // pred_check_branch
          %1927 = sbr.rel (%p1924) target = $region72
        $region71: #{downsample_forward.4} parent=43 // pred_region
          %1928 = vst [vmem:[#allocation14] sm:$0x1] 0.0
          %1929 = vst [vmem:[#allocation16] sm:$0x1] 0.0
        $region72: #{downsample_forward.4} parent=43 // pred_fallthru
          _
        %1931 = vset.pattern.permute.xlu0 0
        %1932 = vperm.xlu0 %1931, %v1917
        %v1933 = vpop.permute.xlu0 %1932
        %1936 = vset.pattern.permute.xlu0 0
        %1937 = vperm.xlu0 %1936, %v1918
        %v1938 = vpop.permute.xlu0 %1937
        %1941 = vset.pattern.permute.xlu0 0
        %1942 = vperm.xlu0 %1941, %v1919
        %v1943 = vpop.permute.xlu0 %1942
        %1946 = vset.pattern.permute.xlu0 0
        %1947 = vperm.xlu0 %1946, %v1920
        %v1948 = vpop.permute.xlu0 %1947
        %1951 = vset.pattern.permute.xlu0 0
        %1952 = vperm.xlu0 %1951, %v1921
        %v1953 = vpop.permute.xlu0 %1952
        %v1955 = vmul.f32 %v1907, %v1933
        %v1956 = vmul.f32 %v1908, %v1938
        %v1957 = vmul.f32 %v1909, %v1943
        %v1958 = vmul.f32 %v1910, %v1948
        %v1959 = vmul.f32 %v1911, %v1953
        %v1960 = vld [vmem:[#allocation14] sm:$0x1]
        %v1961 = vadd.f32 %v1955, %v1956
        %v1962 = vadd.f32 %v1961, %v1957
        %v1963 = vadd.f32 %v1962, %v1958
        %v1964 = vadd.f32 %v1963, %v1959
        %v1965 = vrot.slane %v1964, 4
        %v1966 = vadd.f32 %v1964, %v1965
        %v1967 = vrot.slane %v1966, 2
        %v1968 = vadd.f32 %v1966, %v1967
        %v1969 = vrot.slane %v1968, 1
        %v1970 = vadd.f32 %v1968, %v1969
        %v1971 = vadd.f32 %v1960, %v1970
        %1972 = vst [vmem:[#allocation14] sm:$0x1] %v1971
        %v1973 = vld [vmem:[#allocation16] sm:$0x1]
        %v1974 = vmul.f32 %v1955, %v1907
        %v1975 = vmul.f32 %v1956, %v1908
        %v1976 = vmul.f32 %v1957, %v1909
        %v1977 = vmul.f32 %v1958, %v1910
        %v1978 = vmul.f32 %v1959, %v1911
        %v1979 = vadd.f32 %v1974, %v1975
        %v1980 = vadd.f32 %v1979, %v1976
        %v1981 = vadd.f32 %v1980, %v1977
        %v1982 = vadd.f32 %v1981, %v1978
        %v1983 = vrot.slane %v1982, 4
        %v1984 = vadd.f32 %v1982, %v1983
        %v1985 = vrot.slane %v1984, 2
        %v1986 = vadd.f32 %v1984, %v1985
        %v1987 = vrot.slane %v1986, 1
        %v1988 = vadd.f32 %v1986, %v1987
        %v1989 = vadd.f32 %v1973, %v1988
        %1990 = vst [vmem:[#allocation16] sm:$0x1] %v1989
        %s1991 = sand.u32 %s189, 1
        %s1992 = scalar_lea.sflag [#allocation5], %s1991
        %s1993 = sand.u32 %s189, 1
        %s1994 = smul.addr %s1993, 40
        %s1995 = scalar_lea.vmem [#allocation13], %s1994
        // Predicated region
        $region73: #{downsample_forward.4} parent=43 // pred_check
          %p1996 = pneg %p199
        $region74: #{downsample_forward.4} parent=43 // pred_check_branch
          %1998 = sbr.rel (%p1996) target = $region76
        $region75: #{downsample_forward.4} parent=43 // pred_region
          %s2000 = ssub.s32 640, 640
          %2001 = vsyncadd %s1992, %s2000
          %s2002 = smul.addr %s34, 5
          %s2003 = smul.addr %s33, 10
          %s2004 = sadd.s32 %s2002, %s2003
          %s2005 = smul.addr %s2004, 128
          %s2006 = scalar_lea.hbm %s6, %s2005
          %s2007 = sshll.u32 %s1995, 4
          %s2008 = int_to_ptr.vmem [resolvable:$true] %s2007
          %2013 = dma.vmem_to_hbm [thread:$0]  %s2008, 640, %s2006, %s1992, 128, 128, 8
        $region76: #{downsample_forward.4} parent=43 // pred_fallthru
          _
        // Predicated region
        $region77: #{downsample_forward.4} parent=43 // pred_check
          %p2014 = pneg %p220
        $region78: #{downsample_forward.4} parent=43 // pred_check_branch
          %2016 = sbr.rel (%p2014) target = $region80
        $region79: #{downsample_forward.4} parent=43 // pred_region
          %s2018 = ssub.s32 16, 16
          %2019 = vsyncadd [#allocation15], %s2018
          %s2021 = sshll.u32 [#allocation14], 4
          %s2022 = int_to_ptr.vmem [resolvable:$true] %s2021
          %2024 = dma.vmem_to_hbm [thread:$0]  %s2022, 16, %s7, [#allocation15]
        $region80: #{downsample_forward.4} parent=43 // pred_fallthru
          _
        // Predicated region
        $region81: #{downsample_forward.4} parent=43 // pred_check
          %p2025 = pneg %p241
        $region82: #{downsample_forward.4} parent=43 // pred_check_branch
          %2027 = sbr.rel (%p2025) target = $region84
        $region83: #{downsample_forward.4} parent=43 // pred_region
          %s2029 = ssub.s32 16, 16
          %2030 = vsyncadd [#allocation15], %s2029
          %s2032 = sshll.u32 [#allocation16], 4
          %s2033 = int_to_ptr.vmem [resolvable:$true] %s2032
          %2035 = dma.vmem_to_hbm [thread:$0]  %s2033, 16, %s8, [#allocation15]
        $region84: #{downsample_forward.4} parent=43 // pred_fallthru
          _
        // Predicated region
        $region85: #{downsample_forward.4} parent=43 // pred_check
          %p2036 = pneg %p220
        $region86: #{downsample_forward.4} parent=43 // pred_check_branch
          %2038 = sbr.rel (%p2036) target = $region88
        $region87: #{downsample_forward.4} parent=43 // pred_region
          %2039 = dma.done [#allocation15], 16
        $region88: #{downsample_forward.4} parent=43 // pred_fallthru
          _
        // Predicated region
        $region89: #{downsample_forward.4} parent=43 // pred_check
          %p2040 = pneg %p241
        $region90: #{downsample_forward.4} parent=43 // pred_check_branch
          %2042 = sbr.rel (%p2040) target = $region92
        $region91: #{downsample_forward.4} parent=43 // pred_region
          %2043 = dma.done [#allocation15], 16
        $region92: #{downsample_forward.4} parent=43 // pred_fallthru
          _
      $region44: #{downsample_forward.4} parent=5 // pred_fallthru
        _
      %p2044 = scmp.le.s32.totalorder 2, %s24
      // Predicated region
      $region93: #{downsample_forward.4} parent=5 // pred_check
        %p2045 = pneg %p2044
      $region94: #{downsample_forward.4} parent=5 // pred_check_branch
        %2047 = sbr.rel (%p2045) target = $region96
      $region95: #{downsample_forward.4} parent=5 // pred_region
        %s2048 = ssub.s32 %s24, 2
        // Predicated region
        $region97: #{downsample_forward.4} parent=95 // pred_check
          %p2049 = pneg %p205
        $region98: #{downsample_forward.4} parent=95 // pred_check_branch
          %2051 = sbr.rel (%p2049) target = $region100
        $region99: #{downsample_forward.4} parent=95 // pred_region
          %s2052 = sand.u32 %s190, 1
          %s2053 = scalar_lea.sflag [#allocation5], %s2052
          %s2054 = sand.u32 %s190, 1
          %s2055 = smul.addr %s2054, 40
          %s2056 = scalar_lea.vmem [#allocation13], %s2055
          %2057 = dma.done %s2053, 640
        $region100: #{downsample_forward.4} parent=95 // pred_fallthru
          _
      $region96: #{downsample_forward.4} parent=5 // pred_fallthru
        _
    $region6: #{downsample_forward.4} parent=1 // loop_footer
      %s28 = sadd.s32 1, %s24
    $region7: #{downsample_forward.4} parent=1 // loop_footer_branch
      %23 = sbr.rel target = $region3
    $region8: #{downsample_forward.4} parent=1 // loop_exit
      _
    %2058 = vsyncpa [#allocation4], 1
    %s2059 = scalar_lea.sflag [#allocation4], 1
    %2060 = vsyncpa %s2059, 1
    %2061 = vsyncpa [#allocation7], 1
    %2062 = vsyncpa [#allocation10], 1
    %2063 = vsyncpa [#allocation5], 1
    %s2064 = scalar_lea.sflag [#allocation5], 1
    %2065 = vsyncpa %s2064, 1
    %2066 = vsyncpa [#allocation15], 1

</llo_original>
